<compile_context>
chip_gen: v5e
topology: v5e:2x2
jax: 0.10.0
libtpu: 0.0.40
codegen_flags: <defaults>
</compile_context>

<pallas_src>
import functools

import numpy as np
import jax
import jax.numpy as jnp
from jax import lax
from jax.experimental import pallas as pl
from jax.experimental.pallas import tpu as pltpu


# ----------------------------------------------------------------------------
# 1-D bilinear (scale=2, align_corners=False) interpolation matrix.
# Used ONLY by the plain-JAX reference in __main__ (the kernel computes the
# same interpolation with exact-f32 roll/lerp on the VPU).
# ----------------------------------------------------------------------------
@functools.lru_cache(maxsize=None)
def _bilinear_matrix(n: int) -> np.ndarray:
    a = np.zeros((2 * n, n), np.float32)
    for p in range(2 * n):
        src = max(0.5 * (p + 0.5) - 0.5, 0.0)     # PyTorch clamps negatives to 0
        i0 = min(int(np.floor(src)), n - 1)
        i1 = min(i0 + 1, n - 1)
        frac = src - i0
        a[p, i0] += 1.0 - frac
        a[p, i1] += frac
    return a


_OFFSETS = [(dh, dw) for dh in (-1, 0, 1) for dw in (-1, 0, 1)]


# ----------------------------------------------------------------------------
# Fused kernel (single step): upsample(x1) -> concat([x2, up]) -> conv3x3+ReLU
# -> conv3x3+ReLU, all in a lane-dense (channel, N*ho*wo) layout.
# ----------------------------------------------------------------------------
def _up_fused_kernel(c1, c2, c_mid, c_out, ho, wo, n,
                     idx_ref, x2_ref, x1e_ref, w1_ref, w2_ref, o_ref):
    # idx_ref : (4, Q) int32  per-lane coords [pw, ph, pw%2, ph%2] (host-built)
    # x2_ref  : (c2, Q) f32   skip connection, lanes = (batch, ho, wo) flattened
    # x1e_ref : (c1, Q) f32   x1 nearest-neighbour x2-expanded, same flat layout
    # w1_ref  : (c_mid, (c2+c1)*9) f32   conv1 weights (OIHW flattened per ci)
    # w2_ref  : (c_out, c_mid*9) f32     conv2 weights
    # o_ref   : (c_out, Q) f32           output (lane-dense store)
    f32 = jnp.float32
    P = ho * wo
    Q = n * P

    def rollq(x, d):
        # out[q] = x[(q + d) % Q]; any wrapped lane is masked/clamped by caller.
        return pltpu.roll(x, (-d) % Q, axis=1)

    idx = idx_ref[...]
    pw, ph = idx[0:1, :], idx[1:2, :]
    pw_par, ph_par = idx[2:3, :], idx[3:4, :]

    even_w = pw_par == 0
    even_h = ph_par == 0
    edge_w = (pw == 0) | (pw == wo - 1)
    edge_h = (ph == 0) | (ph == ho - 1)

    # --- bilinear x2 upsample on the VPU/XLU (exact f32 0.75/0.25 taps) ------
    # e[q] = x1[b, c, ph//2, pw//2]; two roll-lerps give torch's bilinear
    # (align_corners=False) exactly, including the clamped borders.
    def upsample_row(e):
        nb = jnp.where(even_w, rollq(e, -1), rollq(e, 1))
        nb = jnp.where(edge_w, e, nb)
        y = 0.75 * e + 0.25 * nb                       # W-direction lerp
        nb = jnp.where(even_h, rollq(y, -wo), rollq(y, wo))
        nb = jnp.where(edge_h, y, nb)
        return 0.75 * y + 0.25 * nb                    # H-direction lerp

    # --- per-tap zero-padding validity masks (lane-only, shared by channels) -
    vmask = {}
    for dh, dw in _OFFSETS:
        m = None
        if dh == -1:
            m = ph >= 1
        elif dh == 1:
            m = ph <= ho - 2
        if dw == -1:
            mw = pw >= 1
            m = mw if m is None else (m & mw)
        elif dw == 1:
            mw = pw <= wo - 2
            m = mw if m is None else (m & mw)
        vmask[(dh, dw)] = m                            # None for (0, 0)

    def tap(row, dh, dw):
        d = dh * wo + dw
        t = row if d == 0 else rollq(row, d)           # XLU roll, no padded scratch
        m = vmask[(dh, dw)]
        return t if m is None else jnp.where(m, t, 0.0)

    def conv3x3_relu(rows, w, n_out):
        # rows: list of (1, Q) input-channel slabs; w: (n_out, len(rows)*9).
        # Each tap is computed once per input channel and broadcast-FMAed into
        # all output channels at once (lane-dense, co-vectorized).
        acc = jnp.zeros((n_out, Q), f32)
        for ci, row in enumerate(rows):
            for k, (dh, dw) in enumerate(_OFFSETS):
                wcol = w[:, ci * 9 + k: ci * 9 + k + 1]          # (n_out, 1)
                acc = acc + wcol * tap(row, dh, dw)
        return jnp.maximum(acc, 0.0)

    # channel order of torch.cat([x2, up(x1)], dim=1); kept as a Python list so
    # no in-kernel concatenate / staging scratch is needed.
    rows1 = [x2_ref[c: c + 1, :] for c in range(c2)]
    rows1 += [upsample_row(x1e_ref[c: c + 1, :]) for c in range(c1)]

    y1 = conv3x3_relu(rows1, w1_ref[...], c_mid)                  # (c_mid, Q)
    rows2 = [y1[c: c + 1, :] for c in range(c_mid)]
    o_ref[...] = conv3x3_relu(rows2, w2_ref[...], c_out)          # one store


# ----------------------------------------------------------------------------
# Wrapper: layout plumbing only (transpose / reshape / NN-repeat); all
# arithmetic (bilinear lerp, convs, ReLUs) happens inside the single kernel.
# ----------------------------------------------------------------------------
def _up_forward_impl(x1, x2, conv1_w, conv2_w):
    n, c1, h, w = x1.shape
    n2, c2, ho, wo = x2.shape
    assert n2 == n and ho == 2 * h and wo == 2 * w
    c_in = c1 + c2
    c_mid = conv1_w.shape[0]
    c_out = conv2_w.shape[0]
    assert conv1_w.shape == (c_mid, c_in, 3, 3)
    assert conv2_w.shape == (c_out, c_mid, 3, 3)
    P = ho * wo
    Q = n * P                                   # batch folded into the lane axis

    # Lane-dense layout: rows = channels, lanes = (batch, ho, wo) flattened.
    x2_f = jnp.transpose(x2, (1, 0, 2, 3)).reshape(c2, Q)
    x1_nn = jnp.repeat(jnp.repeat(x1, 2, axis=2), 2, axis=3)      # NN x2 expand
    x1e_f = jnp.transpose(x1_nn, (1, 0, 2, 3)).reshape(c1, Q)
    w1v = conv1_w.reshape(c_mid, c_in * 9).astype(jnp.float32)
    w2v = conv2_w.reshape(c_out, c_mid * 9).astype(jnp.float32)

    # Host-precomputed per-lane coordinates (jit constants): no int div/mod
    # inside the kernel, only comparisons.
    p = np.arange(Q, dtype=np.int32)
    pw_l = p % wo
    ph_l = (p // wo) % ho
    idx = jnp.asarray(np.stack([pw_l, ph_l, pw_l % 2, ph_l % 2]).astype(np.int32))

    kernel = functools.partial(_up_fused_kernel, c1, c2, c_mid, c_out, ho, wo, n)

    out_flat = pl.pallas_call(
        kernel,
        out_shape=jax.ShapeDtypeStruct((c_out, Q), jnp.float32),
        grid=(1,),                                   # batch folded into lanes
        in_specs=[
            pl.BlockSpec((4, Q), lambda i: (0, 0)),                 # lane coords
            pl.BlockSpec((c2, Q), lambda i: (0, 0)),                # x2 (flat)
            pl.BlockSpec((c1, Q), lambda i: (0, 0)),                # x1 NN-expanded
            pl.BlockSpec((c_mid, c_in * 9), lambda i: (0, 0)),      # conv1 weights
            pl.BlockSpec((c_out, c_mid * 9), lambda i: (0, 0)),     # conv2 weights
        ],
        out_specs=pl.BlockSpec((c_out, Q), lambda i: (0, 0)),
        compiler_params=pltpu.CompilerParams(
            dimension_semantics=("arbitrary",),      # no megacore split of tiny work
            vmem_limit_bytes=32 * 1024 * 1024,       # safe on v5e/v6e/v7x budgets
        ),
    )(idx, x2_f, x1e_f, w1v, w2v)

    return jnp.transpose(out_flat.reshape(c_out, n, ho, wo), (1, 0, 2, 3))


up_forward = jax.jit(_up_forward_impl)


if __name__ == "__main__":
    key = jax.random.PRNGKey(0)
    k1, k2, k3, k4 = jax.random.split(key, 4)

    N, C1, H, W = 2, 2, 8, 8          # x1 (to be upsampled)
    C2 = 2                            # skip-connection channels
    C_IN = C1 + C2                    # in_channels of Up (4)
    C_MID = C_IN // 2                 # DoubleConv mid channels (2)
    C_OUT = 4                         # out_channels

    x1 = jax.random.normal(k1, (N, C1, H, W), jnp.float32)
    x2 = jax.random.normal(k2, (N, C2, 2 * H, 2 * W), jnp.float32)
    # Deterministic synthetic weights (OIHW, biases are 0 per _bias0).
    conv1_w = jax.random.normal(k3, (C_MID, C_IN, 3, 3), jnp.float32) * 0.2
    conv2_w = jax.random.normal(k4, (C_OUT, C_MID, 3, 3), jnp.float32) * 0.2

    out = up_forward(x1, x2, conv1_w, conv2_w)
    jax.block_until_ready(out)

    # plain-JAX reference (independent formulation: interp matrices + lax.conv)
    ah = jnp.asarray(_bilinear_matrix(H))
    awt = jnp.asarray(_bilinear_matrix(W).T)
    up_ref = jnp.einsum('Ph,nchw,wQ->ncPQ', ah, x1, awt,
                        precision=lax.Precision.HIGHEST)
    xcat = jnp.concatenate([x2, up_ref], axis=1)
    dn = ('NCHW', 'OIHW', 'NCHW')
    y = jax.nn.relu(lax.conv_general_dilated(
        xcat, conv1_w, (1, 1), ((1, 1), (1, 1)), dimension_numbers=dn,
        precision=lax.Precision.HIGHEST))
    y = jax.nn.relu(lax.conv_general_dilated(
        y, conv2_w, (1, 1), ((1, 1), (1, 1)), dimension_numbers=dn,
        precision=lax.Precision.HIGHEST))
    assert np.allclose(np.asarray(out), np.asarray(y), atol=1e-4, rtol=1e-4), \
        "Pallas Up kernel mismatch vs reference"

    print("KERNEL_OK")
</pallas_src>

<mosaic_0001>
module attributes {stable_mosaic.version = 11 : i64} {
  func.func @_up_fused_kernel(%arg0: i32, %arg1: memref<4x512xi32, #tpu.memory_space<vmem>>, %arg2: memref<2x512xf32, #tpu.memory_space<vmem>>, %arg3: memref<2x512xf32, #tpu.memory_space<vmem>>, %arg4: memref<2x36xf32, #tpu.memory_space<vmem>>, %arg5: memref<4x18xf32, #tpu.memory_space<vmem>>, %arg6: memref<4x512xf32, #tpu.memory_space<vmem>>) attributes {dimension_semantics = [#tpu.dimension_semantics<arbitrary>], iteration_bounds = array<i64: 1>, scalar_prefetch = 0 : i64, scratch_operands = 0 : i64, tpu.core_type = #tpu.core_type<tc>, window_params = [{pipeline_mode = #tpu.pipeline_mode<synchronous>, transform_indices = @transform_0, window_bounds = array<i64: 4, 512>}, {pipeline_mode = #tpu.pipeline_mode<synchronous>, transform_indices = @transform_1, window_bounds = array<i64: 2, 512>}, {pipeline_mode = #tpu.pipeline_mode<synchronous>, transform_indices = @transform_2, window_bounds = array<i64: 2, 512>}, {pipeline_mode = #tpu.pipeline_mode<synchronous>, transform_indices = @transform_3, window_bounds = array<i64: 2, 36>}, {pipeline_mode = #tpu.pipeline_mode<synchronous>, transform_indices = @transform_4, window_bounds = array<i64: 4, 18>}, {pipeline_mode = #tpu.pipeline_mode<synchronous>, transform_indices = @transform_5, window_bounds = array<i64: 4, 512>}]} {
    %c0 = arith.constant 0 : index
    %c0_0 = arith.constant 0 : index
    %0 = vector.load %arg1[%c0, %c0_0] : memref<4x512xi32, #tpu.memory_space<vmem>>, vector<4x512xi32>
    %1 = vector.extract_strided_slice %0 {offsets = [0, 0], sizes = [1, 512], strides = [1, 1]} : vector<4x512xi32> to vector<1x512xi32>
    %2 = vector.extract_strided_slice %0 {offsets = [1, 0], sizes = [1, 512], strides = [1, 1]} : vector<4x512xi32> to vector<1x512xi32>
    %3 = vector.extract_strided_slice %0 {offsets = [2, 0], sizes = [1, 512], strides = [1, 1]} : vector<4x512xi32> to vector<1x512xi32>
    %4 = vector.extract_strided_slice %0 {offsets = [3, 0], sizes = [1, 512], strides = [1, 1]} : vector<4x512xi32> to vector<1x512xi32>
    %c0_i32 = arith.constant 0 : i32
    %5 = vector.broadcast %c0_i32 : i32 to vector<1x512xi32>
    %6 = arith.cmpi eq, %3, %5 : vector<1x512xi32>
    %c0_i32_1 = arith.constant 0 : i32
    %7 = vector.broadcast %c0_i32_1 : i32 to vector<1x512xi32>
    %8 = arith.cmpi eq, %4, %7 : vector<1x512xi32>
    %c0_i32_2 = arith.constant 0 : i32
    %9 = vector.broadcast %c0_i32_2 : i32 to vector<1x512xi32>
    %10 = arith.cmpi eq, %1, %9 : vector<1x512xi32>
    %c15_i32 = arith.constant 15 : i32
    %11 = vector.broadcast %c15_i32 : i32 to vector<1x512xi32>
    %12 = arith.cmpi eq, %1, %11 : vector<1x512xi32>
    %13 = arith.ori %10, %12 : vector<1x512xi1>
    %c0_i32_3 = arith.constant 0 : i32
    %14 = vector.broadcast %c0_i32_3 : i32 to vector<1x512xi32>
    %15 = arith.cmpi eq, %2, %14 : vector<1x512xi32>
    %c15_i32_4 = arith.constant 15 : i32
    %16 = vector.broadcast %c15_i32_4 : i32 to vector<1x512xi32>
    %17 = arith.cmpi eq, %2, %16 : vector<1x512xi32>
    %18 = arith.ori %15, %17 : vector<1x512xi1>
    %c1_i32 = arith.constant 1 : i32
    %19 = vector.broadcast %c1_i32 : i32 to vector<1x512xi32>
    %20 = arith.cmpi sge, %2, %19 : vector<1x512xi32>
    %c1_i32_5 = arith.constant 1 : i32
    %21 = vector.broadcast %c1_i32_5 : i32 to vector<1x512xi32>
    %22 = arith.cmpi sge, %1, %21 : vector<1x512xi32>
    %23 = arith.andi %20, %22 : vector<1x512xi1>
    %c1_i32_6 = arith.constant 1 : i32
    %24 = vector.broadcast %c1_i32_6 : i32 to vector<1x512xi32>
    %25 = arith.cmpi sge, %2, %24 : vector<1x512xi32>
    %c1_i32_7 = arith.constant 1 : i32
    %26 = vector.broadcast %c1_i32_7 : i32 to vector<1x512xi32>
    %27 = arith.cmpi sge, %2, %26 : vector<1x512xi32>
    %c14_i32 = arith.constant 14 : i32
    %28 = vector.broadcast %c14_i32 : i32 to vector<1x512xi32>
    %29 = arith.cmpi sle, %1, %28 : vector<1x512xi32>
    %30 = arith.andi %27, %29 : vector<1x512xi1>
    %c1_i32_8 = arith.constant 1 : i32
    %31 = vector.broadcast %c1_i32_8 : i32 to vector<1x512xi32>
    %32 = arith.cmpi sge, %1, %31 : vector<1x512xi32>
    %c14_i32_9 = arith.constant 14 : i32
    %33 = vector.broadcast %c14_i32_9 : i32 to vector<1x512xi32>
    %34 = arith.cmpi sle, %1, %33 : vector<1x512xi32>
    %c14_i32_10 = arith.constant 14 : i32
    %35 = vector.broadcast %c14_i32_10 : i32 to vector<1x512xi32>
    %36 = arith.cmpi sle, %2, %35 : vector<1x512xi32>
    %c1_i32_11 = arith.constant 1 : i32
    %37 = vector.broadcast %c1_i32_11 : i32 to vector<1x512xi32>
    %38 = arith.cmpi sge, %1, %37 : vector<1x512xi32>
    %39 = arith.andi %36, %38 : vector<1x512xi1>
    %c14_i32_12 = arith.constant 14 : i32
    %40 = vector.broadcast %c14_i32_12 : i32 to vector<1x512xi32>
    %41 = arith.cmpi sle, %2, %40 : vector<1x512xi32>
    %c14_i32_13 = arith.constant 14 : i32
    %42 = vector.broadcast %c14_i32_13 : i32 to vector<1x512xi32>
    %43 = arith.cmpi sle, %2, %42 : vector<1x512xi32>
    %c14_i32_14 = arith.constant 14 : i32
    %44 = vector.broadcast %c14_i32_14 : i32 to vector<1x512xi32>
    %45 = arith.cmpi sle, %1, %44 : vector<1x512xi32>
    %46 = arith.andi %43, %45 : vector<1x512xi1>
    %c0_15 = arith.constant 0 : index
    %c0_16 = arith.constant 0 : index
    %47 = vector.load %arg2[%c0_15, %c0_16] : memref<2x512xf32, #tpu.memory_space<vmem>>, vector<1x512xf32>
    %c1 = arith.constant 1 : index
    %c0_17 = arith.constant 0 : index
    %48 = vector.load %arg2[%c1, %c0_17] : memref<2x512xf32, #tpu.memory_space<vmem>>, vector<1x512xf32>
    %c0_18 = arith.constant 0 : index
    %c0_19 = arith.constant 0 : index
    %49 = vector.load %arg3[%c0_18, %c0_19] : memref<2x512xf32, #tpu.memory_space<vmem>>, vector<1x512xf32>
    %c1_i32_20 = arith.constant 1 : i32
    %50 = tpu.dynamic_rotate %49 by %c1_i32_20 dim 1 : vector<1x512xf32>, i32 -> vector<1x512xf32>
    %c511_i32 = arith.constant 511 : i32
    %51 = tpu.dynamic_rotate %49 by %c511_i32 dim 1 : vector<1x512xf32>, i32 -> vector<1x512xf32>
    %52 = arith.select %6, %50, %51 : vector<1x512xi1>, vector<1x512xf32>
    %53 = arith.select %13, %49, %52 : vector<1x512xi1>, vector<1x512xf32>
    %cst = arith.constant 7.500000e-01 : f32
    %54 = vector.broadcast %cst : f32 to vector<1x512xf32>
    %55 = arith.mulf %54, %49 : vector<1x512xf32>
    %cst_21 = arith.constant 2.500000e-01 : f32
    %56 = vector.broadcast %cst_21 : f32 to vector<1x512xf32>
    %57 = arith.mulf %56, %53 : vector<1x512xf32>
    %58 = arith.addf %55, %57 : vector<1x512xf32>
    %c16_i32 = arith.constant 16 : i32
    %59 = tpu.dynamic_rotate %58 by %c16_i32 dim 1 : vector<1x512xf32>, i32 -> vector<1x512xf32>
    %c496_i32 = arith.constant 496 : i32
    %60 = tpu.dynamic_rotate %58 by %c496_i32 dim 1 : vector<1x512xf32>, i32 -> vector<1x512xf32>
    %61 = arith.select %8, %59, %60 : vector<1x512xi1>, vector<1x512xf32>
    %62 = arith.select %18, %58, %61 : vector<1x512xi1>, vector<1x512xf32>
    %cst_22 = arith.constant 7.500000e-01 : f32
    %63 = vector.broadcast %cst_22 : f32 to vector<1x512xf32>
    %64 = arith.mulf %63, %58 : vector<1x512xf32>
    %cst_23 = arith.constant 2.500000e-01 : f32
    %65 = vector.broadcast %cst_23 : f32 to vector<1x512xf32>
    %66 = arith.mulf %65, %62 : vector<1x512xf32>
    %67 = arith.addf %64, %66 : vector<1x512xf32>
    %c1_24 = arith.constant 1 : index
    %c0_25 = arith.constant 0 : index
    %68 = vector.load %arg3[%c1_24, %c0_25] : memref<2x512xf32, #tpu.memory_space<vmem>>, vector<1x512xf32>
    %c1_i32_26 = arith.constant 1 : i32
    %69 = tpu.dynamic_rotate %68 by %c1_i32_26 dim 1 : vector<1x512xf32>, i32 -> vector<1x512xf32>
    %c511_i32_27 = arith.constant 511 : i32
    %70 = tpu.dynamic_rotate %68 by %c511_i32_27 dim 1 : vector<1x512xf32>, i32 -> vector<1x512xf32>
    %71 = arith.select %6, %69, %70 : vector<1x512xi1>, vector<1x512xf32>
    %72 = arith.select %13, %68, %71 : vector<1x512xi1>, vector<1x512xf32>
    %cst_28 = arith.constant 7.500000e-01 : f32
    %73 = vector.broadcast %cst_28 : f32 to vector<1x512xf32>
    %74 = arith.mulf %73, %68 : vector<1x512xf32>
    %cst_29 = arith.constant 2.500000e-01 : f32
    %75 = vector.broadcast %cst_29 : f32 to vector<1x512xf32>
    %76 = arith.mulf %75, %72 : vector<1x512xf32>
    %77 = arith.addf %74, %76 : vector<1x512xf32>
    %c16_i32_30 = arith.constant 16 : i32
    %78 = tpu.dynamic_rotate %77 by %c16_i32_30 dim 1 : vector<1x512xf32>, i32 -> vector<1x512xf32>
    %c496_i32_31 = arith.constant 496 : i32
    %79 = tpu.dynamic_rotate %77 by %c496_i32_31 dim 1 : vector<1x512xf32>, i32 -> vector<1x512xf32>
    %80 = arith.select %8, %78, %79 : vector<1x512xi1>, vector<1x512xf32>
    %81 = arith.select %18, %77, %80 : vector<1x512xi1>, vector<1x512xf32>
    %cst_32 = arith.constant 7.500000e-01 : f32
    %82 = vector.broadcast %cst_32 : f32 to vector<1x512xf32>
    %83 = arith.mulf %82, %77 : vector<1x512xf32>
    %cst_33 = arith.constant 2.500000e-01 : f32
    %84 = vector.broadcast %cst_33 : f32 to vector<1x512xf32>
    %85 = arith.mulf %84, %81 : vector<1x512xf32>
    %86 = arith.addf %83, %85 : vector<1x512xf32>
    %c0_34 = arith.constant 0 : index
    %c0_35 = arith.constant 0 : index
    %87 = vector.load %arg4[%c0_34, %c0_35] : memref<2x36xf32, #tpu.memory_space<vmem>>, vector<2x36xf32>
    %cst_36 = arith.constant 0.000000e+00 : f32
    %88 = vector.broadcast %cst_36 : f32 to vector<2x512xf32>
    %89 = vector.extract_strided_slice %87 {offsets = [0, 0], sizes = [2, 1], strides = [1, 1]} : vector<2x36xf32> to vector<2x1xf32>
    %c17_i32 = arith.constant 17 : i32
    %90 = tpu.dynamic_rotate %47 by %c17_i32 dim 1 : vector<1x512xf32>, i32 -> vector<1x512xf32>
    %cst_37 = arith.constant 0.000000e+00 : f32
    %91 = vector.broadcast %cst_37 : f32 to vector<1x512xf32>
    %92 = arith.select %23, %90, %91 : vector<1x512xi1>, vector<1x512xf32>
    %93 = vector.broadcast %89 : vector<2x1xf32> to vector<2x512xf32>
    %94 = vector.broadcast %92 : vector<1x512xf32> to vector<2x512xf32>
    %95 = arith.mulf %93, %94 : vector<2x512xf32>
    %96 = arith.addf %88, %95 : vector<2x512xf32>
    %97 = vector.extract_strided_slice %87 {offsets = [0, 1], sizes = [2, 1], strides = [1, 1]} : vector<2x36xf32> to vector<2x1xf32>
    %c16_i32_38 = arith.constant 16 : i32
    %98 = tpu.dynamic_rotate %47 by %c16_i32_38 dim 1 : vector<1x512xf32>, i32 -> vector<1x512xf32>
    %cst_39 = arith.constant 0.000000e+00 : f32
    %99 = vector.broadcast %cst_39 : f32 to vector<1x512xf32>
    %100 = arith.select %25, %98, %99 : vector<1x512xi1>, vector<1x512xf32>
    %101 = vector.broadcast %97 : vector<2x1xf32> to vector<2x512xf32>
    %102 = vector.broadcast %100 : vector<1x512xf32> to vector<2x512xf32>
    %103 = arith.mulf %101, %102 : vector<2x512xf32>
    %104 = arith.addf %96, %103 : vector<2x512xf32>
    %105 = vector.extract_strided_slice %87 {offsets = [0, 2], sizes = [2, 1], strides = [1, 1]} : vector<2x36xf32> to vector<2x1xf32>
    %c15_i32_40 = arith.constant 15 : i32
    %106 = tpu.dynamic_rotate %47 by %c15_i32_40 dim 1 : vector<1x512xf32>, i32 -> vector<1x512xf32>
    %cst_41 = arith.constant 0.000000e+00 : f32
    %107 = vector.broadcast %cst_41 : f32 to vector<1x512xf32>
    %108 = arith.select %30, %106, %107 : vector<1x512xi1>, vector<1x512xf32>
    %109 = vector.broadcast %105 : vector<2x1xf32> to vector<2x512xf32>
    %110 = vector.broadcast %108 : vector<1x512xf32> to vector<2x512xf32>
    %111 = arith.mulf %109, %110 : vector<2x512xf32>
    %112 = arith.addf %104, %111 : vector<2x512xf32>
    %113 = vector.extract_strided_slice %87 {offsets = [0, 3], sizes = [2, 1], strides = [1, 1]} : vector<2x36xf32> to vector<2x1xf32>
    %c1_i32_42 = arith.constant 1 : i32
    %114 = tpu.dynamic_rotate %47 by %c1_i32_42 dim 1 : vector<1x512xf32>, i32 -> vector<1x512xf32>
    %cst_43 = arith.constant 0.000000e+00 : f32
    %115 = vector.broadcast %cst_43 : f32 to vector<1x512xf32>
    %116 = arith.select %32, %114, %115 : vector<1x512xi1>, vector<1x512xf32>
    %117 = vector.broadcast %113 : vector<2x1xf32> to vector<2x512xf32>
    %118 = vector.broadcast %116 : vector<1x512xf32> to vector<2x512xf32>
    %119 = arith.mulf %117, %118 : vector<2x512xf32>
    %120 = arith.addf %112, %119 : vector<2x512xf32>
    %121 = vector.extract_strided_slice %87 {offsets = [0, 4], sizes = [2, 1], strides = [1, 1]} : vector<2x36xf32> to vector<2x1xf32>
    %122 = vector.broadcast %121 : vector<2x1xf32> to vector<2x512xf32>
    %123 = vector.broadcast %47 : vector<1x512xf32> to vector<2x512xf32>
    %124 = arith.mulf %122, %123 : vector<2x512xf32>
    %125 = arith.addf %120, %124 : vector<2x512xf32>
    %126 = vector.extract_strided_slice %87 {offsets = [0, 5], sizes = [2, 1], strides = [1, 1]} : vector<2x36xf32> to vector<2x1xf32>
    %c511_i32_44 = arith.constant 511 : i32
    %127 = tpu.dynamic_rotate %47 by %c511_i32_44 dim 1 : vector<1x512xf32>, i32 -> vector<1x512xf32>
    %cst_45 = arith.constant 0.000000e+00 : f32
    %128 = vector.broadcast %cst_45 : f32 to vector<1x512xf32>
    %129 = arith.select %34, %127, %128 : vector<1x512xi1>, vector<1x512xf32>
    %130 = vector.broadcast %126 : vector<2x1xf32> to vector<2x512xf32>
    %131 = vector.broadcast %129 : vector<1x512xf32> to vector<2x512xf32>
    %132 = arith.mulf %130, %131 : vector<2x512xf32>
    %133 = arith.addf %125, %132 : vector<2x512xf32>
    %134 = vector.extract_strided_slice %87 {offsets = [0, 6], sizes = [2, 1], strides = [1, 1]} : vector<2x36xf32> to vector<2x1xf32>
    %c497_i32 = arith.constant 497 : i32
    %135 = tpu.dynamic_rotate %47 by %c497_i32 dim 1 : vector<1x512xf32>, i32 -> vector<1x512xf32>
    %cst_46 = arith.constant 0.000000e+00 : f32
    %136 = vector.broadcast %cst_46 : f32 to vector<1x512xf32>
    %137 = arith.select %39, %135, %136 : vector<1x512xi1>, vector<1x512xf32>
    %138 = vector.broadcast %134 : vector<2x1xf32> to vector<2x512xf32>
    %139 = vector.broadcast %137 : vector<1x512xf32> to vector<2x512xf32>
    %140 = arith.mulf %138, %139 : vector<2x512xf32>
    %141 = arith.addf %133, %140 : vector<2x512xf32>
    %142 = vector.extract_strided_slice %87 {offsets = [0, 7], sizes = [2, 1], strides = [1, 1]} : vector<2x36xf32> to vector<2x1xf32>
    %c496_i32_47 = arith.constant 496 : i32
    %143 = tpu.dynamic_rotate %47 by %c496_i32_47 dim 1 : vector<1x512xf32>, i32 -> vector<1x512xf32>
    %cst_48 = arith.constant 0.000000e+00 : f32
    %144 = vector.broadcast %cst_48 : f32 to vector<1x512xf32>
    %145 = arith.select %41, %143, %144 : vector<1x512xi1>, vector<1x512xf32>
    %146 = vector.broadcast %142 : vector<2x1xf32> to vector<2x512xf32>
    %147 = vector.broadcast %145 : vector<1x512xf32> to vector<2x512xf32>
    %148 = arith.mulf %146, %147 : vector<2x512xf32>
    %149 = arith.addf %141, %148 : vector<2x512xf32>
    %150 = vector.extract_strided_slice %87 {offsets = [0, 8], sizes = [2, 1], strides = [1, 1]} : vector<2x36xf32> to vector<2x1xf32>
    %c495_i32 = arith.constant 495 : i32
    %151 = tpu.dynamic_rotate %47 by %c495_i32 dim 1 : vector<1x512xf32>, i32 -> vector<1x512xf32>
    %cst_49 = arith.constant 0.000000e+00 : f32
    %152 = vector.broadcast %cst_49 : f32 to vector<1x512xf32>
    %153 = arith.select %46, %151, %152 : vector<1x512xi1>, vector<1x512xf32>
    %154 = vector.broadcast %150 : vector<2x1xf32> to vector<2x512xf32>
    %155 = vector.broadcast %153 : vector<1x512xf32> to vector<2x512xf32>
    %156 = arith.mulf %154, %155 : vector<2x512xf32>
    %157 = arith.addf %149, %156 : vector<2x512xf32>
    %158 = vector.extract_strided_slice %87 {offsets = [0, 9], sizes = [2, 1], strides = [1, 1]} : vector<2x36xf32> to vector<2x1xf32>
    %c17_i32_50 = arith.constant 17 : i32
    %159 = tpu.dynamic_rotate %48 by %c17_i32_50 dim 1 : vector<1x512xf32>, i32 -> vector<1x512xf32>
    %cst_51 = arith.constant 0.000000e+00 : f32
    %160 = vector.broadcast %cst_51 : f32 to vector<1x512xf32>
    %161 = arith.select %23, %159, %160 : vector<1x512xi1>, vector<1x512xf32>
    %162 = vector.broadcast %158 : vector<2x1xf32> to vector<2x512xf32>
    %163 = vector.broadcast %161 : vector<1x512xf32> to vector<2x512xf32>
    %164 = arith.mulf %162, %163 : vector<2x512xf32>
    %165 = arith.addf %157, %164 : vector<2x512xf32>
    %166 = vector.extract_strided_slice %87 {offsets = [0, 10], sizes = [2, 1], strides = [1, 1]} : vector<2x36xf32> to vector<2x1xf32>
    %c16_i32_52 = arith.constant 16 : i32
    %167 = tpu.dynamic_rotate %48 by %c16_i32_52 dim 1 : vector<1x512xf32>, i32 -> vector<1x512xf32>
    %cst_53 = arith.constant 0.000000e+00 : f32
    %168 = vector.broadcast %cst_53 : f32 to vector<1x512xf32>
    %169 = arith.select %25, %167, %168 : vector<1x512xi1>, vector<1x512xf32>
    %170 = vector.broadcast %166 : vector<2x1xf32> to vector<2x512xf32>
    %171 = vector.broadcast %169 : vector<1x512xf32> to vector<2x512xf32>
    %172 = arith.mulf %170, %171 : vector<2x512xf32>
    %173 = arith.addf %165, %172 : vector<2x512xf32>
    %174 = vector.extract_strided_slice %87 {offsets = [0, 11], sizes = [2, 1], strides = [1, 1]} : vector<2x36xf32> to vector<2x1xf32>
    %c15_i32_54 = arith.constant 15 : i32
    %175 = tpu.dynamic_rotate %48 by %c15_i32_54 dim 1 : vector<1x512xf32>, i32 -> vector<1x512xf32>
    %cst_55 = arith.constant 0.000000e+00 : f32
    %176 = vector.broadcast %cst_55 : f32 to vector<1x512xf32>
    %177 = arith.select %30, %175, %176 : vector<1x512xi1>, vector<1x512xf32>
    %178 = vector.broadcast %174 : vector<2x1xf32> to vector<2x512xf32>
    %179 = vector.broadcast %177 : vector<1x512xf32> to vector<2x512xf32>
    %180 = arith.mulf %178, %179 : vector<2x512xf32>
    %181 = arith.addf %173, %180 : vector<2x512xf32>
    %182 = vector.extract_strided_slice %87 {offsets = [0, 12], sizes = [2, 1], strides = [1, 1]} : vector<2x36xf32> to vector<2x1xf32>
    %c1_i32_56 = arith.constant 1 : i32
    %183 = tpu.dynamic_rotate %48 by %c1_i32_56 dim 1 : vector<1x512xf32>, i32 -> vector<1x512xf32>
    %cst_57 = arith.constant 0.000000e+00 : f32
    %184 = vector.broadcast %cst_57 : f32 to vector<1x512xf32>
    %185 = arith.select %32, %183, %184 : vector<1x512xi1>, vector<1x512xf32>
    %186 = vector.broadcast %182 : vector<2x1xf32> to vector<2x512xf32>
    %187 = vector.broadcast %185 : vector<1x512xf32> to vector<2x512xf32>
    %188 = arith.mulf %186, %187 : vector<2x512xf32>
    %189 = arith.addf %181, %188 : vector<2x512xf32>
    %190 = vector.extract_strided_slice %87 {offsets = [0, 13], sizes = [2, 1], strides = [1, 1]} : vector<2x36xf32> to vector<2x1xf32>
    %191 = vector.broadcast %190 : vector<2x1xf32> to vector<2x512xf32>
    %192 = vector.broadcast %48 : vector<1x512xf32> to vector<2x512xf32>
    %193 = arith.mulf %191, %192 : vector<2x512xf32>
    %194 = arith.addf %189, %193 : vector<2x512xf32>
    %195 = vector.extract_strided_slice %87 {offsets = [0, 14], sizes = [2, 1], strides = [1, 1]} : vector<2x36xf32> to vector<2x1xf32>
    %c511_i32_58 = arith.constant 511 : i32
    %196 = tpu.dynamic_rotate %48 by %c511_i32_58 dim 1 : vector<1x512xf32>, i32 -> vector<1x512xf32>
    %cst_59 = arith.constant 0.000000e+00 : f32
    %197 = vector.broadcast %cst_59 : f32 to vector<1x512xf32>
    %198 = arith.select %34, %196, %197 : vector<1x512xi1>, vector<1x512xf32>
    %199 = vector.broadcast %195 : vector<2x1xf32> to vector<2x512xf32>
    %200 = vector.broadcast %198 : vector<1x512xf32> to vector<2x512xf32>
    %201 = arith.mulf %199, %200 : vector<2x512xf32>
    %202 = arith.addf %194, %201 : vector<2x512xf32>
    %203 = vector.extract_strided_slice %87 {offsets = [0, 15], sizes = [2, 1], strides = [1, 1]} : vector<2x36xf32> to vector<2x1xf32>
    %c497_i32_60 = arith.constant 497 : i32
    %204 = tpu.dynamic_rotate %48 by %c497_i32_60 dim 1 : vector<1x512xf32>, i32 -> vector<1x512xf32>
    %cst_61 = arith.constant 0.000000e+00 : f32
    %205 = vector.broadcast %cst_61 : f32 to vector<1x512xf32>
    %206 = arith.select %39, %204, %205 : vector<1x512xi1>, vector<1x512xf32>
    %207 = vector.broadcast %203 : vector<2x1xf32> to vector<2x512xf32>
    %208 = vector.broadcast %206 : vector<1x512xf32> to vector<2x512xf32>
    %209 = arith.mulf %207, %208 : vector<2x512xf32>
    %210 = arith.addf %202, %209 : vector<2x512xf32>
    %211 = vector.extract_strided_slice %87 {offsets = [0, 16], sizes = [2, 1], strides = [1, 1]} : vector<2x36xf32> to vector<2x1xf32>
    %c496_i32_62 = arith.constant 496 : i32
    %212 = tpu.dynamic_rotate %48 by %c496_i32_62 dim 1 : vector<1x512xf32>, i32 -> vector<1x512xf32>
    %cst_63 = arith.constant 0.000000e+00 : f32
    %213 = vector.broadcast %cst_63 : f32 to vector<1x512xf32>
    %214 = arith.select %41, %212, %213 : vector<1x512xi1>, vector<1x512xf32>
    %215 = vector.broadcast %211 : vector<2x1xf32> to vector<2x512xf32>
    %216 = vector.broadcast %214 : vector<1x512xf32> to vector<2x512xf32>
    %217 = arith.mulf %215, %216 : vector<2x512xf32>
    %218 = arith.addf %210, %217 : vector<2x512xf32>
    %219 = vector.extract_strided_slice %87 {offsets = [0, 17], sizes = [2, 1], strides = [1, 1]} : vector<2x36xf32> to vector<2x1xf32>
    %c495_i32_64 = arith.constant 495 : i32
    %220 = tpu.dynamic_rotate %48 by %c495_i32_64 dim 1 : vector<1x512xf32>, i32 -> vector<1x512xf32>
    %cst_65 = arith.constant 0.000000e+00 : f32
    %221 = vector.broadcast %cst_65 : f32 to vector<1x512xf32>
    %222 = arith.select %46, %220, %221 : vector<1x512xi1>, vector<1x512xf32>
    %223 = vector.broadcast %219 : vector<2x1xf32> to vector<2x512xf32>
    %224 = vector.broadcast %222 : vector<1x512xf32> to vector<2x512xf32>
    %225 = arith.mulf %223, %224 : vector<2x512xf32>
    %226 = arith.addf %218, %225 : vector<2x512xf32>
    %227 = vector.extract_strided_slice %87 {offsets = [0, 18], sizes = [2, 1], strides = [1, 1]} : vector<2x36xf32> to vector<2x1xf32>
    %c17_i32_66 = arith.constant 17 : i32
    %228 = tpu.dynamic_rotate %67 by %c17_i32_66 dim 1 : vector<1x512xf32>, i32 -> vector<1x512xf32>
    %cst_67 = arith.constant 0.000000e+00 : f32
    %229 = vector.broadcast %cst_67 : f32 to vector<1x512xf32>
    %230 = arith.select %23, %228, %229 : vector<1x512xi1>, vector<1x512xf32>
    %231 = vector.broadcast %227 : vector<2x1xf32> to vector<2x512xf32>
    %232 = vector.broadcast %230 : vector<1x512xf32> to vector<2x512xf32>
    %233 = arith.mulf %231, %232 : vector<2x512xf32>
    %234 = arith.addf %226, %233 : vector<2x512xf32>
    %235 = vector.extract_strided_slice %87 {offsets = [0, 19], sizes = [2, 1], strides = [1, 1]} : vector<2x36xf32> to vector<2x1xf32>
    %c16_i32_68 = arith.constant 16 : i32
    %236 = tpu.dynamic_rotate %67 by %c16_i32_68 dim 1 : vector<1x512xf32>, i32 -> vector<1x512xf32>
    %cst_69 = arith.constant 0.000000e+00 : f32
    %237 = vector.broadcast %cst_69 : f32 to vector<1x512xf32>
    %238 = arith.select %25, %236, %237 : vector<1x512xi1>, vector<1x512xf32>
    %239 = vector.broadcast %235 : vector<2x1xf32> to vector<2x512xf32>
    %240 = vector.broadcast %238 : vector<1x512xf32> to vector<2x512xf32>
    %241 = arith.mulf %239, %240 : vector<2x512xf32>
    %242 = arith.addf %234, %241 : vector<2x512xf32>
    %243 = vector.extract_strided_slice %87 {offsets = [0, 20], sizes = [2, 1], strides = [1, 1]} : vector<2x36xf32> to vector<2x1xf32>
    %c15_i32_70 = arith.constant 15 : i32
    %244 = tpu.dynamic_rotate %67 by %c15_i32_70 dim 1 : vector<1x512xf32>, i32 -> vector<1x512xf32>
    %cst_71 = arith.constant 0.000000e+00 : f32
    %245 = vector.broadcast %cst_71 : f32 to vector<1x512xf32>
    %246 = arith.select %30, %244, %245 : vector<1x512xi1>, vector<1x512xf32>
    %247 = vector.broadcast %243 : vector<2x1xf32> to vector<2x512xf32>
    %248 = vector.broadcast %246 : vector<1x512xf32> to vector<2x512xf32>
    %249 = arith.mulf %247, %248 : vector<2x512xf32>
    %250 = arith.addf %242, %249 : vector<2x512xf32>
    %251 = vector.extract_strided_slice %87 {offsets = [0, 21], sizes = [2, 1], strides = [1, 1]} : vector<2x36xf32> to vector<2x1xf32>
    %c1_i32_72 = arith.constant 1 : i32
    %252 = tpu.dynamic_rotate %67 by %c1_i32_72 dim 1 : vector<1x512xf32>, i32 -> vector<1x512xf32>
    %cst_73 = arith.constant 0.000000e+00 : f32
    %253 = vector.broadcast %cst_73 : f32 to vector<1x512xf32>
    %254 = arith.select %32, %252, %253 : vector<1x512xi1>, vector<1x512xf32>
    %255 = vector.broadcast %251 : vector<2x1xf32> to vector<2x512xf32>
    %256 = vector.broadcast %254 : vector<1x512xf32> to vector<2x512xf32>
    %257 = arith.mulf %255, %256 : vector<2x512xf32>
    %258 = arith.addf %250, %257 : vector<2x512xf32>
    %259 = vector.extract_strided_slice %87 {offsets = [0, 22], sizes = [2, 1], strides = [1, 1]} : vector<2x36xf32> to vector<2x1xf32>
    %260 = vector.broadcast %259 : vector<2x1xf32> to vector<2x512xf32>
    %261 = vector.broadcast %67 : vector<1x512xf32> to vector<2x512xf32>
    %262 = arith.mulf %260, %261 : vector<2x512xf32>
    %263 = arith.addf %258, %262 : vector<2x512xf32>
    %264 = vector.extract_strided_slice %87 {offsets = [0, 23], sizes = [2, 1], strides = [1, 1]} : vector<2x36xf32> to vector<2x1xf32>
    %c511_i32_74 = arith.constant 511 : i32
    %265 = tpu.dynamic_rotate %67 by %c511_i32_74 dim 1 : vector<1x512xf32>, i32 -> vector<1x512xf32>
    %cst_75 = arith.constant 0.000000e+00 : f32
    %266 = vector.broadcast %cst_75 : f32 to vector<1x512xf32>
    %267 = arith.select %34, %265, %266 : vector<1x512xi1>, vector<1x512xf32>
    %268 = vector.broadcast %264 : vector<2x1xf32> to vector<2x512xf32>
    %269 = vector.broadcast %267 : vector<1x512xf32> to vector<2x512xf32>
    %270 = arith.mulf %268, %269 : vector<2x512xf32>
    %271 = arith.addf %263, %270 : vector<2x512xf32>
    %272 = vector.extract_strided_slice %87 {offsets = [0, 24], sizes = [2, 1], strides = [1, 1]} : vector<2x36xf32> to vector<2x1xf32>
    %c497_i32_76 = arith.constant 497 : i32
    %273 = tpu.dynamic_rotate %67 by %c497_i32_76 dim 1 : vector<1x512xf32>, i32 -> vector<1x512xf32>
    %cst_77 = arith.constant 0.000000e+00 : f32
    %274 = vector.broadcast %cst_77 : f32 to vector<1x512xf32>
    %275 = arith.select %39, %273, %274 : vector<1x512xi1>, vector<1x512xf32>
    %276 = vector.broadcast %272 : vector<2x1xf32> to vector<2x512xf32>
    %277 = vector.broadcast %275 : vector<1x512xf32> to vector<2x512xf32>
    %278 = arith.mulf %276, %277 : vector<2x512xf32>
    %279 = arith.addf %271, %278 : vector<2x512xf32>
    %280 = vector.extract_strided_slice %87 {offsets = [0, 25], sizes = [2, 1], strides = [1, 1]} : vector<2x36xf32> to vector<2x1xf32>
    %c496_i32_78 = arith.constant 496 : i32
    %281 = tpu.dynamic_rotate %67 by %c496_i32_78 dim 1 : vector<1x512xf32>, i32 -> vector<1x512xf32>
    %cst_79 = arith.constant 0.000000e+00 : f32
    %282 = vector.broadcast %cst_79 : f32 to vector<1x512xf32>
    %283 = arith.select %41, %281, %282 : vector<1x512xi1>, vector<1x512xf32>
    %284 = vector.broadcast %280 : vector<2x1xf32> to vector<2x512xf32>
    %285 = vector.broadcast %283 : vector<1x512xf32> to vector<2x512xf32>
    %286 = arith.mulf %284, %285 : vector<2x512xf32>
    %287 = arith.addf %279, %286 : vector<2x512xf32>
    %288 = vector.extract_strided_slice %87 {offsets = [0, 26], sizes = [2, 1], strides = [1, 1]} : vector<2x36xf32> to vector<2x1xf32>
    %c495_i32_80 = arith.constant 495 : i32
    %289 = tpu.dynamic_rotate %67 by %c495_i32_80 dim 1 : vector<1x512xf32>, i32 -> vector<1x512xf32>
    %cst_81 = arith.constant 0.000000e+00 : f32
    %290 = vector.broadcast %cst_81 : f32 to vector<1x512xf32>
    %291 = arith.select %46, %289, %290 : vector<1x512xi1>, vector<1x512xf32>
    %292 = vector.broadcast %288 : vector<2x1xf32> to vector<2x512xf32>
    %293 = vector.broadcast %291 : vector<1x512xf32> to vector<2x512xf32>
    %294 = arith.mulf %292, %293 : vector<2x512xf32>
    %295 = arith.addf %287, %294 : vector<2x512xf32>
    %296 = vector.extract_strided_slice %87 {offsets = [0, 27], sizes = [2, 1], strides = [1, 1]} : vector<2x36xf32> to vector<2x1xf32>
    %c17_i32_82 = arith.constant 17 : i32
    %297 = tpu.dynamic_rotate %86 by %c17_i32_82 dim 1 : vector<1x512xf32>, i32 -> vector<1x512xf32>
    %cst_83 = arith.constant 0.000000e+00 : f32
    %298 = vector.broadcast %cst_83 : f32 to vector<1x512xf32>
    %299 = arith.select %23, %297, %298 : vector<1x512xi1>, vector<1x512xf32>
    %300 = vector.broadcast %296 : vector<2x1xf32> to vector<2x512xf32>
    %301 = vector.broadcast %299 : vector<1x512xf32> to vector<2x512xf32>
    %302 = arith.mulf %300, %301 : vector<2x512xf32>
    %303 = arith.addf %295, %302 : vector<2x512xf32>
    %304 = vector.extract_strided_slice %87 {offsets = [0, 28], sizes = [2, 1], strides = [1, 1]} : vector<2x36xf32> to vector<2x1xf32>
    %c16_i32_84 = arith.constant 16 : i32
    %305 = tpu.dynamic_rotate %86 by %c16_i32_84 dim 1 : vector<1x512xf32>, i32 -> vector<1x512xf32>
    %cst_85 = arith.constant 0.000000e+00 : f32
    %306 = vector.broadcast %cst_85 : f32 to vector<1x512xf32>
    %307 = arith.select %25, %305, %306 : vector<1x512xi1>, vector<1x512xf32>
    %308 = vector.broadcast %304 : vector<2x1xf32> to vector<2x512xf32>
    %309 = vector.broadcast %307 : vector<1x512xf32> to vector<2x512xf32>
    %310 = arith.mulf %308, %309 : vector<2x512xf32>
    %311 = arith.addf %303, %310 : vector<2x512xf32>
    %312 = vector.extract_strided_slice %87 {offsets = [0, 29], sizes = [2, 1], strides = [1, 1]} : vector<2x36xf32> to vector<2x1xf32>
    %c15_i32_86 = arith.constant 15 : i32
    %313 = tpu.dynamic_rotate %86 by %c15_i32_86 dim 1 : vector<1x512xf32>, i32 -> vector<1x512xf32>
    %cst_87 = arith.constant 0.000000e+00 : f32
    %314 = vector.broadcast %cst_87 : f32 to vector<1x512xf32>
    %315 = arith.select %30, %313, %314 : vector<1x512xi1>, vector<1x512xf32>
    %316 = vector.broadcast %312 : vector<2x1xf32> to vector<2x512xf32>
    %317 = vector.broadcast %315 : vector<1x512xf32> to vector<2x512xf32>
    %318 = arith.mulf %316, %317 : vector<2x512xf32>
    %319 = arith.addf %311, %318 : vector<2x512xf32>
    %320 = vector.extract_strided_slice %87 {offsets = [0, 30], sizes = [2, 1], strides = [1, 1]} : vector<2x36xf32> to vector<2x1xf32>
    %c1_i32_88 = arith.constant 1 : i32
    %321 = tpu.dynamic_rotate %86 by %c1_i32_88 dim 1 : vector<1x512xf32>, i32 -> vector<1x512xf32>
    %cst_89 = arith.constant 0.000000e+00 : f32
    %322 = vector.broadcast %cst_89 : f32 to vector<1x512xf32>
    %323 = arith.select %32, %321, %322 : vector<1x512xi1>, vector<1x512xf32>
    %324 = vector.broadcast %320 : vector<2x1xf32> to vector<2x512xf32>
    %325 = vector.broadcast %323 : vector<1x512xf32> to vector<2x512xf32>
    %326 = arith.mulf %324, %325 : vector<2x512xf32>
    %327 = arith.addf %319, %326 : vector<2x512xf32>
    %328 = vector.extract_strided_slice %87 {offsets = [0, 31], sizes = [2, 1], strides = [1, 1]} : vector<2x36xf32> to vector<2x1xf32>
    %329 = vector.broadcast %328 : vector<2x1xf32> to vector<2x512xf32>
    %330 = vector.broadcast %86 : vector<1x512xf32> to vector<2x512xf32>
    %331 = arith.mulf %329, %330 : vector<2x512xf32>
    %332 = arith.addf %327, %331 : vector<2x512xf32>
    %333 = vector.extract_strided_slice %87 {offsets = [0, 32], sizes = [2, 1], strides = [1, 1]} : vector<2x36xf32> to vector<2x1xf32>
    %c511_i32_90 = arith.constant 511 : i32
    %334 = tpu.dynamic_rotate %86 by %c511_i32_90 dim 1 : vector<1x512xf32>, i32 -> vector<1x512xf32>
    %cst_91 = arith.constant 0.000000e+00 : f32
    %335 = vector.broadcast %cst_91 : f32 to vector<1x512xf32>
    %336 = arith.select %34, %334, %335 : vector<1x512xi1>, vector<1x512xf32>
    %337 = vector.broadcast %333 : vector<2x1xf32> to vector<2x512xf32>
    %338 = vector.broadcast %336 : vector<1x512xf32> to vector<2x512xf32>
    %339 = arith.mulf %337, %338 : vector<2x512xf32>
    %340 = arith.addf %332, %339 : vector<2x512xf32>
    %341 = vector.extract_strided_slice %87 {offsets = [0, 33], sizes = [2, 1], strides = [1, 1]} : vector<2x36xf32> to vector<2x1xf32>
    %c497_i32_92 = arith.constant 497 : i32
    %342 = tpu.dynamic_rotate %86 by %c497_i32_92 dim 1 : vector<1x512xf32>, i32 -> vector<1x512xf32>
    %cst_93 = arith.constant 0.000000e+00 : f32
    %343 = vector.broadcast %cst_93 : f32 to vector<1x512xf32>
    %344 = arith.select %39, %342, %343 : vector<1x512xi1>, vector<1x512xf32>
    %345 = vector.broadcast %341 : vector<2x1xf32> to vector<2x512xf32>
    %346 = vector.broadcast %344 : vector<1x512xf32> to vector<2x512xf32>
    %347 = arith.mulf %345, %346 : vector<2x512xf32>
    %348 = arith.addf %340, %347 : vector<2x512xf32>
    %349 = vector.extract_strided_slice %87 {offsets = [0, 34], sizes = [2, 1], strides = [1, 1]} : vector<2x36xf32> to vector<2x1xf32>
    %c496_i32_94 = arith.constant 496 : i32
    %350 = tpu.dynamic_rotate %86 by %c496_i32_94 dim 1 : vector<1x512xf32>, i32 -> vector<1x512xf32>
    %cst_95 = arith.constant 0.000000e+00 : f32
    %351 = vector.broadcast %cst_95 : f32 to vector<1x512xf32>
    %352 = arith.select %41, %350, %351 : vector<1x512xi1>, vector<1x512xf32>
    %353 = vector.broadcast %349 : vector<2x1xf32> to vector<2x512xf32>
    %354 = vector.broadcast %352 : vector<1x512xf32> to vector<2x512xf32>
    %355 = arith.mulf %353, %354 : vector<2x512xf32>
    %356 = arith.addf %348, %355 : vector<2x512xf32>
    %357 = vector.extract_strided_slice %87 {offsets = [0, 35], sizes = [2, 1], strides = [1, 1]} : vector<2x36xf32> to vector<2x1xf32>
    %c495_i32_96 = arith.constant 495 : i32
    %358 = tpu.dynamic_rotate %86 by %c495_i32_96 dim 1 : vector<1x512xf32>, i32 -> vector<1x512xf32>
    %cst_97 = arith.constant 0.000000e+00 : f32
    %359 = vector.broadcast %cst_97 : f32 to vector<1x512xf32>
    %360 = arith.select %46, %358, %359 : vector<1x512xi1>, vector<1x512xf32>
    %361 = vector.broadcast %357 : vector<2x1xf32> to vector<2x512xf32>
    %362 = vector.broadcast %360 : vector<1x512xf32> to vector<2x512xf32>
    %363 = arith.mulf %361, %362 : vector<2x512xf32>
    %364 = arith.addf %356, %363 : vector<2x512xf32>
    %cst_98 = arith.constant 0.000000e+00 : f32
    %365 = vector.broadcast %cst_98 : f32 to vector<2x512xf32>
    %366 = arith.maximumf %364, %365 : vector<2x512xf32>
    %367 = vector.extract_strided_slice %366 {offsets = [0, 0], sizes = [1, 512], strides = [1, 1]} : vector<2x512xf32> to vector<1x512xf32>
    %368 = vector.extract_strided_slice %366 {offsets = [1, 0], sizes = [1, 512], strides = [1, 1]} : vector<2x512xf32> to vector<1x512xf32>
    %c0_99 = arith.constant 0 : index
    %c0_100 = arith.constant 0 : index
    %369 = vector.load %arg5[%c0_99, %c0_100] : memref<4x18xf32, #tpu.memory_space<vmem>>, vector<4x18xf32>
    %cst_101 = arith.constant 0.000000e+00 : f32
    %370 = vector.broadcast %cst_101 : f32 to vector<4x512xf32>
    %371 = vector.extract_strided_slice %369 {offsets = [0, 0], sizes = [4, 1], strides = [1, 1]} : vector<4x18xf32> to vector<4x1xf32>
    %c17_i32_102 = arith.constant 17 : i32
    %372 = tpu.dynamic_rotate %367 by %c17_i32_102 dim 1 : vector<1x512xf32>, i32 -> vector<1x512xf32>
    %cst_103 = arith.constant 0.000000e+00 : f32
    %373 = vector.broadcast %cst_103 : f32 to vector<1x512xf32>
    %374 = arith.select %23, %372, %373 : vector<1x512xi1>, vector<1x512xf32>
    %375 = vector.broadcast %371 : vector<4x1xf32> to vector<4x512xf32>
    %376 = vector.broadcast %374 : vector<1x512xf32> to vector<4x512xf32>
    %377 = arith.mulf %375, %376 : vector<4x512xf32>
    %378 = arith.addf %370, %377 : vector<4x512xf32>
    %379 = vector.extract_strided_slice %369 {offsets = [0, 1], sizes = [4, 1], strides = [1, 1]} : vector<4x18xf32> to vector<4x1xf32>
    %c16_i32_104 = arith.constant 16 : i32
    %380 = tpu.dynamic_rotate %367 by %c16_i32_104 dim 1 : vector<1x512xf32>, i32 -> vector<1x512xf32>
    %cst_105 = arith.constant 0.000000e+00 : f32
    %381 = vector.broadcast %cst_105 : f32 to vector<1x512xf32>
    %382 = arith.select %25, %380, %381 : vector<1x512xi1>, vector<1x512xf32>
    %383 = vector.broadcast %379 : vector<4x1xf32> to vector<4x512xf32>
    %384 = vector.broadcast %382 : vector<1x512xf32> to vector<4x512xf32>
    %385 = arith.mulf %383, %384 : vector<4x512xf32>
    %386 = arith.addf %378, %385 : vector<4x512xf32>
    %387 = vector.extract_strided_slice %369 {offsets = [0, 2], sizes = [4, 1], strides = [1, 1]} : vector<4x18xf32> to vector<4x1xf32>
    %c15_i32_106 = arith.constant 15 : i32
    %388 = tpu.dynamic_rotate %367 by %c15_i32_106 dim 1 : vector<1x512xf32>, i32 -> vector<1x512xf32>
    %cst_107 = arith.constant 0.000000e+00 : f32
    %389 = vector.broadcast %cst_107 : f32 to vector<1x512xf32>
    %390 = arith.select %30, %388, %389 : vector<1x512xi1>, vector<1x512xf32>
    %391 = vector.broadcast %387 : vector<4x1xf32> to vector<4x512xf32>
    %392 = vector.broadcast %390 : vector<1x512xf32> to vector<4x512xf32>
    %393 = arith.mulf %391, %392 : vector<4x512xf32>
    %394 = arith.addf %386, %393 : vector<4x512xf32>
    %395 = vector.extract_strided_slice %369 {offsets = [0, 3], sizes = [4, 1], strides = [1, 1]} : vector<4x18xf32> to vector<4x1xf32>
    %c1_i32_108 = arith.constant 1 : i32
    %396 = tpu.dynamic_rotate %367 by %c1_i32_108 dim 1 : vector<1x512xf32>, i32 -> vector<1x512xf32>
    %cst_109 = arith.constant 0.000000e+00 : f32
    %397 = vector.broadcast %cst_109 : f32 to vector<1x512xf32>
    %398 = arith.select %32, %396, %397 : vector<1x512xi1>, vector<1x512xf32>
    %399 = vector.broadcast %395 : vector<4x1xf32> to vector<4x512xf32>
    %400 = vector.broadcast %398 : vector<1x512xf32> to vector<4x512xf32>
    %401 = arith.mulf %399, %400 : vector<4x512xf32>
    %402 = arith.addf %394, %401 : vector<4x512xf32>
    %403 = vector.extract_strided_slice %369 {offsets = [0, 4], sizes = [4, 1], strides = [1, 1]} : vector<4x18xf32> to vector<4x1xf32>
    %404 = vector.broadcast %403 : vector<4x1xf32> to vector<4x512xf32>
    %405 = vector.broadcast %367 : vector<1x512xf32> to vector<4x512xf32>
    %406 = arith.mulf %404, %405 : vector<4x512xf32>
    %407 = arith.addf %402, %406 : vector<4x512xf32>
    %408 = vector.extract_strided_slice %369 {offsets = [0, 5], sizes = [4, 1], strides = [1, 1]} : vector<4x18xf32> to vector<4x1xf32>
    %c511_i32_110 = arith.constant 511 : i32
    %409 = tpu.dynamic_rotate %367 by %c511_i32_110 dim 1 : vector<1x512xf32>, i32 -> vector<1x512xf32>
    %cst_111 = arith.constant 0.000000e+00 : f32
    %410 = vector.broadcast %cst_111 : f32 to vector<1x512xf32>
    %411 = arith.select %34, %409, %410 : vector<1x512xi1>, vector<1x512xf32>
    %412 = vector.broadcast %408 : vector<4x1xf32> to vector<4x512xf32>
    %413 = vector.broadcast %411 : vector<1x512xf32> to vector<4x512xf32>
    %414 = arith.mulf %412, %413 : vector<4x512xf32>
    %415 = arith.addf %407, %414 : vector<4x512xf32>
    %416 = vector.extract_strided_slice %369 {offsets = [0, 6], sizes = [4, 1], strides = [1, 1]} : vector<4x18xf32> to vector<4x1xf32>
    %c497_i32_112 = arith.constant 497 : i32
    %417 = tpu.dynamic_rotate %367 by %c497_i32_112 dim 1 : vector<1x512xf32>, i32 -> vector<1x512xf32>
    %cst_113 = arith.constant 0.000000e+00 : f32
    %418 = vector.broadcast %cst_113 : f32 to vector<1x512xf32>
    %419 = arith.select %39, %417, %418 : vector<1x512xi1>, vector<1x512xf32>
    %420 = vector.broadcast %416 : vector<4x1xf32> to vector<4x512xf32>
    %421 = vector.broadcast %419 : vector<1x512xf32> to vector<4x512xf32>
    %422 = arith.mulf %420, %421 : vector<4x512xf32>
    %423 = arith.addf %415, %422 : vector<4x512xf32>
    %424 = vector.extract_strided_slice %369 {offsets = [0, 7], sizes = [4, 1], strides = [1, 1]} : vector<4x18xf32> to vector<4x1xf32>
    %c496_i32_114 = arith.constant 496 : i32
    %425 = tpu.dynamic_rotate %367 by %c496_i32_114 dim 1 : vector<1x512xf32>, i32 -> vector<1x512xf32>
    %cst_115 = arith.constant 0.000000e+00 : f32
    %426 = vector.broadcast %cst_115 : f32 to vector<1x512xf32>
    %427 = arith.select %41, %425, %426 : vector<1x512xi1>, vector<1x512xf32>
    %428 = vector.broadcast %424 : vector<4x1xf32> to vector<4x512xf32>
    %429 = vector.broadcast %427 : vector<1x512xf32> to vector<4x512xf32>
    %430 = arith.mulf %428, %429 : vector<4x512xf32>
    %431 = arith.addf %423, %430 : vector<4x512xf32>
    %432 = vector.extract_strided_slice %369 {offsets = [0, 8], sizes = [4, 1], strides = [1, 1]} : vector<4x18xf32> to vector<4x1xf32>
    %c495_i32_116 = arith.constant 495 : i32
    %433 = tpu.dynamic_rotate %367 by %c495_i32_116 dim 1 : vector<1x512xf32>, i32 -> vector<1x512xf32>
    %cst_117 = arith.constant 0.000000e+00 : f32
    %434 = vector.broadcast %cst_117 : f32 to vector<1x512xf32>
    %435 = arith.select %46, %433, %434 : vector<1x512xi1>, vector<1x512xf32>
    %436 = vector.broadcast %432 : vector<4x1xf32> to vector<4x512xf32>
    %437 = vector.broadcast %435 : vector<1x512xf32> to vector<4x512xf32>
    %438 = arith.mulf %436, %437 : vector<4x512xf32>
    %439 = arith.addf %431, %438 : vector<4x512xf32>
    %440 = vector.extract_strided_slice %369 {offsets = [0, 9], sizes = [4, 1], strides = [1, 1]} : vector<4x18xf32> to vector<4x1xf32>
    %c17_i32_118 = arith.constant 17 : i32
    %441 = tpu.dynamic_rotate %368 by %c17_i32_118 dim 1 : vector<1x512xf32>, i32 -> vector<1x512xf32>
    %cst_119 = arith.constant 0.000000e+00 : f32
    %442 = vector.broadcast %cst_119 : f32 to vector<1x512xf32>
    %443 = arith.select %23, %441, %442 : vector<1x512xi1>, vector<1x512xf32>
    %444 = vector.broadcast %440 : vector<4x1xf32> to vector<4x512xf32>
    %445 = vector.broadcast %443 : vector<1x512xf32> to vector<4x512xf32>
    %446 = arith.mulf %444, %445 : vector<4x512xf32>
    %447 = arith.addf %439, %446 : vector<4x512xf32>
    %448 = vector.extract_strided_slice %369 {offsets = [0, 10], sizes = [4, 1], strides = [1, 1]} : vector<4x18xf32> to vector<4x1xf32>
    %c16_i32_120 = arith.constant 16 : i32
    %449 = tpu.dynamic_rotate %368 by %c16_i32_120 dim 1 : vector<1x512xf32>, i32 -> vector<1x512xf32>
    %cst_121 = arith.constant 0.000000e+00 : f32
    %450 = vector.broadcast %cst_121 : f32 to vector<1x512xf32>
    %451 = arith.select %25, %449, %450 : vector<1x512xi1>, vector<1x512xf32>
    %452 = vector.broadcast %448 : vector<4x1xf32> to vector<4x512xf32>
    %453 = vector.broadcast %451 : vector<1x512xf32> to vector<4x512xf32>
    %454 = arith.mulf %452, %453 : vector<4x512xf32>
    %455 = arith.addf %447, %454 : vector<4x512xf32>
    %456 = vector.extract_strided_slice %369 {offsets = [0, 11], sizes = [4, 1], strides = [1, 1]} : vector<4x18xf32> to vector<4x1xf32>
    %c15_i32_122 = arith.constant 15 : i32
    %457 = tpu.dynamic_rotate %368 by %c15_i32_122 dim 1 : vector<1x512xf32>, i32 -> vector<1x512xf32>
    %cst_123 = arith.constant 0.000000e+00 : f32
    %458 = vector.broadcast %cst_123 : f32 to vector<1x512xf32>
    %459 = arith.select %30, %457, %458 : vector<1x512xi1>, vector<1x512xf32>
    %460 = vector.broadcast %456 : vector<4x1xf32> to vector<4x512xf32>
    %461 = vector.broadcast %459 : vector<1x512xf32> to vector<4x512xf32>
    %462 = arith.mulf %460, %461 : vector<4x512xf32>
    %463 = arith.addf %455, %462 : vector<4x512xf32>
    %464 = vector.extract_strided_slice %369 {offsets = [0, 12], sizes = [4, 1], strides = [1, 1]} : vector<4x18xf32> to vector<4x1xf32>
    %c1_i32_124 = arith.constant 1 : i32
    %465 = tpu.dynamic_rotate %368 by %c1_i32_124 dim 1 : vector<1x512xf32>, i32 -> vector<1x512xf32>
    %cst_125 = arith.constant 0.000000e+00 : f32
    %466 = vector.broadcast %cst_125 : f32 to vector<1x512xf32>
    %467 = arith.select %32, %465, %466 : vector<1x512xi1>, vector<1x512xf32>
    %468 = vector.broadcast %464 : vector<4x1xf32> to vector<4x512xf32>
    %469 = vector.broadcast %467 : vector<1x512xf32> to vector<4x512xf32>
    %470 = arith.mulf %468, %469 : vector<4x512xf32>
    %471 = arith.addf %463, %470 : vector<4x512xf32>
    %472 = vector.extract_strided_slice %369 {offsets = [0, 13], sizes = [4, 1], strides = [1, 1]} : vector<4x18xf32> to vector<4x1xf32>
    %473 = vector.broadcast %472 : vector<4x1xf32> to vector<4x512xf32>
    %474 = vector.broadcast %368 : vector<1x512xf32> to vector<4x512xf32>
    %475 = arith.mulf %473, %474 : vector<4x512xf32>
    %476 = arith.addf %471, %475 : vector<4x512xf32>
    %477 = vector.extract_strided_slice %369 {offsets = [0, 14], sizes = [4, 1], strides = [1, 1]} : vector<4x18xf32> to vector<4x1xf32>
    %c511_i32_126 = arith.constant 511 : i32
    %478 = tpu.dynamic_rotate %368 by %c511_i32_126 dim 1 : vector<1x512xf32>, i32 -> vector<1x512xf32>
    %cst_127 = arith.constant 0.000000e+00 : f32
    %479 = vector.broadcast %cst_127 : f32 to vector<1x512xf32>
    %480 = arith.select %34, %478, %479 : vector<1x512xi1>, vector<1x512xf32>
    %481 = vector.broadcast %477 : vector<4x1xf32> to vector<4x512xf32>
    %482 = vector.broadcast %480 : vector<1x512xf32> to vector<4x512xf32>
    %483 = arith.mulf %481, %482 : vector<4x512xf32>
    %484 = arith.addf %476, %483 : vector<4x512xf32>
    %485 = vector.extract_strided_slice %369 {offsets = [0, 15], sizes = [4, 1], strides = [1, 1]} : vector<4x18xf32> to vector<4x1xf32>
    %c497_i32_128 = arith.constant 497 : i32
    %486 = tpu.dynamic_rotate %368 by %c497_i32_128 dim 1 : vector<1x512xf32>, i32 -> vector<1x512xf32>
    %cst_129 = arith.constant 0.000000e+00 : f32
    %487 = vector.broadcast %cst_129 : f32 to vector<1x512xf32>
    %488 = arith.select %39, %486, %487 : vector<1x512xi1>, vector<1x512xf32>
    %489 = vector.broadcast %485 : vector<4x1xf32> to vector<4x512xf32>
    %490 = vector.broadcast %488 : vector<1x512xf32> to vector<4x512xf32>
    %491 = arith.mulf %489, %490 : vector<4x512xf32>
    %492 = arith.addf %484, %491 : vector<4x512xf32>
    %493 = vector.extract_strided_slice %369 {offsets = [0, 16], sizes = [4, 1], strides = [1, 1]} : vector<4x18xf32> to vector<4x1xf32>
    %c496_i32_130 = arith.constant 496 : i32
    %494 = tpu.dynamic_rotate %368 by %c496_i32_130 dim 1 : vector<1x512xf32>, i32 -> vector<1x512xf32>
    %cst_131 = arith.constant 0.000000e+00 : f32
    %495 = vector.broadcast %cst_131 : f32 to vector<1x512xf32>
    %496 = arith.select %41, %494, %495 : vector<1x512xi1>, vector<1x512xf32>
    %497 = vector.broadcast %493 : vector<4x1xf32> to vector<4x512xf32>
    %498 = vector.broadcast %496 : vector<1x512xf32> to vector<4x512xf32>
    %499 = arith.mulf %497, %498 : vector<4x512xf32>
    %500 = arith.addf %492, %499 : vector<4x512xf32>
    %501 = vector.extract_strided_slice %369 {offsets = [0, 17], sizes = [4, 1], strides = [1, 1]} : vector<4x18xf32> to vector<4x1xf32>
    %c495_i32_132 = arith.constant 495 : i32
    %502 = tpu.dynamic_rotate %368 by %c495_i32_132 dim 1 : vector<1x512xf32>, i32 -> vector<1x512xf32>
    %cst_133 = arith.constant 0.000000e+00 : f32
    %503 = vector.broadcast %cst_133 : f32 to vector<1x512xf32>
    %504 = arith.select %46, %502, %503 : vector<1x512xi1>, vector<1x512xf32>
    %505 = vector.broadcast %501 : vector<4x1xf32> to vector<4x512xf32>
    %506 = vector.broadcast %504 : vector<1x512xf32> to vector<4x512xf32>
    %507 = arith.mulf %505, %506 : vector<4x512xf32>
    %508 = arith.addf %500, %507 : vector<4x512xf32>
    %cst_134 = arith.constant 0.000000e+00 : f32
    %509 = vector.broadcast %cst_134 : f32 to vector<4x512xf32>
    %510 = arith.maximumf %508, %509 : vector<4x512xf32>
    %c0_135 = arith.constant 0 : index
    %c0_136 = arith.constant 0 : index
    %511 = vector.load %arg6[%c0_135, %c0_136] : memref<4x512xf32, #tpu.memory_space<vmem>>, vector<4x512xf32>
    tpu.vector_store %arg6[%c0_135, %c0_136], %510 {strides = array<i32>} : memref<4x512xf32, #tpu.memory_space<vmem>>, vector<4x512xf32>,
    return
  }
  func.func @transform_0(%arg0: i32) -> (i32, i32) {
    %c0_i32 = arith.constant 0 : i32
    %c0_i32_0 = arith.constant 0 : i32
    %c0_i32_1 = arith.constant 0 : i32
    return %c0_i32, %c0_i32_0 : i32, i32
  }
  func.func @transform_1(%arg0: i32) -> (i32, i32) {
    %c0_i32 = arith.constant 0 : i32
    %c0_i32_0 = arith.constant 0 : i32
    %c0_i32_1 = arith.constant 0 : i32
    return %c0_i32, %c0_i32_0 : i32, i32
  }
  func.func @transform_2(%arg0: i32) -> (i32, i32) {
    %c0_i32 = arith.constant 0 : i32
    %c0_i32_0 = arith.constant 0 : i32
    %c0_i32_1 = arith.constant 0 : i32
    return %c0_i32, %c0_i32_0 : i32, i32
  }
  func.func @transform_3(%arg0: i32) -> (i32, i32) {
    %c0_i32 = arith.constant 0 : i32
    %c0_i32_0 = arith.constant 0 : i32
    %c0_i32_1 = arith.constant 0 : i32
    return %c0_i32, %c0_i32_0 : i32, i32
  }
  func.func @transform_4(%arg0: i32) -> (i32, i32) {
    %c0_i32 = arith.constant 0 : i32
    %c0_i32_0 = arith.constant 0 : i32
    %c0_i32_1 = arith.constant 0 : i32
    return %c0_i32, %c0_i32_0 : i32, i32
  }
  func.func @transform_5(%arg0: i32) -> (i32, i32) {
    %c0_i32 = arith.constant 0 : i32
    %c0_i32_0 = arith.constant 0 : i32
    %c0_i32_1 = arith.constant 0 : i32
    return %c0_i32, %c0_i32_0 : i32, i32
  }
}

</mosaic_0001>

<llo_original>
// kernel: _up_forward_impl.1
$region0: #{_up_forward_impl.1}
  #allocation0 [shape = 'u32[]', space=smem, size = 0x4, offset = 0x4, fixed_abs, tag = 'smem constant byte address 0x4 - core index']
  #allocation1 [shape = 'u32[72,128]{1,0:T(1,128)}', space=vmem, size = 0x9000, scoped, tag = 'internal scratch']
  %s0 = inlined_call_operand.vmem [shape: s32[4,512], index: 0, kind: input, shape index: {}]
  %s1 = inlined_call_operand.vmem [shape: f32[2,512], index: 1, kind: input, shape index: {}]
  %s2 = inlined_call_operand.vmem [shape: f32[2,512], index: 2, kind: input, shape index: {}]
  %s3 = inlined_call_operand.vmem [shape: f32[2,36], index: 3, kind: input, shape index: {}]
  %s4 = inlined_call_operand.vmem [shape: f32[4,18], index: 4, kind: input, shape index: {}]
  %s5 = inlined_call_operand.vmem [shape: f32[4,512], index: 5, kind: output, shape index: {}]
  %s6 = sld [smem:[#allocation0]]
  $region30: #{_up_forward_impl.1} parent=0
    _
  %s8 = ssub.s32 1, %s6
  %s9 = scalar_select 0, %s8, %s6
  // Predicated region
  $region2: #{_up_forward_impl.1} parent=0 // pred_check
    _
  $region3: #{_up_forward_impl.1} parent=0 // pred_check_branch
    %11 = sbr.rel (0) target = $region5
  $region4: #{_up_forward_impl.1} parent=0 // pred_region
    _
  $region5: #{_up_forward_impl.1} parent=0 // pred_fallthru
    _
  // Predicated region
  $region6: #{_up_forward_impl.1} parent=0 // pred_check
    _
  $region7: #{_up_forward_impl.1} parent=0 // pred_check_branch
    %13 = sbr.rel (0) target = $region9
  $region8: #{_up_forward_impl.1} parent=0 // pred_region
    _
  $region9: #{_up_forward_impl.1} parent=0 // pred_fallthru
    _
  // Predicated region
  $region10: #{_up_forward_impl.1} parent=0 // pred_check
    _
  $region11: #{_up_forward_impl.1} parent=0 // pred_check_branch
    %15 = sbr.rel (0) target = $region13
  $region12: #{_up_forward_impl.1} parent=0 // pred_region
    _
  $region13: #{_up_forward_impl.1} parent=0 // pred_fallthru
    _
  // Predicated region
  $region14: #{_up_forward_impl.1} parent=0 // pred_check
    _
  $region15: #{_up_forward_impl.1} parent=0 // pred_check_branch
    %17 = sbr.rel (0) target = $region17
  $region16: #{_up_forward_impl.1} parent=0 // pred_region
    _
  $region17: #{_up_forward_impl.1} parent=0 // pred_fallthru
    _
  // Predicated region
  $region18: #{_up_forward_impl.1} parent=0 // pred_check
    _
  $region19: #{_up_forward_impl.1} parent=0 // pred_check_branch
    %19 = sbr.rel (0) target = $region21
  $region20: #{_up_forward_impl.1} parent=0 // pred_region
    _
  $region21: #{_up_forward_impl.1} parent=0 // pred_fallthru
    _
  %v20 = vld [vmem:[%s0] sm:$0xff]
  %v21 = vld [vmem:[%s0 + $0x8] sm:$0xff]
  %vm22 = vcmp.eq.s32.totalorder %v20, 0
  %vm23 = vcmp.eq.s32.totalorder %v21, 0
  %vm24 = vcmp.eq.s32.totalorder %v20, 15
  %vm25 = vcmp.eq.s32.totalorder %v21, 15
  %vm26 = vmor %vm22, %vm24
  %vm27 = vmor %vm23, %vm25
  %vm28 = vcmp.ge.s32.totalorder %v20, 1
  %vm29 = vcmp.ge.s32.totalorder %v21, 1
  %v30 = vsel %vm28, 1, 0
  %v31 = vsel %vm29, 1, 0
  %v32 = vrot.slane %v30, 7
  %v33 = vrot.slane %v31, 7
  %vm34 = vcmp.ne.s32.totalorder %v32, 0
  %vm35 = vcmp.ne.s32.totalorder %v33, 0
  %vm36 = vmand %vm28, %vm34
  %vm37 = vmand %vm29, %vm35
  %vm38 = vcmp.le.s32.totalorder %v20, 14
  %vm39 = vcmp.le.s32.totalorder %v21, 14
  %v40 = vsel %vm38, 1, 0
  %v41 = vsel %vm39, 1, 0
  %v42 = vrot.slane %v40, 7
  %v43 = vrot.slane %v41, 7
  %vm44 = vcmp.ne.s32.totalorder %v42, 0
  %vm45 = vcmp.ne.s32.totalorder %v43, 0
  %vm46 = vmand %vm28, %vm44
  %vm47 = vmand %vm29, %vm45
  %vm48 = vmand %vm38, %vm34
  %vm49 = vmand %vm39, %vm35
  %vm50 = vmand %vm38, %vm44
  %vm51 = vmand %vm39, %vm45
  %v52 = vld [vmem:[%s1] ss:$2 sm:$0xf]
  %s53 = scalar_lea.vmem %s1, 1
  %v54 = vld [vmem:[%s53] ss:$2 sm:$0xf]
  %v55 = vld [vmem:[%s2] ss:$2 sm:$0xf]
  %v57 = vperm.slane %v55, 0
  %v58 = vperm.slane %v55, 1
  %v59 = vperm.slane %v55, 2
  %v60 = vperm.slane %v55, 3
  %65 = vrot.lane.b32.xlu0 %v57, 1
  %v66 = vpop.permute.xlu0 %65
  %67 = vrot.lane.b32.xlu0 %v58, 1
  %v68 = vpop.permute.xlu0 %67
  %69 = vrot.lane.b32.xlu0 %v59, 1
  %v70 = vpop.permute.xlu0 %69
  %71 = vrot.lane.b32.xlu0 %v60, 1
  %v72 = vpop.permute.xlu0 %71
  %v73 = vlaneseq
  %v74 = vand.u32 %v73, 127
  %vm75 = vcmp.lt.s32.totalorder %v74, 1
  %v76 = vsel %vm75, %v70, %v72
  %v77 = vsel %vm75, %v68, %v70
  %v78 = vsel %vm75, %v66, %v68
  %v79 = vsel %vm75, %v72, %v66
  %80 = vrot.lane.b32.xlu0 %v57, 127
  %v81 = vpop.permute.xlu0 %80
  %82 = vrot.lane.b32.xlu0 %v58, 127
  %v83 = vpop.permute.xlu0 %82
  %84 = vrot.lane.b32.xlu0 %v59, 127
  %v85 = vpop.permute.xlu0 %84
  %86 = vrot.lane.b32.xlu0 %v60, 127
  %v87 = vpop.permute.xlu0 %86
  %vm88 = vcmp.lt.s32.totalorder %v74, 127
  %v89 = vsel %vm88, %v85, %v87
  %v90 = vsel %vm88, %v83, %v85
  %v91 = vsel %vm88, %v81, %v83
  %v92 = vsel %vm88, %v87, %v81
  %v97 = vrot.slane %v78, 4
  %v98 = vrot.slane %v76, 4
  %vm99 = vcmask 1043456
  %v100 = vsel %vm99, %v79, %v97
  %v101 = vsel %vm99, %v77, %v98
  %v102 = vrot.slane %v100, 6
  %v103 = vrot.slane %v101, 6
  %v110 = vrot.slane %v90, 4
  %v111 = vrot.slane %v92, 4
  %v112 = vsel %vm99, %v91, %v110
  %v113 = vsel %vm99, %v89, %v111
  %v114 = vrot.slane %v112, 6
  %v115 = vrot.slane %v113, 6
  %v118 = vsel %vm22, %v102, %v114
  %v119 = vsel %vm23, %v103, %v115
  %v121 = vunpack.c.l.s4 286326784
  %v122 = vunpack.c.0.s8 %v121
  %v123 = vperm.slane %v55, %v122
  %v125 = vunpack.c.l.s4 858989090
  %v126 = vunpack.c.0.s8 %v125
  %v127 = vperm.slane %v55, %v126
  %v132 = vrot.slane %v118, 6
  %v133 = vrot.slane %v132, 4
  %v134 = vrot.slane %v119, 6
  %v135 = vrot.slane %v134, 4
  %v138 = vsel %vm26, %v123, %v133
  %v139 = vsel %vm27, %v127, %v135
  %v140 = vmul.f32 %v55, 0.75
  %v141 = vmul.f32 %v138, 0.25
  %v142 = vmul.f32 %v139, 0.25
  %v145 = vrot.slane %v141, 3
  %v146 = vrot.slane %v142, 6
  %v147 = vrot.slane %v142, 1
  %vm148 = vcmask 1040384
  %v149 = vsel %vm148, %v141, %v145
  %vm150 = vcmask 1042434
  %v151 = vsel %vm150, %v146, %v147
  %vm152 = vcmask 1041408
  %v153 = vsel %vm152, %v149, %v151
  %v155 = vadd.f32 %v140, %v153
  %v157 = vperm.slane %v155, 0
  %v158 = vperm.slane %v155, 1
  %v159 = vperm.slane %v155, 2
  %v160 = vperm.slane %v155, 3
  %165 = vrot.lane.b32.xlu0 %v157, 16
  %v166 = vpop.permute.xlu0 %165
  %167 = vrot.lane.b32.xlu0 %v158, 16
  %v168 = vpop.permute.xlu0 %167
  %169 = vrot.lane.b32.xlu0 %v159, 16
  %v170 = vpop.permute.xlu0 %169
  %171 = vrot.lane.b32.xlu0 %v160, 16
  %v172 = vpop.permute.xlu0 %171
  %vm173 = vcmp.lt.s32.totalorder %v74, 16
  %v174 = vsel %vm173, %v170, %v172
  %v175 = vsel %vm173, %v168, %v170
  %v176 = vsel %vm173, %v166, %v168
  %v177 = vsel %vm173, %v172, %v166
  %178 = vrot.lane.b32.xlu0 %v157, 112
  %v179 = vpop.permute.xlu0 %178
  %180 = vrot.lane.b32.xlu0 %v158, 112
  %v181 = vpop.permute.xlu0 %180
  %182 = vrot.lane.b32.xlu0 %v159, 112
  %v183 = vpop.permute.xlu0 %182
  %184 = vrot.lane.b32.xlu0 %v160, 112
  %v185 = vpop.permute.xlu0 %184
  %vm186 = vcmp.lt.s32.totalorder %v74, 112
  %v187 = vsel %vm186, %v183, %v185
  %v188 = vsel %vm186, %v181, %v183
  %v189 = vsel %vm186, %v179, %v181
  %v190 = vsel %vm186, %v185, %v179
  %v195 = vrot.slane %v176, 4
  %v196 = vrot.slane %v174, 4
  %v197 = vsel %vm99, %v177, %v195
  %v198 = vsel %vm99, %v175, %v196
  %v199 = vrot.slane %v197, 5
  %v200 = vrot.slane %v198, 5
  %v207 = vrot.slane %v188, 4
  %v208 = vrot.slane %v190, 4
  %v209 = vsel %vm99, %v189, %v207
  %v210 = vsel %vm99, %v187, %v208
  %v211 = vrot.slane %v209, 5
  %v212 = vrot.slane %v210, 5
  %v215 = vsel %vm22, %v199, %v211
  %v216 = vsel %vm23, %v200, %v212
  %v218 = vunpack.c.l.s4 286326784
  %v219 = vunpack.c.0.s8 %v218
  %v220 = vperm.slane %v155, %v219
  %v222 = vunpack.c.l.s4 858989090
  %v223 = vunpack.c.0.s8 %v222
  %v224 = vperm.slane %v155, %v223
  %v229 = vrot.slane %v215, 6
  %v230 = vrot.slane %v229, 4
  %v231 = vrot.slane %v216, 6
  %v232 = vrot.slane %v231, 4
  %v235 = vsel %vm26, %v220, %v230
  %v236 = vsel %vm27, %v224, %v232
  %v237 = vmul.f32 %v155, 0.75
  %v238 = vmul.f32 %v235, 0.25
  %v239 = vmul.f32 %v236, 0.25
  %242 = vst [vmem:[#allocation1] sm:$0xff] %v238
  %243 = vst [vmem:[#allocation1 + $0x8] sm:$0xff] %v239
  %s244 = scalar_lea.vmem [#allocation1], 1
  %v245 = vld [vmem:[%s244] ss:$4 sm:$0xff]
  %v247 = vadd.f32 %v237, %v245
  %s248 = scalar_lea.vmem %s2, 1
  %v249 = vld [vmem:[%s248] ss:$2 sm:$0xf]
  %v251 = vperm.slane %v249, 0
  %v252 = vperm.slane %v249, 1
  %v253 = vperm.slane %v249, 2
  %v254 = vperm.slane %v249, 3
  %259 = vrot.lane.b32.xlu0 %v251, 1
  %v260 = vpop.permute.xlu0 %259
  %261 = vrot.lane.b32.xlu0 %v252, 1
  %v262 = vpop.permute.xlu0 %261
  %263 = vrot.lane.b32.xlu0 %v253, 1
  %v264 = vpop.permute.xlu0 %263
  %265 = vrot.lane.b32.xlu0 %v254, 1
  %v266 = vpop.permute.xlu0 %265
  %v267 = vsel %vm75, %v264, %v266
  %v268 = vsel %vm75, %v262, %v264
  %v269 = vsel %vm75, %v260, %v262
  %v270 = vsel %vm75, %v266, %v260
  %271 = vrot.lane.b32.xlu0 %v251, 127
  %v272 = vpop.permute.xlu0 %271
  %273 = vrot.lane.b32.xlu0 %v252, 127
  %v274 = vpop.permute.xlu0 %273
  %275 = vrot.lane.b32.xlu0 %v253, 127
  %v276 = vpop.permute.xlu0 %275
  %277 = vrot.lane.b32.xlu0 %v254, 127
  %v278 = vpop.permute.xlu0 %277
  %v279 = vsel %vm88, %v276, %v278
  %v280 = vsel %vm88, %v274, %v276
  %v281 = vsel %vm88, %v272, %v274
  %v282 = vsel %vm88, %v278, %v272
  %v287 = vrot.slane %v269, 4
  %v288 = vrot.slane %v267, 4
  %v289 = vsel %vm99, %v270, %v287
  %v290 = vsel %vm99, %v268, %v288
  %v291 = vrot.slane %v289, 6
  %v292 = vrot.slane %v290, 6
  %v299 = vrot.slane %v280, 4
  %v300 = vrot.slane %v282, 4
  %v301 = vsel %vm99, %v281, %v299
  %v302 = vsel %vm99, %v279, %v300
  %v303 = vrot.slane %v301, 6
  %v304 = vrot.slane %v302, 6
  %v307 = vsel %vm22, %v291, %v303
  %v308 = vsel %vm23, %v292, %v304
  %v310 = vunpack.c.l.s4 286326784
  %v311 = vunpack.c.0.s8 %v310
  %v312 = vperm.slane %v249, %v311
  %v314 = vunpack.c.l.s4 858989090
  %v315 = vunpack.c.0.s8 %v314
  %v316 = vperm.slane %v249, %v315
  %v321 = vrot.slane %v307, 6
  %v322 = vrot.slane %v321, 4
  %v323 = vrot.slane %v308, 6
  %v324 = vrot.slane %v323, 4
  %v327 = vsel %vm26, %v312, %v322
  %v328 = vsel %vm27, %v316, %v324
  %v329 = vmul.f32 %v249, 0.75
  %v330 = vmul.f32 %v327, 0.25
  %v331 = vmul.f32 %v328, 0.25
  %v334 = vrot.slane %v330, 3
  %v335 = vrot.slane %v331, 6
  %v336 = vrot.slane %v331, 1
  %v337 = vsel %vm148, %v330, %v334
  %v338 = vsel %vm150, %v335, %v336
  %v339 = vsel %vm152, %v337, %v338
  %v341 = vadd.f32 %v329, %v339
  %v343 = vperm.slane %v341, 0
  %v344 = vperm.slane %v341, 1
  %v345 = vperm.slane %v341, 2
  %v346 = vperm.slane %v341, 3
  %351 = vrot.lane.b32.xlu0 %v343, 16
  %v352 = vpop.permute.xlu0 %351
  %353 = vrot.lane.b32.xlu0 %v344, 16
  %v354 = vpop.permute.xlu0 %353
  %355 = vrot.lane.b32.xlu0 %v345, 16
  %v356 = vpop.permute.xlu0 %355
  %357 = vrot.lane.b32.xlu0 %v346, 16
  %v358 = vpop.permute.xlu0 %357
  %v359 = vsel %vm173, %v356, %v358
  %v360 = vsel %vm173, %v354, %v356
  %v361 = vsel %vm173, %v352, %v354
  %v362 = vsel %vm173, %v358, %v352
  %363 = vrot.lane.b32.xlu0 %v343, 112
  %v364 = vpop.permute.xlu0 %363
  %365 = vrot.lane.b32.xlu0 %v344, 112
  %v366 = vpop.permute.xlu0 %365
  %367 = vrot.lane.b32.xlu0 %v345, 112
  %v368 = vpop.permute.xlu0 %367
  %369 = vrot.lane.b32.xlu0 %v346, 112
  %v370 = vpop.permute.xlu0 %369
  %v371 = vsel %vm186, %v368, %v370
  %v372 = vsel %vm186, %v366, %v368
  %v373 = vsel %vm186, %v364, %v366
  %v374 = vsel %vm186, %v370, %v364
  %v379 = vrot.slane %v361, 4
  %v380 = vrot.slane %v359, 4
  %v381 = vsel %vm99, %v362, %v379
  %v382 = vsel %vm99, %v360, %v380
  %v383 = vrot.slane %v381, 5
  %v384 = vrot.slane %v382, 5
  %v391 = vrot.slane %v372, 4
  %v392 = vrot.slane %v374, 4
  %v393 = vsel %vm99, %v373, %v391
  %v394 = vsel %vm99, %v371, %v392
  %v395 = vrot.slane %v393, 5
  %v396 = vrot.slane %v394, 5
  %v399 = vsel %vm22, %v383, %v395
  %v400 = vsel %vm23, %v384, %v396
  %v402 = vunpack.c.l.s4 286326784
  %v403 = vunpack.c.0.s8 %v402
  %v404 = vperm.slane %v341, %v403
  %v406 = vunpack.c.l.s4 858989090
  %v407 = vunpack.c.0.s8 %v406
  %v408 = vperm.slane %v341, %v407
  %v413 = vrot.slane %v399, 6
  %v414 = vrot.slane %v413, 4
  %v415 = vrot.slane %v400, 6
  %v416 = vrot.slane %v415, 4
  %v419 = vsel %vm26, %v404, %v414
  %v420 = vsel %vm27, %v408, %v416
  %v421 = vmul.f32 %v341, 0.75
  %v422 = vmul.f32 %v419, 0.25
  %v423 = vmul.f32 %v420, 0.25
  %426 = vst [vmem:[#allocation1] sm:$0xff] %v422
  %427 = vst [vmem:[#allocation1 + $0x8] sm:$0xff] %v423
  %s428 = scalar_lea.vmem [#allocation1], 1
  %v429 = vld [vmem:[%s428] ss:$4 sm:$0xff]
  %v431 = vadd.f32 %v421, %v429
  %v432 = vld [vmem:[%s3] sm:$0x3]
  %v434 = vperm.slane %v52, 0
  %v435 = vperm.slane %v52, 1
  %v436 = vperm.slane %v52, 2
  %v437 = vperm.slane %v52, 3
  %442 = vrot.lane.b32.xlu0 %v434, 17
  %v443 = vpop.permute.xlu0 %442
  %444 = vrot.lane.b32.xlu0 %v435, 17
  %v445 = vpop.permute.xlu0 %444
  %446 = vrot.lane.b32.xlu0 %v436, 17
  %v447 = vpop.permute.xlu0 %446
  %448 = vrot.lane.b32.xlu0 %v437, 17
  %v449 = vpop.permute.xlu0 %448
  %vm450 = vcmp.lt.s32.totalorder %v74, 17
  %v451 = vsel %vm450, %v447, %v449
  %v452 = vsel %vm450, %v445, %v447
  %v453 = vsel %vm450, %v443, %v445
  %v454 = vsel %vm450, %v449, %v443
  %v459 = vrot.slane %v453, 4
  %v460 = vrot.slane %v451, 4
  %v461 = vsel %vm99, %v454, %v459
  %v462 = vsel %vm99, %v452, %v460
  %v463 = vrot.slane %v461, 7
  %v464 = vrot.slane %v462, 7
  %v467 = vsel %vm36, %v463, 0.0
  %v468 = vsel %vm37, %v464, 0.0
  %470 = vset.pattern.permute.xlu0 0
  %471 = vperm.xlu0 %470, %v432
  %v472 = vpop.permute.xlu0 %471
  %v476 = vperm.slane %v467, 1
  %v477 = vperm.slane %v467, 5
  %v478 = vperm.slane %v468, 1
  %v479 = vperm.slane %v468, 5
  %v484 = vperm.slane %v476, 1
  %v485 = vperm.slane %v477, 1
  %v486 = vperm.slane %v478, 1
  %v487 = vperm.slane %v479, 1
  %v488 = vmul.f32 %v472, %v484
  %v489 = vmul.f32 %v472, %v485
  %v490 = vmul.f32 %v472, %v486
  %v491 = vmul.f32 %v472, %v487
  %v492 = vadd.f32 %v488, 0.0
  %v493 = vadd.f32 %v489, 0.0
  %v494 = vadd.f32 %v490, 0.0
  %v495 = vadd.f32 %v491, 0.0
  %496 = vrot.lane.b32.xlu0 %v434, 16
  %v497 = vpop.permute.xlu0 %496
  %498 = vrot.lane.b32.xlu0 %v435, 16
  %v499 = vpop.permute.xlu0 %498
  %500 = vrot.lane.b32.xlu0 %v436, 16
  %v501 = vpop.permute.xlu0 %500
  %502 = vrot.lane.b32.xlu0 %v437, 16
  %v503 = vpop.permute.xlu0 %502
  %v504 = vsel %vm173, %v501, %v503
  %v505 = vsel %vm173, %v499, %v501
  %v506 = vsel %vm173, %v497, %v499
  %v507 = vsel %vm173, %v503, %v497
  %v512 = vrot.slane %v506, 4
  %v513 = vrot.slane %v504, 4
  %v514 = vsel %vm99, %v507, %v512
  %v515 = vsel %vm99, %v505, %v513
  %v516 = vrot.slane %v514, 7
  %v517 = vrot.slane %v515, 7
  %v520 = vsel %vm28, %v516, 0.0
  %v521 = vsel %vm29, %v517, 0.0
  %522 = vset.pattern.permute.xlu0 1
  %523 = vperm.xlu0 %522, %v432
  %v524 = vpop.permute.xlu0 %523
  %v528 = vperm.slane %v520, 1
  %v529 = vperm.slane %v520, 5
  %v530 = vperm.slane %v521, 1
  %v531 = vperm.slane %v521, 5
  %v536 = vperm.slane %v528, 1
  %v537 = vperm.slane %v529, 1
  %v538 = vperm.slane %v530, 1
  %v539 = vperm.slane %v531, 1
  %v540 = vmul.f32 %v524, %v536
  %v541 = vmul.f32 %v524, %v537
  %v542 = vmul.f32 %v524, %v538
  %v543 = vmul.f32 %v524, %v539
  %v544 = vadd.f32 %v492, %v540
  %v545 = vadd.f32 %v493, %v541
  %v546 = vadd.f32 %v494, %v542
  %v547 = vadd.f32 %v495, %v543
  %548 = vrot.lane.b32.xlu0 %v434, 15
  %v549 = vpop.permute.xlu0 %548
  %550 = vrot.lane.b32.xlu0 %v435, 15
  %v551 = vpop.permute.xlu0 %550
  %552 = vrot.lane.b32.xlu0 %v436, 15
  %v553 = vpop.permute.xlu0 %552
  %554 = vrot.lane.b32.xlu0 %v437, 15
  %v555 = vpop.permute.xlu0 %554
  %vm556 = vcmp.lt.s32.totalorder %v74, 15
  %v557 = vsel %vm556, %v553, %v555
  %v558 = vsel %vm556, %v551, %v553
  %v559 = vsel %vm556, %v549, %v551
  %v560 = vsel %vm556, %v555, %v549
  %v565 = vrot.slane %v559, 4
  %v566 = vrot.slane %v557, 4
  %v567 = vsel %vm99, %v560, %v565
  %v568 = vsel %vm99, %v558, %v566
  %v569 = vrot.slane %v567, 7
  %v570 = vrot.slane %v568, 7
  %v573 = vsel %vm46, %v569, 0.0
  %v574 = vsel %vm47, %v570, 0.0
  %575 = vset.pattern.permute.xlu0 2
  %576 = vperm.xlu0 %575, %v432
  %v577 = vpop.permute.xlu0 %576
  %v581 = vperm.slane %v573, 1
  %v582 = vperm.slane %v573, 5
  %v583 = vperm.slane %v574, 1
  %v584 = vperm.slane %v574, 5
  %v589 = vperm.slane %v581, 1
  %v590 = vperm.slane %v582, 1
  %v591 = vperm.slane %v583, 1
  %v592 = vperm.slane %v584, 1
  %v593 = vmul.f32 %v577, %v589
  %v594 = vmul.f32 %v577, %v590
  %v595 = vmul.f32 %v577, %v591
  %v596 = vmul.f32 %v577, %v592
  %v597 = vadd.f32 %v544, %v593
  %v598 = vadd.f32 %v545, %v594
  %v599 = vadd.f32 %v546, %v595
  %v600 = vadd.f32 %v547, %v596
  %601 = vrot.lane.b32.xlu0 %v434, 1
  %v602 = vpop.permute.xlu0 %601
  %603 = vrot.lane.b32.xlu0 %v435, 1
  %v604 = vpop.permute.xlu0 %603
  %605 = vrot.lane.b32.xlu0 %v436, 1
  %v606 = vpop.permute.xlu0 %605
  %607 = vrot.lane.b32.xlu0 %v437, 1
  %v608 = vpop.permute.xlu0 %607
  %v609 = vsel %vm75, %v606, %v608
  %v610 = vsel %vm75, %v604, %v606
  %v611 = vsel %vm75, %v602, %v604
  %v612 = vsel %vm75, %v608, %v602
  %v617 = vrot.slane %v611, 4
  %v618 = vrot.slane %v609, 4
  %v619 = vsel %vm99, %v612, %v617
  %v620 = vsel %vm99, %v610, %v618
  %v623 = vsel %vm28, %v619, 0.0
  %v624 = vsel %vm29, %v620, 0.0
  %625 = vset.pattern.permute.xlu0 3
  %626 = vperm.xlu0 %625, %v432
  %v627 = vpop.permute.xlu0 %626
  %v631 = vperm.slane %v623, 0
  %v632 = vperm.slane %v623, 4
  %v633 = vperm.slane %v624, 0
  %v634 = vperm.slane %v624, 4
  %v639 = vperm.slane %v631, 0
  %v640 = vperm.slane %v632, 0
  %v641 = vperm.slane %v633, 0
  %v642 = vperm.slane %v634, 0
  %v643 = vmul.f32 %v627, %v639
  %v644 = vmul.f32 %v627, %v640
  %v645 = vmul.f32 %v627, %v641
  %v646 = vmul.f32 %v627, %v642
  %v647 = vadd.f32 %v597, %v643
  %v648 = vadd.f32 %v598, %v644
  %v649 = vadd.f32 %v599, %v645
  %v650 = vadd.f32 %v600, %v646
  %651 = vset.pattern.permute.xlu0 4
  %652 = vperm.xlu0 %651, %v432
  %v653 = vpop.permute.xlu0 %652
  %v655 = vmul.f32 %v653, %v434
  %v656 = vmul.f32 %v653, %v435
  %v657 = vmul.f32 %v653, %v436
  %v658 = vmul.f32 %v653, %v437
  %v659 = vadd.f32 %v647, %v655
  %v660 = vadd.f32 %v648, %v656
  %v661 = vadd.f32 %v649, %v657
  %v662 = vadd.f32 %v650, %v658
  %663 = vrot.lane.b32.xlu0 %v434, 127
  %v664 = vpop.permute.xlu0 %663
  %665 = vrot.lane.b32.xlu0 %v435, 127
  %v666 = vpop.permute.xlu0 %665
  %667 = vrot.lane.b32.xlu0 %v436, 127
  %v668 = vpop.permute.xlu0 %667
  %669 = vrot.lane.b32.xlu0 %v437, 127
  %v670 = vpop.permute.xlu0 %669
  %v671 = vsel %vm88, %v668, %v670
  %v672 = vsel %vm88, %v666, %v668
  %v673 = vsel %vm88, %v664, %v666
  %v674 = vsel %vm88, %v670, %v664
  %v679 = vrot.slane %v672, 4
  %v680 = vrot.slane %v674, 4
  %v681 = vsel %vm99, %v673, %v679
  %v682 = vsel %vm99, %v671, %v680
  %v685 = vsel %vm38, %v681, 0.0
  %v686 = vsel %vm39, %v682, 0.0
  %687 = vset.pattern.permute.xlu0 5
  %688 = vperm.xlu0 %687, %v432
  %v689 = vpop.permute.xlu0 %688
  %v693 = vperm.slane %v685, 0
  %v694 = vperm.slane %v685, 4
  %v695 = vperm.slane %v686, 0
  %v696 = vperm.slane %v686, 4
  %v701 = vperm.slane %v693, 0
  %v702 = vperm.slane %v694, 0
  %v703 = vperm.slane %v695, 0
  %v704 = vperm.slane %v696, 0
  %v705 = vmul.f32 %v689, %v701
  %v706 = vmul.f32 %v689, %v702
  %v707 = vmul.f32 %v689, %v703
  %v708 = vmul.f32 %v689, %v704
  %v709 = vadd.f32 %v659, %v705
  %v710 = vadd.f32 %v660, %v706
  %v711 = vadd.f32 %v661, %v707
  %v712 = vadd.f32 %v662, %v708
  %713 = vrot.lane.b32.xlu0 %v434, 113
  %v714 = vpop.permute.xlu0 %713
  %715 = vrot.lane.b32.xlu0 %v435, 113
  %v716 = vpop.permute.xlu0 %715
  %717 = vrot.lane.b32.xlu0 %v436, 113
  %v718 = vpop.permute.xlu0 %717
  %719 = vrot.lane.b32.xlu0 %v437, 113
  %v720 = vpop.permute.xlu0 %719
  %vm721 = vcmp.lt.s32.totalorder %v74, 113
  %v722 = vsel %vm721, %v718, %v720
  %v723 = vsel %vm721, %v716, %v718
  %v724 = vsel %vm721, %v714, %v716
  %v725 = vsel %vm721, %v720, %v714
  %v730 = vrot.slane %v723, 4
  %v731 = vrot.slane %v725, 4
  %v732 = vsel %vm99, %v724, %v730
  %v733 = vsel %vm99, %v722, %v731
  %v734 = vrot.slane %v732, 7
  %v735 = vrot.slane %v733, 7
  %v738 = vsel %vm48, %v734, 0.0
  %v739 = vsel %vm49, %v735, 0.0
  %740 = vset.pattern.permute.xlu0 6
  %741 = vperm.xlu0 %740, %v432
  %v742 = vpop.permute.xlu0 %741
  %v746 = vperm.slane %v738, 1
  %v747 = vperm.slane %v738, 5
  %v748 = vperm.slane %v739, 1
  %v749 = vperm.slane %v739, 5
  %v754 = vperm.slane %v746, 1
  %v755 = vperm.slane %v747, 1
  %v756 = vperm.slane %v748, 1
  %v757 = vperm.slane %v749, 1
  %v758 = vmul.f32 %v742, %v754
  %v759 = vmul.f32 %v742, %v755
  %v760 = vmul.f32 %v742, %v756
  %v761 = vmul.f32 %v742, %v757
  %v762 = vadd.f32 %v709, %v758
  %v763 = vadd.f32 %v710, %v759
  %v764 = vadd.f32 %v711, %v760
  %v765 = vadd.f32 %v712, %v761
  %766 = vrot.lane.b32.xlu0 %v434, 112
  %v767 = vpop.permute.xlu0 %766
  %768 = vrot.lane.b32.xlu0 %v435, 112
  %v769 = vpop.permute.xlu0 %768
  %770 = vrot.lane.b32.xlu0 %v436, 112
  %v771 = vpop.permute.xlu0 %770
  %772 = vrot.lane.b32.xlu0 %v437, 112
  %v773 = vpop.permute.xlu0 %772
  %v774 = vsel %vm186, %v771, %v773
  %v775 = vsel %vm186, %v769, %v771
  %v776 = vsel %vm186, %v767, %v769
  %v777 = vsel %vm186, %v773, %v767
  %v782 = vrot.slane %v775, 4
  %v783 = vrot.slane %v777, 4
  %v784 = vsel %vm99, %v776, %v782
  %v785 = vsel %vm99, %v774, %v783
  %v786 = vrot.slane %v784, 7
  %v787 = vrot.slane %v785, 7
  %v790 = vsel %vm38, %v786, 0.0
  %v791 = vsel %vm39, %v787, 0.0
  %792 = vset.pattern.permute.xlu0 7
  %793 = vperm.xlu0 %792, %v432
  %v794 = vpop.permute.xlu0 %793
  %v798 = vperm.slane %v790, 1
  %v799 = vperm.slane %v790, 5
  %v800 = vperm.slane %v791, 1
  %v801 = vperm.slane %v791, 5
  %v806 = vperm.slane %v798, 1
  %v807 = vperm.slane %v799, 1
  %v808 = vperm.slane %v800, 1
  %v809 = vperm.slane %v801, 1
  %v810 = vmul.f32 %v794, %v806
  %v811 = vmul.f32 %v794, %v807
  %v812 = vmul.f32 %v794, %v808
  %v813 = vmul.f32 %v794, %v809
  %v814 = vadd.f32 %v762, %v810
  %v815 = vadd.f32 %v763, %v811
  %v816 = vadd.f32 %v764, %v812
  %v817 = vadd.f32 %v765, %v813
  %818 = vrot.lane.b32.xlu0 %v434, 111
  %v819 = vpop.permute.xlu0 %818
  %820 = vrot.lane.b32.xlu0 %v435, 111
  %v821 = vpop.permute.xlu0 %820
  %822 = vrot.lane.b32.xlu0 %v436, 111
  %v823 = vpop.permute.xlu0 %822
  %824 = vrot.lane.b32.xlu0 %v437, 111
  %v825 = vpop.permute.xlu0 %824
  %vm826 = vcmp.lt.s32.totalorder %v74, 111
  %v827 = vsel %vm826, %v823, %v825
  %v828 = vsel %vm826, %v821, %v823
  %v829 = vsel %vm826, %v819, %v821
  %v830 = vsel %vm826, %v825, %v819
  %v835 = vrot.slane %v828, 4
  %v836 = vrot.slane %v830, 4
  %v837 = vsel %vm99, %v829, %v835
  %v838 = vsel %vm99, %v827, %v836
  %v839 = vrot.slane %v837, 7
  %v840 = vrot.slane %v838, 7
  %v843 = vsel %vm50, %v839, 0.0
  %v844 = vsel %vm51, %v840, 0.0
  %845 = vset.pattern.permute.xlu0 8
  %846 = vperm.xlu0 %845, %v432
  %v847 = vpop.permute.xlu0 %846
  %v851 = vperm.slane %v843, 1
  %v852 = vperm.slane %v843, 5
  %v853 = vperm.slane %v844, 1
  %v854 = vperm.slane %v844, 5
  %v859 = vperm.slane %v851, 1
  %v860 = vperm.slane %v852, 1
  %v861 = vperm.slane %v853, 1
  %v862 = vperm.slane %v854, 1
  %v863 = vmul.f32 %v847, %v859
  %v864 = vmul.f32 %v847, %v860
  %v865 = vmul.f32 %v847, %v861
  %v866 = vmul.f32 %v847, %v862
  %v867 = vadd.f32 %v814, %v863
  %v868 = vadd.f32 %v815, %v864
  %v869 = vadd.f32 %v816, %v865
  %v870 = vadd.f32 %v817, %v866
  %v872 = vperm.slane %v54, 0
  %v873 = vperm.slane %v54, 1
  %v874 = vperm.slane %v54, 2
  %v875 = vperm.slane %v54, 3
  %880 = vrot.lane.b32.xlu0 %v872, 17
  %v881 = vpop.permute.xlu0 %880
  %882 = vrot.lane.b32.xlu0 %v873, 17
  %v883 = vpop.permute.xlu0 %882
  %884 = vrot.lane.b32.xlu0 %v874, 17
  %v885 = vpop.permute.xlu0 %884
  %886 = vrot.lane.b32.xlu0 %v875, 17
  %v887 = vpop.permute.xlu0 %886
  %v888 = vsel %vm450, %v885, %v887
  %v889 = vsel %vm450, %v883, %v885
  %v890 = vsel %vm450, %v881, %v883
  %v891 = vsel %vm450, %v887, %v881
  %v896 = vrot.slane %v890, 4
  %v897 = vrot.slane %v888, 4
  %v898 = vsel %vm99, %v891, %v896
  %v899 = vsel %vm99, %v889, %v897
  %v900 = vrot.slane %v898, 7
  %v901 = vrot.slane %v899, 7
  %v904 = vsel %vm36, %v900, 0.0
  %v905 = vsel %vm37, %v901, 0.0
  %906 = vset.pattern.permute.xlu0 9
  %907 = vperm.xlu0 %906, %v432
  %v908 = vpop.permute.xlu0 %907
  %v912 = vperm.slane %v904, 1
  %v913 = vperm.slane %v904, 5
  %v914 = vperm.slane %v905, 1
  %v915 = vperm.slane %v905, 5
  %v920 = vperm.slane %v912, 1
  %v921 = vperm.slane %v913, 1
  %v922 = vperm.slane %v914, 1
  %v923 = vperm.slane %v915, 1
  %v924 = vmul.f32 %v908, %v920
  %v925 = vmul.f32 %v908, %v921
  %v926 = vmul.f32 %v908, %v922
  %v927 = vmul.f32 %v908, %v923
  %v928 = vadd.f32 %v867, %v924
  %v929 = vadd.f32 %v868, %v925
  %v930 = vadd.f32 %v869, %v926
  %v931 = vadd.f32 %v870, %v927
  %932 = vrot.lane.b32.xlu0 %v872, 16
  %v933 = vpop.permute.xlu0 %932
  %934 = vrot.lane.b32.xlu0 %v873, 16
  %v935 = vpop.permute.xlu0 %934
  %936 = vrot.lane.b32.xlu0 %v874, 16
  %v937 = vpop.permute.xlu0 %936
  %938 = vrot.lane.b32.xlu0 %v875, 16
  %v939 = vpop.permute.xlu0 %938
  %v940 = vsel %vm173, %v937, %v939
  %v941 = vsel %vm173, %v935, %v937
  %v942 = vsel %vm173, %v933, %v935
  %v943 = vsel %vm173, %v939, %v933
  %v948 = vrot.slane %v942, 4
  %v949 = vrot.slane %v940, 4
  %v950 = vsel %vm99, %v943, %v948
  %v951 = vsel %vm99, %v941, %v949
  %v952 = vrot.slane %v950, 7
  %v953 = vrot.slane %v951, 7
  %v956 = vsel %vm28, %v952, 0.0
  %v957 = vsel %vm29, %v953, 0.0
  %958 = vset.pattern.permute.xlu0 10
  %959 = vperm.xlu0 %958, %v432
  %v960 = vpop.permute.xlu0 %959
  %v964 = vperm.slane %v956, 1
  %v965 = vperm.slane %v956, 5
  %v966 = vperm.slane %v957, 1
  %v967 = vperm.slane %v957, 5
  %v972 = vperm.slane %v964, 1
  %v973 = vperm.slane %v965, 1
  %v974 = vperm.slane %v966, 1
  %v975 = vperm.slane %v967, 1
  %v976 = vmul.f32 %v960, %v972
  %v977 = vmul.f32 %v960, %v973
  %v978 = vmul.f32 %v960, %v974
  %v979 = vmul.f32 %v960, %v975
  %v980 = vadd.f32 %v928, %v976
  %v981 = vadd.f32 %v929, %v977
  %v982 = vadd.f32 %v930, %v978
  %v983 = vadd.f32 %v931, %v979
  %984 = vrot.lane.b32.xlu0 %v872, 15
  %v985 = vpop.permute.xlu0 %984
  %986 = vrot.lane.b32.xlu0 %v873, 15
  %v987 = vpop.permute.xlu0 %986
  %988 = vrot.lane.b32.xlu0 %v874, 15
  %v989 = vpop.permute.xlu0 %988
  %990 = vrot.lane.b32.xlu0 %v875, 15
  %v991 = vpop.permute.xlu0 %990
  %v992 = vsel %vm556, %v989, %v991
  %v993 = vsel %vm556, %v987, %v989
  %v994 = vsel %vm556, %v985, %v987
  %v995 = vsel %vm556, %v991, %v985
  %v1000 = vrot.slane %v994, 4
  %v1001 = vrot.slane %v992, 4
  %v1002 = vsel %vm99, %v995, %v1000
  %v1003 = vsel %vm99, %v993, %v1001
  %v1004 = vrot.slane %v1002, 7
  %v1005 = vrot.slane %v1003, 7
  %v1008 = vsel %vm46, %v1004, 0.0
  %v1009 = vsel %vm47, %v1005, 0.0
  %1010 = vset.pattern.permute.xlu0 11
  %1011 = vperm.xlu0 %1010, %v432
  %v1012 = vpop.permute.xlu0 %1011
  %v1016 = vperm.slane %v1008, 1
  %v1017 = vperm.slane %v1008, 5
  %v1018 = vperm.slane %v1009, 1
  %v1019 = vperm.slane %v1009, 5
  %v1024 = vperm.slane %v1016, 1
  %v1025 = vperm.slane %v1017, 1
  %v1026 = vperm.slane %v1018, 1
  %v1027 = vperm.slane %v1019, 1
  %v1028 = vmul.f32 %v1012, %v1024
  %v1029 = vmul.f32 %v1012, %v1025
  %v1030 = vmul.f32 %v1012, %v1026
  %v1031 = vmul.f32 %v1012, %v1027
  %v1032 = vadd.f32 %v980, %v1028
  %v1033 = vadd.f32 %v981, %v1029
  %v1034 = vadd.f32 %v982, %v1030
  %v1035 = vadd.f32 %v983, %v1031
  %1036 = vrot.lane.b32.xlu0 %v872, 1
  %v1037 = vpop.permute.xlu0 %1036
  %1038 = vrot.lane.b32.xlu0 %v873, 1
  %v1039 = vpop.permute.xlu0 %1038
  %1040 = vrot.lane.b32.xlu0 %v874, 1
  %v1041 = vpop.permute.xlu0 %1040
  %1042 = vrot.lane.b32.xlu0 %v875, 1
  %v1043 = vpop.permute.xlu0 %1042
  %v1044 = vsel %vm75, %v1041, %v1043
  %v1045 = vsel %vm75, %v1039, %v1041
  %v1046 = vsel %vm75, %v1037, %v1039
  %v1047 = vsel %vm75, %v1043, %v1037
  %v1052 = vrot.slane %v1046, 4
  %v1053 = vrot.slane %v1044, 4
  %v1054 = vsel %vm99, %v1047, %v1052
  %v1055 = vsel %vm99, %v1045, %v1053
  %v1058 = vsel %vm28, %v1054, 0.0
  %v1059 = vsel %vm29, %v1055, 0.0
  %1060 = vset.pattern.permute.xlu0 12
  %1061 = vperm.xlu0 %1060, %v432
  %v1062 = vpop.permute.xlu0 %1061
  %v1066 = vperm.slane %v1058, 0
  %v1067 = vperm.slane %v1058, 4
  %v1068 = vperm.slane %v1059, 0
  %v1069 = vperm.slane %v1059, 4
  %v1074 = vperm.slane %v1066, 0
  %v1075 = vperm.slane %v1067, 0
  %v1076 = vperm.slane %v1068, 0
  %v1077 = vperm.slane %v1069, 0
  %v1078 = vmul.f32 %v1062, %v1074
  %v1079 = vmul.f32 %v1062, %v1075
  %v1080 = vmul.f32 %v1062, %v1076
  %v1081 = vmul.f32 %v1062, %v1077
  %v1082 = vadd.f32 %v1032, %v1078
  %v1083 = vadd.f32 %v1033, %v1079
  %v1084 = vadd.f32 %v1034, %v1080
  %v1085 = vadd.f32 %v1035, %v1081
  %1086 = vset.pattern.permute.xlu0 13
  %1087 = vperm.xlu0 %1086, %v432
  %v1088 = vpop.permute.xlu0 %1087
  %v1090 = vmul.f32 %v1088, %v872
  %v1091 = vmul.f32 %v1088, %v873
  %v1092 = vmul.f32 %v1088, %v874
  %v1093 = vmul.f32 %v1088, %v875
  %v1094 = vadd.f32 %v1082, %v1090
  %v1095 = vadd.f32 %v1083, %v1091
  %v1096 = vadd.f32 %v1084, %v1092
  %v1097 = vadd.f32 %v1085, %v1093
  %1098 = vrot.lane.b32.xlu0 %v872, 127
  %v1099 = vpop.permute.xlu0 %1098
  %1100 = vrot.lane.b32.xlu0 %v873, 127
  %v1101 = vpop.permute.xlu0 %1100
  %1102 = vrot.lane.b32.xlu0 %v874, 127
  %v1103 = vpop.permute.xlu0 %1102
  %1104 = vrot.lane.b32.xlu0 %v875, 127
  %v1105 = vpop.permute.xlu0 %1104
  %v1106 = vsel %vm88, %v1103, %v1105
  %v1107 = vsel %vm88, %v1101, %v1103
  %v1108 = vsel %vm88, %v1099, %v1101
  %v1109 = vsel %vm88, %v1105, %v1099
  %v1114 = vrot.slane %v1107, 4
  %v1115 = vrot.slane %v1109, 4
  %v1116 = vsel %vm99, %v1108, %v1114
  %v1117 = vsel %vm99, %v1106, %v1115
  %v1120 = vsel %vm38, %v1116, 0.0
  %v1121 = vsel %vm39, %v1117, 0.0
  %1122 = vset.pattern.permute.xlu0 14
  %1123 = vperm.xlu0 %1122, %v432
  %v1124 = vpop.permute.xlu0 %1123
  %v1128 = vperm.slane %v1120, 0
  %v1129 = vperm.slane %v1120, 4
  %v1130 = vperm.slane %v1121, 0
  %v1131 = vperm.slane %v1121, 4
  %v1136 = vperm.slane %v1128, 0
  %v1137 = vperm.slane %v1129, 0
  %v1138 = vperm.slane %v1130, 0
  %v1139 = vperm.slane %v1131, 0
  %v1140 = vmul.f32 %v1124, %v1136
  %v1141 = vmul.f32 %v1124, %v1137
  %v1142 = vmul.f32 %v1124, %v1138
  %v1143 = vmul.f32 %v1124, %v1139
  %v1144 = vadd.f32 %v1094, %v1140
  %v1145 = vadd.f32 %v1095, %v1141
  %v1146 = vadd.f32 %v1096, %v1142
  %v1147 = vadd.f32 %v1097, %v1143
  %1148 = vrot.lane.b32.xlu0 %v872, 113
  %v1149 = vpop.permute.xlu0 %1148
  %1150 = vrot.lane.b32.xlu0 %v873, 113
  %v1151 = vpop.permute.xlu0 %1150
  %1152 = vrot.lane.b32.xlu0 %v874, 113
  %v1153 = vpop.permute.xlu0 %1152
  %1154 = vrot.lane.b32.xlu0 %v875, 113
  %v1155 = vpop.permute.xlu0 %1154
  %v1156 = vsel %vm721, %v1153, %v1155
  %v1157 = vsel %vm721, %v1151, %v1153
  %v1158 = vsel %vm721, %v1149, %v1151
  %v1159 = vsel %vm721, %v1155, %v1149
  %v1164 = vrot.slane %v1157, 4
  %v1165 = vrot.slane %v1159, 4
  %v1166 = vsel %vm99, %v1158, %v1164
  %v1167 = vsel %vm99, %v1156, %v1165
  %v1168 = vrot.slane %v1166, 7
  %v1169 = vrot.slane %v1167, 7
  %v1172 = vsel %vm48, %v1168, 0.0
  %v1173 = vsel %vm49, %v1169, 0.0
  %1174 = vset.pattern.permute.xlu0 15
  %1175 = vperm.xlu0 %1174, %v432
  %v1176 = vpop.permute.xlu0 %1175
  %v1180 = vperm.slane %v1172, 1
  %v1181 = vperm.slane %v1172, 5
  %v1182 = vperm.slane %v1173, 1
  %v1183 = vperm.slane %v1173, 5
  %v1188 = vperm.slane %v1180, 1
  %v1189 = vperm.slane %v1181, 1
  %v1190 = vperm.slane %v1182, 1
  %v1191 = vperm.slane %v1183, 1
  %v1192 = vmul.f32 %v1176, %v1188
  %v1193 = vmul.f32 %v1176, %v1189
  %v1194 = vmul.f32 %v1176, %v1190
  %v1195 = vmul.f32 %v1176, %v1191
  %v1196 = vadd.f32 %v1144, %v1192
  %v1197 = vadd.f32 %v1145, %v1193
  %v1198 = vadd.f32 %v1146, %v1194
  %v1199 = vadd.f32 %v1147, %v1195
  %1200 = vrot.lane.b32.xlu0 %v872, 112
  %v1201 = vpop.permute.xlu0 %1200
  %1202 = vrot.lane.b32.xlu0 %v873, 112
  %v1203 = vpop.permute.xlu0 %1202
  %1204 = vrot.lane.b32.xlu0 %v874, 112
  %v1205 = vpop.permute.xlu0 %1204
  %1206 = vrot.lane.b32.xlu0 %v875, 112
  %v1207 = vpop.permute.xlu0 %1206
  %v1208 = vsel %vm186, %v1205, %v1207
  %v1209 = vsel %vm186, %v1203, %v1205
  %v1210 = vsel %vm186, %v1201, %v1203
  %v1211 = vsel %vm186, %v1207, %v1201
  %v1216 = vrot.slane %v1209, 4
  %v1217 = vrot.slane %v1211, 4
  %v1218 = vsel %vm99, %v1210, %v1216
  %v1219 = vsel %vm99, %v1208, %v1217
  %v1220 = vrot.slane %v1218, 7
  %v1221 = vrot.slane %v1219, 7
  %v1224 = vsel %vm38, %v1220, 0.0
  %v1225 = vsel %vm39, %v1221, 0.0
  %1226 = vset.pattern.permute.xlu0 16
  %1227 = vperm.xlu0 %1226, %v432
  %v1228 = vpop.permute.xlu0 %1227
  %v1232 = vperm.slane %v1224, 1
  %v1233 = vperm.slane %v1224, 5
  %v1234 = vperm.slane %v1225, 1
  %v1235 = vperm.slane %v1225, 5
  %v1240 = vperm.slane %v1232, 1
  %v1241 = vperm.slane %v1233, 1
  %v1242 = vperm.slane %v1234, 1
  %v1243 = vperm.slane %v1235, 1
  %v1244 = vmul.f32 %v1228, %v1240
  %v1245 = vmul.f32 %v1228, %v1241
  %v1246 = vmul.f32 %v1228, %v1242
  %v1247 = vmul.f32 %v1228, %v1243
  %v1248 = vadd.f32 %v1196, %v1244
  %v1249 = vadd.f32 %v1197, %v1245
  %v1250 = vadd.f32 %v1198, %v1246
  %v1251 = vadd.f32 %v1199, %v1247
  %1252 = vrot.lane.b32.xlu0 %v872, 111
  %v1253 = vpop.permute.xlu0 %1252
  %1254 = vrot.lane.b32.xlu0 %v873, 111
  %v1255 = vpop.permute.xlu0 %1254
  %1256 = vrot.lane.b32.xlu0 %v874, 111
  %v1257 = vpop.permute.xlu0 %1256
  %1258 = vrot.lane.b32.xlu0 %v875, 111
  %v1259 = vpop.permute.xlu0 %1258
  %v1260 = vsel %vm826, %v1257, %v1259
  %v1261 = vsel %vm826, %v1255, %v1257
  %v1262 = vsel %vm826, %v1253, %v1255
  %v1263 = vsel %vm826, %v1259, %v1253
  %v1268 = vrot.slane %v1261, 4
  %v1269 = vrot.slane %v1263, 4
  %v1270 = vsel %vm99, %v1262, %v1268
  %v1271 = vsel %vm99, %v1260, %v1269
  %v1272 = vrot.slane %v1270, 7
  %v1273 = vrot.slane %v1271, 7
  %v1276 = vsel %vm50, %v1272, 0.0
  %v1277 = vsel %vm51, %v1273, 0.0
  %1278 = vset.pattern.permute.xlu0 17
  %1279 = vperm.xlu0 %1278, %v432
  %v1280 = vpop.permute.xlu0 %1279
  %v1284 = vperm.slane %v1276, 1
  %v1285 = vperm.slane %v1276, 5
  %v1286 = vperm.slane %v1277, 1
  %v1287 = vperm.slane %v1277, 5
  %v1292 = vperm.slane %v1284, 1
  %v1293 = vperm.slane %v1285, 1
  %v1294 = vperm.slane %v1286, 1
  %v1295 = vperm.slane %v1287, 1
  %v1296 = vmul.f32 %v1280, %v1292
  %v1297 = vmul.f32 %v1280, %v1293
  %v1298 = vmul.f32 %v1280, %v1294
  %v1299 = vmul.f32 %v1280, %v1295
  %v1300 = vadd.f32 %v1248, %v1296
  %v1301 = vadd.f32 %v1249, %v1297
  %v1302 = vadd.f32 %v1250, %v1298
  %v1303 = vadd.f32 %v1251, %v1299
  %v1305 = vperm.slane %v247, 0
  %v1306 = vperm.slane %v247, 1
  %v1307 = vperm.slane %v247, 2
  %v1308 = vperm.slane %v247, 3
  %1313 = vrot.lane.b32.xlu0 %v1305, 17
  %v1314 = vpop.permute.xlu0 %1313
  %1315 = vrot.lane.b32.xlu0 %v1306, 17
  %v1316 = vpop.permute.xlu0 %1315
  %1317 = vrot.lane.b32.xlu0 %v1307, 17
  %v1318 = vpop.permute.xlu0 %1317
  %1319 = vrot.lane.b32.xlu0 %v1308, 17
  %v1320 = vpop.permute.xlu0 %1319
  %v1321 = vsel %vm450, %v1318, %v1320
  %v1322 = vsel %vm450, %v1316, %v1318
  %v1323 = vsel %vm450, %v1314, %v1316
  %v1324 = vsel %vm450, %v1320, %v1314
  %v1329 = vrot.slane %v1323, 4
  %v1330 = vrot.slane %v1321, 4
  %v1331 = vsel %vm99, %v1324, %v1329
  %v1332 = vsel %vm99, %v1322, %v1330
  %v1333 = vrot.slane %v1331, 7
  %v1334 = vrot.slane %v1332, 7
  %v1337 = vsel %vm36, %v1333, 0.0
  %v1338 = vsel %vm37, %v1334, 0.0
  %1339 = vset.pattern.permute.xlu0 18
  %1340 = vperm.xlu0 %1339, %v432
  %v1341 = vpop.permute.xlu0 %1340
  %v1345 = vperm.slane %v1337, 1
  %v1346 = vperm.slane %v1337, 5
  %v1347 = vperm.slane %v1338, 1
  %v1348 = vperm.slane %v1338, 5
  %v1353 = vperm.slane %v1345, 1
  %v1354 = vperm.slane %v1346, 1
  %v1355 = vperm.slane %v1347, 1
  %v1356 = vperm.slane %v1348, 1
  %v1357 = vmul.f32 %v1341, %v1353
  %v1358 = vmul.f32 %v1341, %v1354
  %v1359 = vmul.f32 %v1341, %v1355
  %v1360 = vmul.f32 %v1341, %v1356
  %v1361 = vadd.f32 %v1300, %v1357
  %v1362 = vadd.f32 %v1301, %v1358
  %v1363 = vadd.f32 %v1302, %v1359
  %v1364 = vadd.f32 %v1303, %v1360
  %1365 = vrot.lane.b32.xlu0 %v1305, 16
  %v1366 = vpop.permute.xlu0 %1365
  %1367 = vrot.lane.b32.xlu0 %v1306, 16
  %v1368 = vpop.permute.xlu0 %1367
  %1369 = vrot.lane.b32.xlu0 %v1307, 16
  %v1370 = vpop.permute.xlu0 %1369
  %1371 = vrot.lane.b32.xlu0 %v1308, 16
  %v1372 = vpop.permute.xlu0 %1371
  %v1373 = vsel %vm173, %v1370, %v1372
  %v1374 = vsel %vm173, %v1368, %v1370
  %v1375 = vsel %vm173, %v1366, %v1368
  %v1376 = vsel %vm173, %v1372, %v1366
  %v1381 = vrot.slane %v1375, 4
  %v1382 = vrot.slane %v1373, 4
  %v1383 = vsel %vm99, %v1376, %v1381
  %v1384 = vsel %vm99, %v1374, %v1382
  %v1385 = vrot.slane %v1383, 7
  %v1386 = vrot.slane %v1384, 7
  %v1389 = vsel %vm28, %v1385, 0.0
  %v1390 = vsel %vm29, %v1386, 0.0
  %1391 = vset.pattern.permute.xlu0 19
  %1392 = vperm.xlu0 %1391, %v432
  %v1393 = vpop.permute.xlu0 %1392
  %v1397 = vperm.slane %v1389, 1
  %v1398 = vperm.slane %v1389, 5
  %v1399 = vperm.slane %v1390, 1
  %v1400 = vperm.slane %v1390, 5
  %v1405 = vperm.slane %v1397, 1
  %v1406 = vperm.slane %v1398, 1
  %v1407 = vperm.slane %v1399, 1
  %v1408 = vperm.slane %v1400, 1
  %v1409 = vmul.f32 %v1393, %v1405
  %v1410 = vmul.f32 %v1393, %v1406
  %v1411 = vmul.f32 %v1393, %v1407
  %v1412 = vmul.f32 %v1393, %v1408
  %v1413 = vadd.f32 %v1361, %v1409
  %v1414 = vadd.f32 %v1362, %v1410
  %v1415 = vadd.f32 %v1363, %v1411
  %v1416 = vadd.f32 %v1364, %v1412
  %1417 = vrot.lane.b32.xlu0 %v1305, 15
  %v1418 = vpop.permute.xlu0 %1417
  %1419 = vrot.lane.b32.xlu0 %v1306, 15
  %v1420 = vpop.permute.xlu0 %1419
  %1421 = vrot.lane.b32.xlu0 %v1307, 15
  %v1422 = vpop.permute.xlu0 %1421
  %1423 = vrot.lane.b32.xlu0 %v1308, 15
  %v1424 = vpop.permute.xlu0 %1423
  %v1425 = vsel %vm556, %v1422, %v1424
  %v1426 = vsel %vm556, %v1420, %v1422
  %v1427 = vsel %vm556, %v1418, %v1420
  %v1428 = vsel %vm556, %v1424, %v1418
  %v1433 = vrot.slane %v1427, 4
  %v1434 = vrot.slane %v1425, 4
  %v1435 = vsel %vm99, %v1428, %v1433
  %v1436 = vsel %vm99, %v1426, %v1434
  %v1437 = vrot.slane %v1435, 7
  %v1438 = vrot.slane %v1436, 7
  %v1441 = vsel %vm46, %v1437, 0.0
  %v1442 = vsel %vm47, %v1438, 0.0
  %1443 = vset.pattern.permute.xlu0 20
  %1444 = vperm.xlu0 %1443, %v432
  %v1445 = vpop.permute.xlu0 %1444
  %v1449 = vperm.slane %v1441, 1
  %v1450 = vperm.slane %v1441, 5
  %v1451 = vperm.slane %v1442, 1
  %v1452 = vperm.slane %v1442, 5
  %v1457 = vperm.slane %v1449, 1
  %v1458 = vperm.slane %v1450, 1
  %v1459 = vperm.slane %v1451, 1
  %v1460 = vperm.slane %v1452, 1
  %v1461 = vmul.f32 %v1445, %v1457
  %v1462 = vmul.f32 %v1445, %v1458
  %v1463 = vmul.f32 %v1445, %v1459
  %v1464 = vmul.f32 %v1445, %v1460
  %v1465 = vadd.f32 %v1413, %v1461
  %v1466 = vadd.f32 %v1414, %v1462
  %v1467 = vadd.f32 %v1415, %v1463
  %v1468 = vadd.f32 %v1416, %v1464
  %1469 = vrot.lane.b32.xlu0 %v1305, 1
  %v1470 = vpop.permute.xlu0 %1469
  %1471 = vrot.lane.b32.xlu0 %v1306, 1
  %v1472 = vpop.permute.xlu0 %1471
  %1473 = vrot.lane.b32.xlu0 %v1307, 1
  %v1474 = vpop.permute.xlu0 %1473
  %1475 = vrot.lane.b32.xlu0 %v1308, 1
  %v1476 = vpop.permute.xlu0 %1475
  %v1477 = vsel %vm75, %v1474, %v1476
  %v1478 = vsel %vm75, %v1472, %v1474
  %v1479 = vsel %vm75, %v1470, %v1472
  %v1480 = vsel %vm75, %v1476, %v1470
  %v1485 = vrot.slane %v1479, 4
  %v1486 = vrot.slane %v1477, 4
  %v1487 = vsel %vm99, %v1480, %v1485
  %v1488 = vsel %vm99, %v1478, %v1486
  %v1491 = vsel %vm28, %v1487, 0.0
  %v1492 = vsel %vm29, %v1488, 0.0
  %1493 = vset.pattern.permute.xlu0 21
  %1494 = vperm.xlu0 %1493, %v432
  %v1495 = vpop.permute.xlu0 %1494
  %v1499 = vperm.slane %v1491, 0
  %v1500 = vperm.slane %v1491, 4
  %v1501 = vperm.slane %v1492, 0
  %v1502 = vperm.slane %v1492, 4
  %v1507 = vperm.slane %v1499, 0
  %v1508 = vperm.slane %v1500, 0
  %v1509 = vperm.slane %v1501, 0
  %v1510 = vperm.slane %v1502, 0
  %v1511 = vmul.f32 %v1495, %v1507
  %v1512 = vmul.f32 %v1495, %v1508
  %v1513 = vmul.f32 %v1495, %v1509
  %v1514 = vmul.f32 %v1495, %v1510
  %v1515 = vadd.f32 %v1465, %v1511
  %v1516 = vadd.f32 %v1466, %v1512
  %v1517 = vadd.f32 %v1467, %v1513
  %v1518 = vadd.f32 %v1468, %v1514
  %1519 = vset.pattern.permute.xlu0 22
  %1520 = vperm.xlu0 %1519, %v432
  %v1521 = vpop.permute.xlu0 %1520
  %v1523 = vmul.f32 %v1521, %v1305
  %v1524 = vmul.f32 %v1521, %v1306
  %v1525 = vmul.f32 %v1521, %v1307
  %v1526 = vmul.f32 %v1521, %v1308
  %v1527 = vadd.f32 %v1515, %v1523
  %v1528 = vadd.f32 %v1516, %v1524
  %v1529 = vadd.f32 %v1517, %v1525
  %v1530 = vadd.f32 %v1518, %v1526
  %1531 = vrot.lane.b32.xlu0 %v1305, 127
  %v1532 = vpop.permute.xlu0 %1531
  %1533 = vrot.lane.b32.xlu0 %v1306, 127
  %v1534 = vpop.permute.xlu0 %1533
  %1535 = vrot.lane.b32.xlu0 %v1307, 127
  %v1536 = vpop.permute.xlu0 %1535
  %1537 = vrot.lane.b32.xlu0 %v1308, 127
  %v1538 = vpop.permute.xlu0 %1537
  %v1539 = vsel %vm88, %v1536, %v1538
  %v1540 = vsel %vm88, %v1534, %v1536
  %v1541 = vsel %vm88, %v1532, %v1534
  %v1542 = vsel %vm88, %v1538, %v1532
  %v1547 = vrot.slane %v1540, 4
  %v1548 = vrot.slane %v1542, 4
  %v1549 = vsel %vm99, %v1541, %v1547
  %v1550 = vsel %vm99, %v1539, %v1548
  %v1553 = vsel %vm38, %v1549, 0.0
  %v1554 = vsel %vm39, %v1550, 0.0
  %1555 = vset.pattern.permute.xlu0 23
  %1556 = vperm.xlu0 %1555, %v432
  %v1557 = vpop.permute.xlu0 %1556
  %v1561 = vperm.slane %v1553, 0
  %v1562 = vperm.slane %v1553, 4
  %v1563 = vperm.slane %v1554, 0
  %v1564 = vperm.slane %v1554, 4
  %v1569 = vperm.slane %v1561, 0
  %v1570 = vperm.slane %v1562, 0
  %v1571 = vperm.slane %v1563, 0
  %v1572 = vperm.slane %v1564, 0
  %v1573 = vmul.f32 %v1557, %v1569
  %v1574 = vmul.f32 %v1557, %v1570
  %v1575 = vmul.f32 %v1557, %v1571
  %v1576 = vmul.f32 %v1557, %v1572
  %v1577 = vadd.f32 %v1527, %v1573
  %v1578 = vadd.f32 %v1528, %v1574
  %v1579 = vadd.f32 %v1529, %v1575
  %v1580 = vadd.f32 %v1530, %v1576
  %1581 = vrot.lane.b32.xlu0 %v1305, 113
  %v1582 = vpop.permute.xlu0 %1581
  %1583 = vrot.lane.b32.xlu0 %v1306, 113
  %v1584 = vpop.permute.xlu0 %1583
  %1585 = vrot.lane.b32.xlu0 %v1307, 113
  %v1586 = vpop.permute.xlu0 %1585
  %1587 = vrot.lane.b32.xlu0 %v1308, 113
  %v1588 = vpop.permute.xlu0 %1587
  %v1589 = vsel %vm721, %v1586, %v1588
  %v1590 = vsel %vm721, %v1584, %v1586
  %v1591 = vsel %vm721, %v1582, %v1584
  %v1592 = vsel %vm721, %v1588, %v1582
  %v1597 = vrot.slane %v1590, 4
  %v1598 = vrot.slane %v1592, 4
  %v1599 = vsel %vm99, %v1591, %v1597
  %v1600 = vsel %vm99, %v1589, %v1598
  %v1601 = vrot.slane %v1599, 7
  %v1602 = vrot.slane %v1600, 7
  %v1605 = vsel %vm48, %v1601, 0.0
  %v1606 = vsel %vm49, %v1602, 0.0
  %1607 = vset.pattern.permute.xlu0 24
  %1608 = vperm.xlu0 %1607, %v432
  %v1609 = vpop.permute.xlu0 %1608
  %v1613 = vperm.slane %v1605, 1
  %v1614 = vperm.slane %v1605, 5
  %v1615 = vperm.slane %v1606, 1
  %v1616 = vperm.slane %v1606, 5
  %v1621 = vperm.slane %v1613, 1
  %v1622 = vperm.slane %v1614, 1
  %v1623 = vperm.slane %v1615, 1
  %v1624 = vperm.slane %v1616, 1
  %v1625 = vmul.f32 %v1609, %v1621
  %v1626 = vmul.f32 %v1609, %v1622
  %v1627 = vmul.f32 %v1609, %v1623
  %v1628 = vmul.f32 %v1609, %v1624
  %v1629 = vadd.f32 %v1577, %v1625
  %v1630 = vadd.f32 %v1578, %v1626
  %v1631 = vadd.f32 %v1579, %v1627
  %v1632 = vadd.f32 %v1580, %v1628
  %1633 = vrot.lane.b32.xlu0 %v1305, 112
  %v1634 = vpop.permute.xlu0 %1633
  %1635 = vrot.lane.b32.xlu0 %v1306, 112
  %v1636 = vpop.permute.xlu0 %1635
  %1637 = vrot.lane.b32.xlu0 %v1307, 112
  %v1638 = vpop.permute.xlu0 %1637
  %1639 = vrot.lane.b32.xlu0 %v1308, 112
  %v1640 = vpop.permute.xlu0 %1639
  %v1641 = vsel %vm186, %v1638, %v1640
  %v1642 = vsel %vm186, %v1636, %v1638
  %v1643 = vsel %vm186, %v1634, %v1636
  %v1644 = vsel %vm186, %v1640, %v1634
  %v1649 = vrot.slane %v1642, 4
  %v1650 = vrot.slane %v1644, 4
  %v1651 = vsel %vm99, %v1643, %v1649
  %v1652 = vsel %vm99, %v1641, %v1650
  %v1653 = vrot.slane %v1651, 7
  %v1654 = vrot.slane %v1652, 7
  %v1657 = vsel %vm38, %v1653, 0.0
  %v1658 = vsel %vm39, %v1654, 0.0
  %1659 = vset.pattern.permute.xlu0 25
  %1660 = vperm.xlu0 %1659, %v432
  %v1661 = vpop.permute.xlu0 %1660
  %v1665 = vperm.slane %v1657, 1
  %v1666 = vperm.slane %v1657, 5
  %v1667 = vperm.slane %v1658, 1
  %v1668 = vperm.slane %v1658, 5
  %v1673 = vperm.slane %v1665, 1
  %v1674 = vperm.slane %v1666, 1
  %v1675 = vperm.slane %v1667, 1
  %v1676 = vperm.slane %v1668, 1
  %v1677 = vmul.f32 %v1661, %v1673
  %v1678 = vmul.f32 %v1661, %v1674
  %v1679 = vmul.f32 %v1661, %v1675
  %v1680 = vmul.f32 %v1661, %v1676
  %v1681 = vadd.f32 %v1629, %v1677
  %v1682 = vadd.f32 %v1630, %v1678
  %v1683 = vadd.f32 %v1631, %v1679
  %v1684 = vadd.f32 %v1632, %v1680
  %1685 = vrot.lane.b32.xlu0 %v1305, 111
  %v1686 = vpop.permute.xlu0 %1685
  %1687 = vrot.lane.b32.xlu0 %v1306, 111
  %v1688 = vpop.permute.xlu0 %1687
  %1689 = vrot.lane.b32.xlu0 %v1307, 111
  %v1690 = vpop.permute.xlu0 %1689
  %1691 = vrot.lane.b32.xlu0 %v1308, 111
  %v1692 = vpop.permute.xlu0 %1691
  %v1693 = vsel %vm826, %v1690, %v1692
  %v1694 = vsel %vm826, %v1688, %v1690
  %v1695 = vsel %vm826, %v1686, %v1688
  %v1696 = vsel %vm826, %v1692, %v1686
  %v1701 = vrot.slane %v1694, 4
  %v1702 = vrot.slane %v1696, 4
  %v1703 = vsel %vm99, %v1695, %v1701
  %v1704 = vsel %vm99, %v1693, %v1702
  %v1705 = vrot.slane %v1703, 7
  %v1706 = vrot.slane %v1704, 7
  %v1709 = vsel %vm50, %v1705, 0.0
  %v1710 = vsel %vm51, %v1706, 0.0
  %1711 = vset.pattern.permute.xlu0 26
  %1712 = vperm.xlu0 %1711, %v432
  %v1713 = vpop.permute.xlu0 %1712
  %v1717 = vperm.slane %v1709, 1
  %v1718 = vperm.slane %v1709, 5
  %v1719 = vperm.slane %v1710, 1
  %v1720 = vperm.slane %v1710, 5
  %v1725 = vperm.slane %v1717, 1
  %v1726 = vperm.slane %v1718, 1
  %v1727 = vperm.slane %v1719, 1
  %v1728 = vperm.slane %v1720, 1
  %v1729 = vmul.f32 %v1713, %v1725
  %v1730 = vmul.f32 %v1713, %v1726
  %v1731 = vmul.f32 %v1713, %v1727
  %v1732 = vmul.f32 %v1713, %v1728
  %v1733 = vadd.f32 %v1681, %v1729
  %v1734 = vadd.f32 %v1682, %v1730
  %v1735 = vadd.f32 %v1683, %v1731
  %v1736 = vadd.f32 %v1684, %v1732
  %v1738 = vperm.slane %v431, 0
  %v1739 = vperm.slane %v431, 1
  %v1740 = vperm.slane %v431, 2
  %v1741 = vperm.slane %v431, 3
  %1746 = vrot.lane.b32.xlu0 %v1738, 17
  %v1747 = vpop.permute.xlu0 %1746
  %1748 = vrot.lane.b32.xlu0 %v1739, 17
  %v1749 = vpop.permute.xlu0 %1748
  %1750 = vrot.lane.b32.xlu0 %v1740, 17
  %v1751 = vpop.permute.xlu0 %1750
  %1752 = vrot.lane.b32.xlu0 %v1741, 17
  %v1753 = vpop.permute.xlu0 %1752
  %v1754 = vsel %vm450, %v1751, %v1753
  %v1755 = vsel %vm450, %v1749, %v1751
  %v1756 = vsel %vm450, %v1747, %v1749
  %v1757 = vsel %vm450, %v1753, %v1747
  %v1762 = vrot.slane %v1756, 4
  %v1763 = vrot.slane %v1754, 4
  %v1764 = vsel %vm99, %v1757, %v1762
  %v1765 = vsel %vm99, %v1755, %v1763
  %v1766 = vrot.slane %v1764, 7
  %v1767 = vrot.slane %v1765, 7
  %v1770 = vsel %vm36, %v1766, 0.0
  %v1771 = vsel %vm37, %v1767, 0.0
  %1772 = vset.pattern.permute.xlu0 27
  %1773 = vperm.xlu0 %1772, %v432
  %v1774 = vpop.permute.xlu0 %1773
  %v1778 = vperm.slane %v1770, 1
  %v1779 = vperm.slane %v1770, 5
  %v1780 = vperm.slane %v1771, 1
  %v1781 = vperm.slane %v1771, 5
  %v1786 = vperm.slane %v1778, 1
  %v1787 = vperm.slane %v1779, 1
  %v1788 = vperm.slane %v1780, 1
  %v1789 = vperm.slane %v1781, 1
  %v1790 = vmul.f32 %v1774, %v1786
  %v1791 = vmul.f32 %v1774, %v1787
  %v1792 = vmul.f32 %v1774, %v1788
  %v1793 = vmul.f32 %v1774, %v1789
  %v1794 = vadd.f32 %v1733, %v1790
  %v1795 = vadd.f32 %v1734, %v1791
  %v1796 = vadd.f32 %v1735, %v1792
  %v1797 = vadd.f32 %v1736, %v1793
  %1798 = vrot.lane.b32.xlu0 %v1738, 16
  %v1799 = vpop.permute.xlu0 %1798
  %1800 = vrot.lane.b32.xlu0 %v1739, 16
  %v1801 = vpop.permute.xlu0 %1800
  %1802 = vrot.lane.b32.xlu0 %v1740, 16
  %v1803 = vpop.permute.xlu0 %1802
  %1804 = vrot.lane.b32.xlu0 %v1741, 16
  %v1805 = vpop.permute.xlu0 %1804
  %v1806 = vsel %vm173, %v1803, %v1805
  %v1807 = vsel %vm173, %v1801, %v1803
  %v1808 = vsel %vm173, %v1799, %v1801
  %v1809 = vsel %vm173, %v1805, %v1799
  %v1814 = vrot.slane %v1808, 4
  %v1815 = vrot.slane %v1806, 4
  %v1816 = vsel %vm99, %v1809, %v1814
  %v1817 = vsel %vm99, %v1807, %v1815
  %v1818 = vrot.slane %v1816, 7
  %v1819 = vrot.slane %v1817, 7
  %v1822 = vsel %vm28, %v1818, 0.0
  %v1823 = vsel %vm29, %v1819, 0.0
  %1824 = vset.pattern.permute.xlu0 28
  %1825 = vperm.xlu0 %1824, %v432
  %v1826 = vpop.permute.xlu0 %1825
  %v1830 = vperm.slane %v1822, 1
  %v1831 = vperm.slane %v1822, 5
  %v1832 = vperm.slane %v1823, 1
  %v1833 = vperm.slane %v1823, 5
  %v1838 = vperm.slane %v1830, 1
  %v1839 = vperm.slane %v1831, 1
  %v1840 = vperm.slane %v1832, 1
  %v1841 = vperm.slane %v1833, 1
  %v1842 = vmul.f32 %v1826, %v1838
  %v1843 = vmul.f32 %v1826, %v1839
  %v1844 = vmul.f32 %v1826, %v1840
  %v1845 = vmul.f32 %v1826, %v1841
  %v1846 = vadd.f32 %v1794, %v1842
  %v1847 = vadd.f32 %v1795, %v1843
  %v1848 = vadd.f32 %v1796, %v1844
  %v1849 = vadd.f32 %v1797, %v1845
  %1850 = vrot.lane.b32.xlu0 %v1738, 15
  %v1851 = vpop.permute.xlu0 %1850
  %1852 = vrot.lane.b32.xlu0 %v1739, 15
  %v1853 = vpop.permute.xlu0 %1852
  %1854 = vrot.lane.b32.xlu0 %v1740, 15
  %v1855 = vpop.permute.xlu0 %1854
  %1856 = vrot.lane.b32.xlu0 %v1741, 15
  %v1857 = vpop.permute.xlu0 %1856
  %v1858 = vsel %vm556, %v1855, %v1857
  %v1859 = vsel %vm556, %v1853, %v1855
  %v1860 = vsel %vm556, %v1851, %v1853
  %v1861 = vsel %vm556, %v1857, %v1851
  %v1866 = vrot.slane %v1860, 4
  %v1867 = vrot.slane %v1858, 4
  %v1868 = vsel %vm99, %v1861, %v1866
  %v1869 = vsel %vm99, %v1859, %v1867
  %v1870 = vrot.slane %v1868, 7
  %v1871 = vrot.slane %v1869, 7
  %v1874 = vsel %vm46, %v1870, 0.0
  %v1875 = vsel %vm47, %v1871, 0.0
  %1876 = vset.pattern.permute.xlu0 29
  %1877 = vperm.xlu0 %1876, %v432
  %v1878 = vpop.permute.xlu0 %1877
  %v1882 = vperm.slane %v1874, 1
  %v1883 = vperm.slane %v1874, 5
  %v1884 = vperm.slane %v1875, 1
  %v1885 = vperm.slane %v1875, 5
  %v1890 = vperm.slane %v1882, 1
  %v1891 = vperm.slane %v1883, 1
  %v1892 = vperm.slane %v1884, 1
  %v1893 = vperm.slane %v1885, 1
  %v1894 = vmul.f32 %v1878, %v1890
  %v1895 = vmul.f32 %v1878, %v1891
  %v1896 = vmul.f32 %v1878, %v1892
  %v1897 = vmul.f32 %v1878, %v1893
  %v1898 = vadd.f32 %v1846, %v1894
  %v1899 = vadd.f32 %v1847, %v1895
  %v1900 = vadd.f32 %v1848, %v1896
  %v1901 = vadd.f32 %v1849, %v1897
  %1902 = vrot.lane.b32.xlu0 %v1738, 1
  %v1903 = vpop.permute.xlu0 %1902
  %1904 = vrot.lane.b32.xlu0 %v1739, 1
  %v1905 = vpop.permute.xlu0 %1904
  %1906 = vrot.lane.b32.xlu0 %v1740, 1
  %v1907 = vpop.permute.xlu0 %1906
  %1908 = vrot.lane.b32.xlu0 %v1741, 1
  %v1909 = vpop.permute.xlu0 %1908
  %v1910 = vsel %vm75, %v1907, %v1909
  %v1911 = vsel %vm75, %v1905, %v1907
  %v1912 = vsel %vm75, %v1903, %v1905
  %v1913 = vsel %vm75, %v1909, %v1903
  %v1918 = vrot.slane %v1912, 4
  %v1919 = vrot.slane %v1910, 4
  %v1920 = vsel %vm99, %v1913, %v1918
  %v1921 = vsel %vm99, %v1911, %v1919
  %v1924 = vsel %vm28, %v1920, 0.0
  %v1925 = vsel %vm29, %v1921, 0.0
  %1926 = vset.pattern.permute.xlu0 30
  %1927 = vperm.xlu0 %1926, %v432
  %v1928 = vpop.permute.xlu0 %1927
  %v1932 = vperm.slane %v1924, 0
  %v1933 = vperm.slane %v1924, 4
  %v1934 = vperm.slane %v1925, 0
  %v1935 = vperm.slane %v1925, 4
  %v1940 = vperm.slane %v1932, 0
  %v1941 = vperm.slane %v1933, 0
  %v1942 = vperm.slane %v1934, 0
  %v1943 = vperm.slane %v1935, 0
  %v1944 = vmul.f32 %v1928, %v1940
  %v1945 = vmul.f32 %v1928, %v1941
  %v1946 = vmul.f32 %v1928, %v1942
  %v1947 = vmul.f32 %v1928, %v1943
  %v1948 = vadd.f32 %v1898, %v1944
  %v1949 = vadd.f32 %v1899, %v1945
  %v1950 = vadd.f32 %v1900, %v1946
  %v1951 = vadd.f32 %v1901, %v1947
  %1952 = vset.pattern.permute.xlu0 31
  %1953 = vperm.xlu0 %1952, %v432
  %v1954 = vpop.permute.xlu0 %1953
  %v1956 = vmul.f32 %v1954, %v1738
  %v1957 = vmul.f32 %v1954, %v1739
  %v1958 = vmul.f32 %v1954, %v1740
  %v1959 = vmul.f32 %v1954, %v1741
  %v1960 = vadd.f32 %v1948, %v1956
  %v1961 = vadd.f32 %v1949, %v1957
  %v1962 = vadd.f32 %v1950, %v1958
  %v1963 = vadd.f32 %v1951, %v1959
  %1964 = vrot.lane.b32.xlu0 %v1738, 127
  %v1965 = vpop.permute.xlu0 %1964
  %1966 = vrot.lane.b32.xlu0 %v1739, 127
  %v1967 = vpop.permute.xlu0 %1966
  %1968 = vrot.lane.b32.xlu0 %v1740, 127
  %v1969 = vpop.permute.xlu0 %1968
  %1970 = vrot.lane.b32.xlu0 %v1741, 127
  %v1971 = vpop.permute.xlu0 %1970
  %v1972 = vsel %vm88, %v1969, %v1971
  %v1973 = vsel %vm88, %v1967, %v1969
  %v1974 = vsel %vm88, %v1965, %v1967
  %v1975 = vsel %vm88, %v1971, %v1965
  %v1980 = vrot.slane %v1973, 4
  %v1981 = vrot.slane %v1975, 4
  %v1982 = vsel %vm99, %v1974, %v1980
  %v1983 = vsel %vm99, %v1972, %v1981
  %v1986 = vsel %vm38, %v1982, 0.0
  %v1987 = vsel %vm39, %v1983, 0.0
  %1988 = vset.pattern.permute.xlu0 32
  %1989 = vperm.xlu0 %1988, %v432
  %v1990 = vpop.permute.xlu0 %1989
  %v1994 = vperm.slane %v1986, 0
  %v1995 = vperm.slane %v1986, 4
  %v1996 = vperm.slane %v1987, 0
  %v1997 = vperm.slane %v1987, 4
  %v2002 = vperm.slane %v1994, 0
  %v2003 = vperm.slane %v1995, 0
  %v2004 = vperm.slane %v1996, 0
  %v2005 = vperm.slane %v1997, 0
  %v2006 = vmul.f32 %v1990, %v2002
  %v2007 = vmul.f32 %v1990, %v2003
  %v2008 = vmul.f32 %v1990, %v2004
  %v2009 = vmul.f32 %v1990, %v2005
  %v2010 = vadd.f32 %v1960, %v2006
  %v2011 = vadd.f32 %v1961, %v2007
  %v2012 = vadd.f32 %v1962, %v2008
  %v2013 = vadd.f32 %v1963, %v2009
  %2014 = vrot.lane.b32.xlu0 %v1738, 113
  %v2015 = vpop.permute.xlu0 %2014
  %2016 = vrot.lane.b32.xlu0 %v1739, 113
  %v2017 = vpop.permute.xlu0 %2016
  %2018 = vrot.lane.b32.xlu0 %v1740, 113
  %v2019 = vpop.permute.xlu0 %2018
  %2020 = vrot.lane.b32.xlu0 %v1741, 113
  %v2021 = vpop.permute.xlu0 %2020
  %v2022 = vsel %vm721, %v2019, %v2021
  %v2023 = vsel %vm721, %v2017, %v2019
  %v2024 = vsel %vm721, %v2015, %v2017
  %v2025 = vsel %vm721, %v2021, %v2015
  %v2030 = vrot.slane %v2023, 4
  %v2031 = vrot.slane %v2025, 4
  %v2032 = vsel %vm99, %v2024, %v2030
  %v2033 = vsel %vm99, %v2022, %v2031
  %v2034 = vrot.slane %v2032, 7
  %v2035 = vrot.slane %v2033, 7
  %v2038 = vsel %vm48, %v2034, 0.0
  %v2039 = vsel %vm49, %v2035, 0.0
  %2040 = vset.pattern.permute.xlu0 33
  %2041 = vperm.xlu0 %2040, %v432
  %v2042 = vpop.permute.xlu0 %2041
  %v2046 = vperm.slane %v2038, 1
  %v2047 = vperm.slane %v2038, 5
  %v2048 = vperm.slane %v2039, 1
  %v2049 = vperm.slane %v2039, 5
  %v2054 = vperm.slane %v2046, 1
  %v2055 = vperm.slane %v2047, 1
  %v2056 = vperm.slane %v2048, 1
  %v2057 = vperm.slane %v2049, 1
  %v2058 = vmul.f32 %v2042, %v2054
  %v2059 = vmul.f32 %v2042, %v2055
  %v2060 = vmul.f32 %v2042, %v2056
  %v2061 = vmul.f32 %v2042, %v2057
  %v2062 = vadd.f32 %v2010, %v2058
  %v2063 = vadd.f32 %v2011, %v2059
  %v2064 = vadd.f32 %v2012, %v2060
  %v2065 = vadd.f32 %v2013, %v2061
  %2066 = vrot.lane.b32.xlu0 %v1738, 112
  %v2067 = vpop.permute.xlu0 %2066
  %2068 = vrot.lane.b32.xlu0 %v1739, 112
  %v2069 = vpop.permute.xlu0 %2068
  %2070 = vrot.lane.b32.xlu0 %v1740, 112
  %v2071 = vpop.permute.xlu0 %2070
  %2072 = vrot.lane.b32.xlu0 %v1741, 112
  %v2073 = vpop.permute.xlu0 %2072
  %v2074 = vsel %vm186, %v2071, %v2073
  %v2075 = vsel %vm186, %v2069, %v2071
  %v2076 = vsel %vm186, %v2067, %v2069
  %v2077 = vsel %vm186, %v2073, %v2067
  %v2082 = vrot.slane %v2075, 4
  %v2083 = vrot.slane %v2077, 4
  %v2084 = vsel %vm99, %v2076, %v2082
  %v2085 = vsel %vm99, %v2074, %v2083
  %v2086 = vrot.slane %v2084, 7
  %v2087 = vrot.slane %v2085, 7
  %v2090 = vsel %vm38, %v2086, 0.0
  %v2091 = vsel %vm39, %v2087, 0.0
  %2092 = vset.pattern.permute.xlu0 34
  %2093 = vperm.xlu0 %2092, %v432
  %v2094 = vpop.permute.xlu0 %2093
  %v2098 = vperm.slane %v2090, 1
  %v2099 = vperm.slane %v2090, 5
  %v2100 = vperm.slane %v2091, 1
  %v2101 = vperm.slane %v2091, 5
  %v2106 = vperm.slane %v2098, 1
  %v2107 = vperm.slane %v2099, 1
  %v2108 = vperm.slane %v2100, 1
  %v2109 = vperm.slane %v2101, 1
  %v2110 = vmul.f32 %v2094, %v2106
  %v2111 = vmul.f32 %v2094, %v2107
  %v2112 = vmul.f32 %v2094, %v2108
  %v2113 = vmul.f32 %v2094, %v2109
  %v2114 = vadd.f32 %v2062, %v2110
  %v2115 = vadd.f32 %v2063, %v2111
  %v2116 = vadd.f32 %v2064, %v2112
  %v2117 = vadd.f32 %v2065, %v2113
  %2118 = vrot.lane.b32.xlu0 %v1738, 111
  %v2119 = vpop.permute.xlu0 %2118
  %2120 = vrot.lane.b32.xlu0 %v1739, 111
  %v2121 = vpop.permute.xlu0 %2120
  %2122 = vrot.lane.b32.xlu0 %v1740, 111
  %v2123 = vpop.permute.xlu0 %2122
  %2124 = vrot.lane.b32.xlu0 %v1741, 111
  %v2125 = vpop.permute.xlu0 %2124
  %v2126 = vsel %vm826, %v2123, %v2125
  %v2127 = vsel %vm826, %v2121, %v2123
  %v2128 = vsel %vm826, %v2119, %v2121
  %v2129 = vsel %vm826, %v2125, %v2119
  %v2134 = vrot.slane %v2127, 4
  %v2135 = vrot.slane %v2129, 4
  %v2136 = vsel %vm99, %v2128, %v2134
  %v2137 = vsel %vm99, %v2126, %v2135
  %v2138 = vrot.slane %v2136, 7
  %v2139 = vrot.slane %v2137, 7
  %v2142 = vsel %vm50, %v2138, 0.0
  %v2143 = vsel %vm51, %v2139, 0.0
  %2144 = vset.pattern.permute.xlu0 35
  %2145 = vperm.xlu0 %2144, %v432
  %v2146 = vpop.permute.xlu0 %2145
  %v2150 = vperm.slane %v2142, 1
  %v2151 = vperm.slane %v2142, 5
  %v2152 = vperm.slane %v2143, 1
  %v2153 = vperm.slane %v2143, 5
  %v2158 = vperm.slane %v2150, 1
  %v2159 = vperm.slane %v2151, 1
  %v2160 = vperm.slane %v2152, 1
  %v2161 = vperm.slane %v2153, 1
  %v2162 = vmul.f32 %v2146, %v2158
  %v2163 = vmul.f32 %v2146, %v2159
  %v2164 = vmul.f32 %v2146, %v2160
  %v2165 = vmul.f32 %v2146, %v2161
  %v2166 = vadd.f32 %v2114, %v2162
  %v2167 = vadd.f32 %v2115, %v2163
  %v2168 = vadd.f32 %v2116, %v2164
  %v2169 = vadd.f32 %v2117, %v2165
  %v2170 = vmax.f32 %v2166, 0.0
  %v2171 = vmax.f32 %v2167, 0.0
  %v2172 = vmax.f32 %v2168, 0.0
  %v2173 = vmax.f32 %v2169, 0.0
  %v2174 = vld [vmem:[%s4] sm:$0xf]
  %2175 = vrot.lane.b32.xlu0 %v2170, 17
  %v2176 = vpop.permute.xlu0 %2175
  %2177 = vrot.lane.b32.xlu0 %v2171, 17
  %v2178 = vpop.permute.xlu0 %2177
  %2179 = vrot.lane.b32.xlu0 %v2172, 17
  %v2180 = vpop.permute.xlu0 %2179
  %2181 = vrot.lane.b32.xlu0 %v2173, 17
  %v2182 = vpop.permute.xlu0 %2181
  %v2183 = vsel %vm450, %v2180, %v2182
  %v2184 = vsel %vm450, %v2178, %v2180
  %v2185 = vsel %vm450, %v2176, %v2178
  %v2186 = vsel %vm450, %v2182, %v2176
  %v2191 = vrot.slane %v2185, 4
  %v2192 = vrot.slane %v2183, 4
  %v2193 = vsel %vm99, %v2186, %v2191
  %v2194 = vsel %vm99, %v2184, %v2192
  %v2195 = vrot.slane %v2193, 7
  %v2196 = vrot.slane %v2194, 7
  %v2199 = vsel %vm36, %v2195, 0.0
  %v2200 = vsel %vm37, %v2196, 0.0
  %2202 = vset.pattern.permute.xlu0 0
  %2203 = vperm.xlu0 %2202, %v2174
  %v2204 = vpop.permute.xlu0 %2203
  %v2208 = vperm.slane %v2199, 1
  %v2209 = vperm.slane %v2199, 5
  %v2210 = vperm.slane %v2200, 1
  %v2211 = vperm.slane %v2200, 5
  %v2216 = vperm.slane %v2208, 1
  %v2217 = vperm.slane %v2209, 1
  %v2218 = vperm.slane %v2210, 1
  %v2219 = vperm.slane %v2211, 1
  %v2220 = vmul.f32 %v2204, %v2216
  %v2221 = vmul.f32 %v2204, %v2217
  %v2222 = vmul.f32 %v2204, %v2218
  %v2223 = vmul.f32 %v2204, %v2219
  %v2224 = vadd.f32 %v2220, 0.0
  %v2225 = vadd.f32 %v2221, 0.0
  %v2226 = vadd.f32 %v2222, 0.0
  %v2227 = vadd.f32 %v2223, 0.0
  %2228 = vrot.lane.b32.xlu0 %v2170, 16
  %v2229 = vpop.permute.xlu0 %2228
  %2230 = vrot.lane.b32.xlu0 %v2171, 16
  %v2231 = vpop.permute.xlu0 %2230
  %2232 = vrot.lane.b32.xlu0 %v2172, 16
  %v2233 = vpop.permute.xlu0 %2232
  %2234 = vrot.lane.b32.xlu0 %v2173, 16
  %v2235 = vpop.permute.xlu0 %2234
  %v2236 = vsel %vm173, %v2233, %v2235
  %v2237 = vsel %vm173, %v2231, %v2233
  %v2238 = vsel %vm173, %v2229, %v2231
  %v2239 = vsel %vm173, %v2235, %v2229
  %v2244 = vrot.slane %v2238, 4
  %v2245 = vrot.slane %v2236, 4
  %v2246 = vsel %vm99, %v2239, %v2244
  %v2247 = vsel %vm99, %v2237, %v2245
  %v2248 = vrot.slane %v2246, 7
  %v2249 = vrot.slane %v2247, 7
  %v2252 = vsel %vm28, %v2248, 0.0
  %v2253 = vsel %vm29, %v2249, 0.0
  %2254 = vset.pattern.permute.xlu0 1
  %2255 = vperm.xlu0 %2254, %v2174
  %v2256 = vpop.permute.xlu0 %2255
  %v2260 = vperm.slane %v2252, 1
  %v2261 = vperm.slane %v2252, 5
  %v2262 = vperm.slane %v2253, 1
  %v2263 = vperm.slane %v2253, 5
  %v2268 = vperm.slane %v2260, 1
  %v2269 = vperm.slane %v2261, 1
  %v2270 = vperm.slane %v2262, 1
  %v2271 = vperm.slane %v2263, 1
  %v2272 = vmul.f32 %v2256, %v2268
  %v2273 = vmul.f32 %v2256, %v2269
  %v2274 = vmul.f32 %v2256, %v2270
  %v2275 = vmul.f32 %v2256, %v2271
  %v2276 = vadd.f32 %v2224, %v2272
  %v2277 = vadd.f32 %v2225, %v2273
  %v2278 = vadd.f32 %v2226, %v2274
  %v2279 = vadd.f32 %v2227, %v2275
  %2280 = vrot.lane.b32.xlu0 %v2170, 15
  %v2281 = vpop.permute.xlu0 %2280
  %2282 = vrot.lane.b32.xlu0 %v2171, 15
  %v2283 = vpop.permute.xlu0 %2282
  %2284 = vrot.lane.b32.xlu0 %v2172, 15
  %v2285 = vpop.permute.xlu0 %2284
  %2286 = vrot.lane.b32.xlu0 %v2173, 15
  %v2287 = vpop.permute.xlu0 %2286
  %v2288 = vsel %vm556, %v2285, %v2287
  %v2289 = vsel %vm556, %v2283, %v2285
  %v2290 = vsel %vm556, %v2281, %v2283
  %v2291 = vsel %vm556, %v2287, %v2281
  %v2296 = vrot.slane %v2290, 4
  %v2297 = vrot.slane %v2288, 4
  %v2298 = vsel %vm99, %v2291, %v2296
  %v2299 = vsel %vm99, %v2289, %v2297
  %v2300 = vrot.slane %v2298, 7
  %v2301 = vrot.slane %v2299, 7
  %v2304 = vsel %vm46, %v2300, 0.0
  %v2305 = vsel %vm47, %v2301, 0.0
  %2306 = vset.pattern.permute.xlu0 2
  %2307 = vperm.xlu0 %2306, %v2174
  %v2308 = vpop.permute.xlu0 %2307
  %v2312 = vperm.slane %v2304, 1
  %v2313 = vperm.slane %v2304, 5
  %v2314 = vperm.slane %v2305, 1
  %v2315 = vperm.slane %v2305, 5
  %v2320 = vperm.slane %v2312, 1
  %v2321 = vperm.slane %v2313, 1
  %v2322 = vperm.slane %v2314, 1
  %v2323 = vperm.slane %v2315, 1
  %v2324 = vmul.f32 %v2308, %v2320
  %v2325 = vmul.f32 %v2308, %v2321
  %v2326 = vmul.f32 %v2308, %v2322
  %v2327 = vmul.f32 %v2308, %v2323
  %v2328 = vadd.f32 %v2276, %v2324
  %v2329 = vadd.f32 %v2277, %v2325
  %v2330 = vadd.f32 %v2278, %v2326
  %v2331 = vadd.f32 %v2279, %v2327
  %2332 = vrot.lane.b32.xlu0 %v2170, 1
  %v2333 = vpop.permute.xlu0 %2332
  %2334 = vrot.lane.b32.xlu0 %v2171, 1
  %v2335 = vpop.permute.xlu0 %2334
  %2336 = vrot.lane.b32.xlu0 %v2172, 1
  %v2337 = vpop.permute.xlu0 %2336
  %2338 = vrot.lane.b32.xlu0 %v2173, 1
  %v2339 = vpop.permute.xlu0 %2338
  %v2340 = vsel %vm75, %v2337, %v2339
  %v2341 = vsel %vm75, %v2335, %v2337
  %v2342 = vsel %vm75, %v2333, %v2335
  %v2343 = vsel %vm75, %v2339, %v2333
  %v2348 = vrot.slane %v2342, 4
  %v2349 = vrot.slane %v2340, 4
  %v2350 = vsel %vm99, %v2343, %v2348
  %v2351 = vsel %vm99, %v2341, %v2349
  %v2354 = vsel %vm28, %v2350, 0.0
  %v2355 = vsel %vm29, %v2351, 0.0
  %2356 = vset.pattern.permute.xlu0 3
  %2357 = vperm.xlu0 %2356, %v2174
  %v2358 = vpop.permute.xlu0 %2357
  %v2362 = vperm.slane %v2354, 0
  %v2363 = vperm.slane %v2354, 4
  %v2364 = vperm.slane %v2355, 0
  %v2365 = vperm.slane %v2355, 4
  %v2370 = vperm.slane %v2362, 0
  %v2371 = vperm.slane %v2363, 0
  %v2372 = vperm.slane %v2364, 0
  %v2373 = vperm.slane %v2365, 0
  %v2374 = vmul.f32 %v2358, %v2370
  %v2375 = vmul.f32 %v2358, %v2371
  %v2376 = vmul.f32 %v2358, %v2372
  %v2377 = vmul.f32 %v2358, %v2373
  %v2378 = vadd.f32 %v2328, %v2374
  %v2379 = vadd.f32 %v2329, %v2375
  %v2380 = vadd.f32 %v2330, %v2376
  %v2381 = vadd.f32 %v2331, %v2377
  %2382 = vset.pattern.permute.xlu0 4
  %2383 = vperm.xlu0 %2382, %v2174
  %v2384 = vpop.permute.xlu0 %2383
  %v2386 = vperm.slane %v2170, 0
  %v2387 = vperm.slane %v2171, 0
  %v2388 = vperm.slane %v2172, 0
  %v2389 = vperm.slane %v2173, 0
  %v2390 = vmul.f32 %v2384, %v2386
  %v2391 = vmul.f32 %v2384, %v2387
  %v2392 = vmul.f32 %v2384, %v2388
  %v2393 = vmul.f32 %v2384, %v2389
  %v2394 = vadd.f32 %v2378, %v2390
  %v2395 = vadd.f32 %v2379, %v2391
  %v2396 = vadd.f32 %v2380, %v2392
  %v2397 = vadd.f32 %v2381, %v2393
  %2398 = vrot.lane.b32.xlu0 %v2170, 127
  %v2399 = vpop.permute.xlu0 %2398
  %2400 = vrot.lane.b32.xlu0 %v2171, 127
  %v2401 = vpop.permute.xlu0 %2400
  %2402 = vrot.lane.b32.xlu0 %v2172, 127
  %v2403 = vpop.permute.xlu0 %2402
  %2404 = vrot.lane.b32.xlu0 %v2173, 127
  %v2405 = vpop.permute.xlu0 %2404
  %v2406 = vsel %vm88, %v2403, %v2405
  %v2407 = vsel %vm88, %v2401, %v2403
  %v2408 = vsel %vm88, %v2399, %v2401
  %v2409 = vsel %vm88, %v2405, %v2399
  %v2414 = vrot.slane %v2407, 4
  %v2415 = vrot.slane %v2409, 4
  %v2416 = vsel %vm99, %v2408, %v2414
  %v2417 = vsel %vm99, %v2406, %v2415
  %v2420 = vsel %vm38, %v2416, 0.0
  %v2421 = vsel %vm39, %v2417, 0.0
  %2422 = vset.pattern.permute.xlu0 5
  %2423 = vperm.xlu0 %2422, %v2174
  %v2424 = vpop.permute.xlu0 %2423
  %v2428 = vperm.slane %v2420, 0
  %v2429 = vperm.slane %v2420, 4
  %v2430 = vperm.slane %v2421, 0
  %v2431 = vperm.slane %v2421, 4
  %v2436 = vperm.slane %v2428, 0
  %v2437 = vperm.slane %v2429, 0
  %v2438 = vperm.slane %v2430, 0
  %v2439 = vperm.slane %v2431, 0
  %v2440 = vmul.f32 %v2424, %v2436
  %v2441 = vmul.f32 %v2424, %v2437
  %v2442 = vmul.f32 %v2424, %v2438
  %v2443 = vmul.f32 %v2424, %v2439
  %v2444 = vadd.f32 %v2394, %v2440
  %v2445 = vadd.f32 %v2395, %v2441
  %v2446 = vadd.f32 %v2396, %v2442
  %v2447 = vadd.f32 %v2397, %v2443
  %2448 = vrot.lane.b32.xlu0 %v2170, 113
  %v2449 = vpop.permute.xlu0 %2448
  %2450 = vrot.lane.b32.xlu0 %v2171, 113
  %v2451 = vpop.permute.xlu0 %2450
  %2452 = vrot.lane.b32.xlu0 %v2172, 113
  %v2453 = vpop.permute.xlu0 %2452
  %2454 = vrot.lane.b32.xlu0 %v2173, 113
  %v2455 = vpop.permute.xlu0 %2454
  %v2456 = vsel %vm721, %v2453, %v2455
  %v2457 = vsel %vm721, %v2451, %v2453
  %v2458 = vsel %vm721, %v2449, %v2451
  %v2459 = vsel %vm721, %v2455, %v2449
  %v2464 = vrot.slane %v2457, 4
  %v2465 = vrot.slane %v2459, 4
  %v2466 = vsel %vm99, %v2458, %v2464
  %v2467 = vsel %vm99, %v2456, %v2465
  %v2468 = vrot.slane %v2466, 7
  %v2469 = vrot.slane %v2467, 7
  %v2472 = vsel %vm48, %v2468, 0.0
  %v2473 = vsel %vm49, %v2469, 0.0
  %2474 = vset.pattern.permute.xlu0 6
  %2475 = vperm.xlu0 %2474, %v2174
  %v2476 = vpop.permute.xlu0 %2475
  %v2480 = vperm.slane %v2472, 1
  %v2481 = vperm.slane %v2472, 5
  %v2482 = vperm.slane %v2473, 1
  %v2483 = vperm.slane %v2473, 5
  %v2488 = vperm.slane %v2480, 1
  %v2489 = vperm.slane %v2481, 1
  %v2490 = vperm.slane %v2482, 1
  %v2491 = vperm.slane %v2483, 1
  %v2492 = vmul.f32 %v2476, %v2488
  %v2493 = vmul.f32 %v2476, %v2489
  %v2494 = vmul.f32 %v2476, %v2490
  %v2495 = vmul.f32 %v2476, %v2491
  %v2496 = vadd.f32 %v2444, %v2492
  %v2497 = vadd.f32 %v2445, %v2493
  %v2498 = vadd.f32 %v2446, %v2494
  %v2499 = vadd.f32 %v2447, %v2495
  %2500 = vrot.lane.b32.xlu0 %v2170, 112
  %v2501 = vpop.permute.xlu0 %2500
  %2502 = vrot.lane.b32.xlu0 %v2171, 112
  %v2503 = vpop.permute.xlu0 %2502
  %2504 = vrot.lane.b32.xlu0 %v2172, 112
  %v2505 = vpop.permute.xlu0 %2504
  %2506 = vrot.lane.b32.xlu0 %v2173, 112
  %v2507 = vpop.permute.xlu0 %2506
  %v2508 = vsel %vm186, %v2505, %v2507
  %v2509 = vsel %vm186, %v2503, %v2505
  %v2510 = vsel %vm186, %v2501, %v2503
  %v2511 = vsel %vm186, %v2507, %v2501
  %v2516 = vrot.slane %v2509, 4
  %v2517 = vrot.slane %v2511, 4
  %v2518 = vsel %vm99, %v2510, %v2516
  %v2519 = vsel %vm99, %v2508, %v2517
  %v2520 = vrot.slane %v2518, 7
  %v2521 = vrot.slane %v2519, 7
  %v2524 = vsel %vm38, %v2520, 0.0
  %v2525 = vsel %vm39, %v2521, 0.0
  %2526 = vset.pattern.permute.xlu0 7
  %2527 = vperm.xlu0 %2526, %v2174
  %v2528 = vpop.permute.xlu0 %2527
  %v2532 = vperm.slane %v2524, 1
  %v2533 = vperm.slane %v2524, 5
  %v2534 = vperm.slane %v2525, 1
  %v2535 = vperm.slane %v2525, 5
  %v2540 = vperm.slane %v2532, 1
  %v2541 = vperm.slane %v2533, 1
  %v2542 = vperm.slane %v2534, 1
  %v2543 = vperm.slane %v2535, 1
  %v2544 = vmul.f32 %v2528, %v2540
  %v2545 = vmul.f32 %v2528, %v2541
  %v2546 = vmul.f32 %v2528, %v2542
  %v2547 = vmul.f32 %v2528, %v2543
  %v2548 = vadd.f32 %v2496, %v2544
  %v2549 = vadd.f32 %v2497, %v2545
  %v2550 = vadd.f32 %v2498, %v2546
  %v2551 = vadd.f32 %v2499, %v2547
  %2552 = vrot.lane.b32.xlu0 %v2170, 111
  %v2553 = vpop.permute.xlu0 %2552
  %2554 = vrot.lane.b32.xlu0 %v2171, 111
  %v2555 = vpop.permute.xlu0 %2554
  %2556 = vrot.lane.b32.xlu0 %v2172, 111
  %v2557 = vpop.permute.xlu0 %2556
  %2558 = vrot.lane.b32.xlu0 %v2173, 111
  %v2559 = vpop.permute.xlu0 %2558
  %v2560 = vsel %vm826, %v2557, %v2559
  %v2561 = vsel %vm826, %v2555, %v2557
  %v2562 = vsel %vm826, %v2553, %v2555
  %v2563 = vsel %vm826, %v2559, %v2553
  %v2568 = vrot.slane %v2561, 4
  %v2569 = vrot.slane %v2563, 4
  %v2570 = vsel %vm99, %v2562, %v2568
  %v2571 = vsel %vm99, %v2560, %v2569
  %v2572 = vrot.slane %v2570, 7
  %v2573 = vrot.slane %v2571, 7
  %v2576 = vsel %vm50, %v2572, 0.0
  %v2577 = vsel %vm51, %v2573, 0.0
  %2578 = vset.pattern.permute.xlu0 8
  %2579 = vperm.xlu0 %2578, %v2174
  %v2580 = vpop.permute.xlu0 %2579
  %v2584 = vperm.slane %v2576, 1
  %v2585 = vperm.slane %v2576, 5
  %v2586 = vperm.slane %v2577, 1
  %v2587 = vperm.slane %v2577, 5
  %v2592 = vperm.slane %v2584, 1
  %v2593 = vperm.slane %v2585, 1
  %v2594 = vperm.slane %v2586, 1
  %v2595 = vperm.slane %v2587, 1
  %v2596 = vmul.f32 %v2580, %v2592
  %v2597 = vmul.f32 %v2580, %v2593
  %v2598 = vmul.f32 %v2580, %v2594
  %v2599 = vmul.f32 %v2580, %v2595
  %v2600 = vadd.f32 %v2548, %v2596
  %v2601 = vadd.f32 %v2549, %v2597
  %v2602 = vadd.f32 %v2550, %v2598
  %v2603 = vadd.f32 %v2551, %v2599
  %v2608 = vrot.slane %v2170, 1
  %v2609 = vrot.slane %v2171, 1
  %v2610 = vrot.slane %v2172, 1
  %v2611 = vrot.slane %v2173, 1
  %2616 = vrot.lane.b32.xlu0 %v2608, 17
  %v2617 = vpop.permute.xlu0 %2616
  %2618 = vrot.lane.b32.xlu0 %v2609, 17
  %v2619 = vpop.permute.xlu0 %2618
  %2620 = vrot.lane.b32.xlu0 %v2610, 17
  %v2621 = vpop.permute.xlu0 %2620
  %2622 = vrot.lane.b32.xlu0 %v2611, 17
  %v2623 = vpop.permute.xlu0 %2622
  %v2624 = vsel %vm450, %v2621, %v2623
  %v2625 = vsel %vm450, %v2619, %v2621
  %v2626 = vsel %vm450, %v2617, %v2619
  %v2627 = vsel %vm450, %v2623, %v2617
  %v2632 = vrot.slane %v2626, 4
  %v2633 = vrot.slane %v2624, 4
  %v2634 = vsel %vm99, %v2627, %v2632
  %v2635 = vsel %vm99, %v2625, %v2633
  %v2636 = vrot.slane %v2634, 7
  %v2637 = vrot.slane %v2635, 7
  %v2640 = vsel %vm36, %v2636, 0.0
  %v2641 = vsel %vm37, %v2637, 0.0
  %2642 = vset.pattern.permute.xlu0 9
  %2643 = vperm.xlu0 %2642, %v2174
  %v2644 = vpop.permute.xlu0 %2643
  %v2648 = vperm.slane %v2640, 1
  %v2649 = vperm.slane %v2640, 5
  %v2650 = vperm.slane %v2641, 1
  %v2651 = vperm.slane %v2641, 5
  %v2656 = vperm.slane %v2648, 1
  %v2657 = vperm.slane %v2649, 1
  %v2658 = vperm.slane %v2650, 1
  %v2659 = vperm.slane %v2651, 1
  %v2660 = vmul.f32 %v2644, %v2656
  %v2661 = vmul.f32 %v2644, %v2657
  %v2662 = vmul.f32 %v2644, %v2658
  %v2663 = vmul.f32 %v2644, %v2659
  %v2664 = vadd.f32 %v2600, %v2660
  %v2665 = vadd.f32 %v2601, %v2661
  %v2666 = vadd.f32 %v2602, %v2662
  %v2667 = vadd.f32 %v2603, %v2663
  %2668 = vrot.lane.b32.xlu0 %v2608, 16
  %v2669 = vpop.permute.xlu0 %2668
  %2670 = vrot.lane.b32.xlu0 %v2609, 16
  %v2671 = vpop.permute.xlu0 %2670
  %2672 = vrot.lane.b32.xlu0 %v2610, 16
  %v2673 = vpop.permute.xlu0 %2672
  %2674 = vrot.lane.b32.xlu0 %v2611, 16
  %v2675 = vpop.permute.xlu0 %2674
  %v2676 = vsel %vm173, %v2673, %v2675
  %v2677 = vsel %vm173, %v2671, %v2673
  %v2678 = vsel %vm173, %v2669, %v2671
  %v2679 = vsel %vm173, %v2675, %v2669
  %v2684 = vrot.slane %v2678, 4
  %v2685 = vrot.slane %v2676, 4
  %v2686 = vsel %vm99, %v2679, %v2684
  %v2687 = vsel %vm99, %v2677, %v2685
  %v2688 = vrot.slane %v2686, 7
  %v2689 = vrot.slane %v2687, 7
  %v2692 = vsel %vm28, %v2688, 0.0
  %v2693 = vsel %vm29, %v2689, 0.0
  %2694 = vset.pattern.permute.xlu0 10
  %2695 = vperm.xlu0 %2694, %v2174
  %v2696 = vpop.permute.xlu0 %2695
  %v2700 = vperm.slane %v2692, 1
  %v2701 = vperm.slane %v2692, 5
  %v2702 = vperm.slane %v2693, 1
  %v2703 = vperm.slane %v2693, 5
  %v2708 = vperm.slane %v2700, 1
  %v2709 = vperm.slane %v2701, 1
  %v2710 = vperm.slane %v2702, 1
  %v2711 = vperm.slane %v2703, 1
  %v2712 = vmul.f32 %v2696, %v2708
  %v2713 = vmul.f32 %v2696, %v2709
  %v2714 = vmul.f32 %v2696, %v2710
  %v2715 = vmul.f32 %v2696, %v2711
  %v2716 = vadd.f32 %v2664, %v2712
  %v2717 = vadd.f32 %v2665, %v2713
  %v2718 = vadd.f32 %v2666, %v2714
  %v2719 = vadd.f32 %v2667, %v2715
  %2720 = vrot.lane.b32.xlu0 %v2608, 15
  %v2721 = vpop.permute.xlu0 %2720
  %2722 = vrot.lane.b32.xlu0 %v2609, 15
  %v2723 = vpop.permute.xlu0 %2722
  %2724 = vrot.lane.b32.xlu0 %v2610, 15
  %v2725 = vpop.permute.xlu0 %2724
  %2726 = vrot.lane.b32.xlu0 %v2611, 15
  %v2727 = vpop.permute.xlu0 %2726
  %v2728 = vsel %vm556, %v2725, %v2727
  %v2729 = vsel %vm556, %v2723, %v2725
  %v2730 = vsel %vm556, %v2721, %v2723
  %v2731 = vsel %vm556, %v2727, %v2721
  %v2736 = vrot.slane %v2730, 4
  %v2737 = vrot.slane %v2728, 4
  %v2738 = vsel %vm99, %v2731, %v2736
  %v2739 = vsel %vm99, %v2729, %v2737
  %v2740 = vrot.slane %v2738, 7
  %v2741 = vrot.slane %v2739, 7
  %v2744 = vsel %vm46, %v2740, 0.0
  %v2745 = vsel %vm47, %v2741, 0.0
  %2746 = vset.pattern.permute.xlu0 11
  %2747 = vperm.xlu0 %2746, %v2174
  %v2748 = vpop.permute.xlu0 %2747
  %v2752 = vperm.slane %v2744, 1
  %v2753 = vperm.slane %v2744, 5
  %v2754 = vperm.slane %v2745, 1
  %v2755 = vperm.slane %v2745, 5
  %v2760 = vperm.slane %v2752, 1
  %v2761 = vperm.slane %v2753, 1
  %v2762 = vperm.slane %v2754, 1
  %v2763 = vperm.slane %v2755, 1
  %v2764 = vmul.f32 %v2748, %v2760
  %v2765 = vmul.f32 %v2748, %v2761
  %v2766 = vmul.f32 %v2748, %v2762
  %v2767 = vmul.f32 %v2748, %v2763
  %v2768 = vadd.f32 %v2716, %v2764
  %v2769 = vadd.f32 %v2717, %v2765
  %v2770 = vadd.f32 %v2718, %v2766
  %v2771 = vadd.f32 %v2719, %v2767
  %2772 = vrot.lane.b32.xlu0 %v2608, 1
  %v2773 = vpop.permute.xlu0 %2772
  %2774 = vrot.lane.b32.xlu0 %v2609, 1
  %v2775 = vpop.permute.xlu0 %2774
  %2776 = vrot.lane.b32.xlu0 %v2610, 1
  %v2777 = vpop.permute.xlu0 %2776
  %2778 = vrot.lane.b32.xlu0 %v2611, 1
  %v2779 = vpop.permute.xlu0 %2778
  %v2780 = vsel %vm75, %v2777, %v2779
  %v2781 = vsel %vm75, %v2775, %v2777
  %v2782 = vsel %vm75, %v2773, %v2775
  %v2783 = vsel %vm75, %v2779, %v2773
  %v2788 = vrot.slane %v2782, 4
  %v2789 = vrot.slane %v2780, 4
  %v2790 = vsel %vm99, %v2783, %v2788
  %v2791 = vsel %vm99, %v2781, %v2789
  %v2794 = vsel %vm28, %v2790, 0.0
  %v2795 = vsel %vm29, %v2791, 0.0
  %2796 = vset.pattern.permute.xlu0 12
  %2797 = vperm.xlu0 %2796, %v2174
  %v2798 = vpop.permute.xlu0 %2797
  %v2802 = vperm.slane %v2794, 0
  %v2803 = vperm.slane %v2794, 4
  %v2804 = vperm.slane %v2795, 0
  %v2805 = vperm.slane %v2795, 4
  %v2810 = vperm.slane %v2802, 0
  %v2811 = vperm.slane %v2803, 0
  %v2812 = vperm.slane %v2804, 0
  %v2813 = vperm.slane %v2805, 0
  %v2814 = vmul.f32 %v2798, %v2810
  %v2815 = vmul.f32 %v2798, %v2811
  %v2816 = vmul.f32 %v2798, %v2812
  %v2817 = vmul.f32 %v2798, %v2813
  %v2818 = vadd.f32 %v2768, %v2814
  %v2819 = vadd.f32 %v2769, %v2815
  %v2820 = vadd.f32 %v2770, %v2816
  %v2821 = vadd.f32 %v2771, %v2817
  %2822 = vset.pattern.permute.xlu0 13
  %2823 = vperm.xlu0 %2822, %v2174
  %v2824 = vpop.permute.xlu0 %2823
  %v2826 = vperm.slane %v2170, 1
  %v2827 = vperm.slane %v2171, 1
  %v2828 = vperm.slane %v2172, 1
  %v2829 = vperm.slane %v2173, 1
  %v2830 = vmul.f32 %v2824, %v2826
  %v2831 = vmul.f32 %v2824, %v2827
  %v2832 = vmul.f32 %v2824, %v2828
  %v2833 = vmul.f32 %v2824, %v2829
  %v2834 = vadd.f32 %v2818, %v2830
  %v2835 = vadd.f32 %v2819, %v2831
  %v2836 = vadd.f32 %v2820, %v2832
  %v2837 = vadd.f32 %v2821, %v2833
  %2838 = vrot.lane.b32.xlu0 %v2608, 127
  %v2839 = vpop.permute.xlu0 %2838
  %2840 = vrot.lane.b32.xlu0 %v2609, 127
  %v2841 = vpop.permute.xlu0 %2840
  %2842 = vrot.lane.b32.xlu0 %v2610, 127
  %v2843 = vpop.permute.xlu0 %2842
  %2844 = vrot.lane.b32.xlu0 %v2611, 127
  %v2845 = vpop.permute.xlu0 %2844
  %v2846 = vsel %vm88, %v2843, %v2845
  %v2847 = vsel %vm88, %v2841, %v2843
  %v2848 = vsel %vm88, %v2839, %v2841
  %v2849 = vsel %vm88, %v2845, %v2839
  %v2854 = vrot.slane %v2847, 4
  %v2855 = vrot.slane %v2849, 4
  %v2856 = vsel %vm99, %v2848, %v2854
  %v2857 = vsel %vm99, %v2846, %v2855
  %v2860 = vsel %vm38, %v2856, 0.0
  %v2861 = vsel %vm39, %v2857, 0.0
  %2862 = vset.pattern.permute.xlu0 14
  %2863 = vperm.xlu0 %2862, %v2174
  %v2864 = vpop.permute.xlu0 %2863
  %v2868 = vperm.slane %v2860, 0
  %v2869 = vperm.slane %v2860, 4
  %v2870 = vperm.slane %v2861, 0
  %v2871 = vperm.slane %v2861, 4
  %v2876 = vperm.slane %v2868, 0
  %v2877 = vperm.slane %v2869, 0
  %v2878 = vperm.slane %v2870, 0
  %v2879 = vperm.slane %v2871, 0
  %v2880 = vmul.f32 %v2864, %v2876
  %v2881 = vmul.f32 %v2864, %v2877
  %v2882 = vmul.f32 %v2864, %v2878
  %v2883 = vmul.f32 %v2864, %v2879
  %v2884 = vadd.f32 %v2834, %v2880
  %v2885 = vadd.f32 %v2835, %v2881
  %v2886 = vadd.f32 %v2836, %v2882
  %v2887 = vadd.f32 %v2837, %v2883
  %2888 = vrot.lane.b32.xlu0 %v2608, 113
  %v2889 = vpop.permute.xlu0 %2888
  %2890 = vrot.lane.b32.xlu0 %v2609, 113
  %v2891 = vpop.permute.xlu0 %2890
  %2892 = vrot.lane.b32.xlu0 %v2610, 113
  %v2893 = vpop.permute.xlu0 %2892
  %2894 = vrot.lane.b32.xlu0 %v2611, 113
  %v2895 = vpop.permute.xlu0 %2894
  %v2896 = vsel %vm721, %v2893, %v2895
  %v2897 = vsel %vm721, %v2891, %v2893
  %v2898 = vsel %vm721, %v2889, %v2891
  %v2899 = vsel %vm721, %v2895, %v2889
  %v2904 = vrot.slane %v2897, 4
  %v2905 = vrot.slane %v2899, 4
  %v2906 = vsel %vm99, %v2898, %v2904
  %v2907 = vsel %vm99, %v2896, %v2905
  %v2908 = vrot.slane %v2906, 7
  %v2909 = vrot.slane %v2907, 7
  %v2912 = vsel %vm48, %v2908, 0.0
  %v2913 = vsel %vm49, %v2909, 0.0
  %2914 = vset.pattern.permute.xlu0 15
  %2915 = vperm.xlu0 %2914, %v2174
  %v2916 = vpop.permute.xlu0 %2915
  %v2920 = vperm.slane %v2912, 1
  %v2921 = vperm.slane %v2912, 5
  %v2922 = vperm.slane %v2913, 1
  %v2923 = vperm.slane %v2913, 5
  %v2928 = vperm.slane %v2920, 1
  %v2929 = vperm.slane %v2921, 1
  %v2930 = vperm.slane %v2922, 1
  %v2931 = vperm.slane %v2923, 1
  %v2932 = vmul.f32 %v2916, %v2928
  %v2933 = vmul.f32 %v2916, %v2929
  %v2934 = vmul.f32 %v2916, %v2930
  %v2935 = vmul.f32 %v2916, %v2931
  %v2936 = vadd.f32 %v2884, %v2932
  %v2937 = vadd.f32 %v2885, %v2933
  %v2938 = vadd.f32 %v2886, %v2934
  %v2939 = vadd.f32 %v2887, %v2935
  %2940 = vrot.lane.b32.xlu0 %v2608, 112
  %v2941 = vpop.permute.xlu0 %2940
  %2942 = vrot.lane.b32.xlu0 %v2609, 112
  %v2943 = vpop.permute.xlu0 %2942
  %2944 = vrot.lane.b32.xlu0 %v2610, 112
  %v2945 = vpop.permute.xlu0 %2944
  %2946 = vrot.lane.b32.xlu0 %v2611, 112
  %v2947 = vpop.permute.xlu0 %2946
  %v2948 = vsel %vm186, %v2945, %v2947
  %v2949 = vsel %vm186, %v2943, %v2945
  %v2950 = vsel %vm186, %v2941, %v2943
  %v2951 = vsel %vm186, %v2947, %v2941
  %v2956 = vrot.slane %v2949, 4
  %v2957 = vrot.slane %v2951, 4
  %v2958 = vsel %vm99, %v2950, %v2956
  %v2959 = vsel %vm99, %v2948, %v2957
  %v2960 = vrot.slane %v2958, 7
  %v2961 = vrot.slane %v2959, 7
  %v2964 = vsel %vm38, %v2960, 0.0
  %v2965 = vsel %vm39, %v2961, 0.0
  %2966 = vset.pattern.permute.xlu0 16
  %2967 = vperm.xlu0 %2966, %v2174
  %v2968 = vpop.permute.xlu0 %2967
  %v2972 = vperm.slane %v2964, 1
  %v2973 = vperm.slane %v2964, 5
  %v2974 = vperm.slane %v2965, 1
  %v2975 = vperm.slane %v2965, 5
  %v2980 = vperm.slane %v2972, 1
  %v2981 = vperm.slane %v2973, 1
  %v2982 = vperm.slane %v2974, 1
  %v2983 = vperm.slane %v2975, 1
  %v2984 = vmul.f32 %v2968, %v2980
  %v2985 = vmul.f32 %v2968, %v2981
  %v2986 = vmul.f32 %v2968, %v2982
  %v2987 = vmul.f32 %v2968, %v2983
  %v2988 = vadd.f32 %v2936, %v2984
  %v2989 = vadd.f32 %v2937, %v2985
  %v2990 = vadd.f32 %v2938, %v2986
  %v2991 = vadd.f32 %v2939, %v2987
  %2992 = vrot.lane.b32.xlu0 %v2608, 111
  %v2993 = vpop.permute.xlu0 %2992
  %2994 = vrot.lane.b32.xlu0 %v2609, 111
  %v2995 = vpop.permute.xlu0 %2994
  %2996 = vrot.lane.b32.xlu0 %v2610, 111
  %v2997 = vpop.permute.xlu0 %2996
  %2998 = vrot.lane.b32.xlu0 %v2611, 111
  %v2999 = vpop.permute.xlu0 %2998
  %v3000 = vsel %vm826, %v2997, %v2999
  %v3001 = vsel %vm826, %v2995, %v2997
  %v3002 = vsel %vm826, %v2993, %v2995
  %v3003 = vsel %vm826, %v2999, %v2993
  %v3008 = vrot.slane %v3001, 4
  %v3009 = vrot.slane %v3003, 4
  %v3010 = vsel %vm99, %v3002, %v3008
  %v3011 = vsel %vm99, %v3000, %v3009
  %v3012 = vrot.slane %v3010, 7
  %v3013 = vrot.slane %v3011, 7
  %v3016 = vsel %vm50, %v3012, 0.0
  %v3017 = vsel %vm51, %v3013, 0.0
  %3018 = vset.pattern.permute.xlu0 17
  %3019 = vperm.xlu0 %3018, %v2174
  %v3020 = vpop.permute.xlu0 %3019
  %v3024 = vperm.slane %v3016, 1
  %v3025 = vperm.slane %v3016, 5
  %v3026 = vperm.slane %v3017, 1
  %v3027 = vperm.slane %v3017, 5
  %v3032 = vperm.slane %v3024, 1
  %v3033 = vperm.slane %v3025, 1
  %v3034 = vperm.slane %v3026, 1
  %v3035 = vperm.slane %v3027, 1
  %v3036 = vmul.f32 %v3020, %v3032
  %v3037 = vmul.f32 %v3020, %v3033
  %v3038 = vmul.f32 %v3020, %v3034
  %v3039 = vmul.f32 %v3020, %v3035
  %v3040 = vadd.f32 %v2988, %v3036
  %v3041 = vadd.f32 %v2989, %v3037
  %v3042 = vadd.f32 %v2990, %v3038
  %v3043 = vadd.f32 %v2991, %v3039
  %v3044 = vmax.f32 %v3040, 0.0
  %v3045 = vmax.f32 %v3041, 0.0
  %v3046 = vmax.f32 %v3042, 0.0
  %v3047 = vmax.f32 %v3043, 0.0
  %v3052 = vrot.slane %v3045, 4
  %v3053 = vrot.slane %v3047, 4
  %v3054 = vsel %vm99, %v3044, %v3052
  %v3055 = vsel %vm99, %v3046, %v3053
  %3058 = vst [vmem:[%s5] sm:$0xff] %v3054
  %3059 = vst [vmem:[%s5 + $0x8] sm:$0xff] %v3055
  // Predicated region
  $region22: #{_up_forward_impl.1} parent=0 // pred_check
    _
  $region23: #{_up_forward_impl.1} parent=0 // pred_check_branch
    %3061 = sbr.rel (0) target = $region25
  $region24: #{_up_forward_impl.1} parent=0 // pred_region
    _
  $region25: #{_up_forward_impl.1} parent=0 // pred_fallthru
    _
  // Predicated region
  $region26: #{_up_forward_impl.1} parent=0 // pred_check
    _
  $region27: #{_up_forward_impl.1} parent=0 // pred_check_branch
    %3063 = sbr.rel (0) target = $region29
  $region28: #{_up_forward_impl.1} parent=0 // pred_region
    _
  $region29: #{_up_forward_impl.1} parent=0 // pred_fallthru
    _

</llo_original>
